<compile_context>
chip_gen: v6e
topology: v6e:2x2x1
jax: 0.10.0
libtpu: 0.0.40
codegen_flags: <defaults>
</compile_context>

<pallas_src>
import functools

import jax
import jax.numpy as jnp
from jax import lax
from jax.experimental import pallas as pl
from jax.experimental.pallas import tpu as pltpu

F32 = jnp.float32
BF16 = jnp.bfloat16


# ---------------------------------------------------------------------------
# Fused kernel (one grid step processes B samples)
# ---------------------------------------------------------------------------
def _simple_cnn_kernel(B,
                       x1_ref, w1_ref, b1_ref,
                       w2_ref, b2_ref, w3_ref, b3_ref,
                       wd1_ref, bd1_ref, wd2_ref, bd2_ref,
                       ff_ref, fb_ref,
                       o_ref,
                       in2_ref, in3_ref, p2s_ref):
    BQ = B * 64            # rows per pooling quadrant of conv1's output
    M2 = B * 80 - 8        # conv2 accumulator rows (80-row flat slab / sample)
    M3 = B * 24            # conv3 / decoder accumulator rows (24-row slab / sample)

    # Zero the small flat activation buffers (only the H-pad strips actually need it,
    # the interiors are overwritten below; the buffers are tiny bf16 so this is cheap
    # and stays correct when the "parallel" grid axis is sharded across cores).
    in2_ref[...] = jnp.zeros(in2_ref.shape, BF16)
    in3_ref[...] = jnp.zeros(in3_ref.shape, BF16)

    # ---------------- conv1: K=27 im2col -> ONE matmul + bias + ReLU ----------------
    a1 = jnp.dot(x1_ref[0], w1_ref[...], preferred_element_type=F32)
    a1 = jnp.maximum(a1 + b1_ref[...], 0.0)                     # (B*256, 32) f32
    # TODO(synk): nn.Dropout2d(0.1) is identity at inference; omitted.

    # ---------------- maxpool1: quadrant-ordered rows -> 3 VPU maxes ----------------
    p1 = jnp.maximum(jnp.maximum(a1[0 * BQ:1 * BQ], a1[1 * BQ:2 * BQ]),
                     jnp.maximum(a1[2 * BQ:3 * BQ], a1[3 * BQ:4 * BQ]))
    p1 = p1.astype(BF16)                                        # (B*64, 32)
    for b in range(B):      # interior of sample b's H-padded slab (aligned stores)
        in2_ref[pl.ds(16 + 80 * b, 64), :] = p1[b * 64:(b + 1) * 64]

    # ---------------- conv2: 9 sublane-sliced taps + 2 column masks ----------------
    xcol2 = lax.broadcasted_iota(jnp.int32, (M2, 1), 0) % 8
    parts2 = []
    for dx in range(3):
        acc = jnp.zeros((M2, 64), F32)
        for dy in range(3):
            patch = in2_ref[pl.ds(8 * dy + dx + 7, M2), :]      # (M2, 32) bf16
            acc = acc + jnp.dot(patch, w2_ref[3 * dy + dx],
                                preferred_element_type=F32)
        parts2.append(acc)
    a2 = parts2[1] + jnp.where(xcol2 != 0, parts2[0], 0.0) \
                   + jnp.where(xcol2 != 7, parts2[2], 0.0)
    a2 = jnp.maximum(a2 + b2_ref[...], 0.0)                     # (M2, 64) f32

    # ---------------- maxpool2: row-pair VPU max + tiny stride-2 gathers ------------
    p2s_ref[...] = jnp.maximum(a2[0:M2 - 8], a2[8:M2])          # (M2-8, 64) f32
    for b in range(B):
        for py in range(4):
            src = 80 * b + 16 * py
            v = jnp.maximum(p2s_ref[pl.ds(src, 4, 2), :],
                            p2s_ref[pl.ds(src + 1, 4, 2), :])   # (4, 64) f32
            in3_ref[pl.ds(12 + 24 * b + 4 * py, 4), :] = v.astype(BF16)

    # ---------------- conv3: same scheme, 64 -> 128 channels ------------------------
    xcol3 = lax.broadcasted_iota(jnp.int32, (M3, 1), 0) % 4
    parts3 = []
    for dx in range(3):
        acc = jnp.zeros((M3, 128), F32)
        for dy in range(3):
            patch = in3_ref[pl.ds(4 * dy + dx + 3, M3), :]      # (M3, 64) bf16
            acc = acc + jnp.dot(patch, w3_ref[3 * dy + dx],
                                preferred_element_type=F32)
        parts3.append(acc)
    a3 = parts3[1] + jnp.where(xcol3 != 0, parts3[0], 0.0) \
                   + jnp.where(xcol3 != 3, parts3[2], 0.0)
    a3 = jnp.maximum(a3 + b3_ref[...], 0.0).astype(BF16)        # (M3, 128)

    # ---------------- decoder: 3 fused wide matmuls ---------------------------------
    h = jnp.dot(a3, wd1_ref[...], preferred_element_type=F32) + bd1_ref[...]
    h = jnp.maximum(h, 0.0).astype(BF16)                        # (M3, 256)
    z = jnp.dot(h, wd2_ref[...], preferred_element_type=F32) + bd2_ref[...]
    z = jnp.maximum(z, 0.0).astype(BF16)                        # (M3, 512)
    o_ref[0] = jnp.dot(z, ff_ref[...], preferred_element_type=F32) + fb_ref[...]


# ---------------------------------------------------------------------------
# Wrapper: weight re-layout, conv1 im2col, pallas_call plumbing
# ---------------------------------------------------------------------------
def _prep_params(p):
    # conv1 as one K=27 im2col matmul (K padded to 32)
    w1 = jnp.transpose(p["c1w"], (2, 3, 1, 0)).reshape(27, 32)
    w1 = jnp.pad(w1, ((0, 5), (0, 0))).astype(BF16)                  # (32, 32)

    def conv_w(w):                   # (O, I, 3, 3) -> (9, I, O), tap index = 3*dy + dx
        o, i = w.shape[0], w.shape[1]
        return jnp.transpose(w, (2, 3, 1, 0)).reshape(9, i, o).astype(BF16)

    # ConvTranspose2d(128,64,2,2): stack the 4 taps along the output dim -> (128, 256)
    wd1 = jnp.transpose(p["d1w"], (0, 2, 3, 1)).reshape(128, 256).astype(BF16)
    bd1 = jnp.tile(p["d1b"].reshape(1, 64), (1, 4)).astype(F32)
    # ConvTranspose2d(64,32,2,2): per-tap1 block-diagonal (256, 512)
    wd2_tap = jnp.transpose(p["d2w"], (0, 2, 3, 1)).reshape(64, 128)
    wd2 = jnp.kron(jnp.eye(4, dtype=F32), wd2_tap).astype(BF16)      # (256, 512)
    bd2 = jnp.tile(p["d2b"].reshape(1, 32), (1, 16)).astype(F32)
    # final 1x1 conv (32 -> 1) as a block-diagonal (512, 16) matmul
    ff = jnp.kron(jnp.eye(16, dtype=F32), p["fw"].reshape(32, 1)).astype(BF16)
    fb = p["fb"].reshape(1, 1).astype(F32)

    return dict(
        w1=w1, b1=p["c1b"].reshape(1, 32).astype(F32),
        w2=conv_w(p["c2w"]), b2=p["c2b"].reshape(1, 64).astype(F32),
        w3=conv_w(p["c3w"]), b3=p["c3b"].reshape(1, 128).astype(F32),
        wd1=wd1, bd1=bd1, wd2=wd2, bd2=bd2, ff=ff, fb=fb,
    )


def _conv1_im2col(x_nhwc, grid, blk):
    """im2col for conv1 with quadrant-major row ordering (per grid block):
    row = q*(B*64) + b*64 + py*8 + px,  q = 2*(y%2) + (x%2),  (py,px) = (y//2, x//2)."""
    xp = jnp.pad(x_nhwc, ((0, 0), (1, 1), (1, 1), (0, 0)))
    taps = [xp[:, dy:dy + 16, dx:dx + 16, :] for dy in range(3) for dx in range(3)]
    pat = jnp.concatenate(taps, axis=-1)                       # (Np, 16, 16, 27)
    pat = jnp.pad(pat, ((0, 0), (0, 0), (0, 0), (0, 5)))       # K 27 -> 32
    pat = pat.reshape(grid, blk, 8, 2, 8, 2, 32)               # (G,B,py,u,px,v,K)
    pat = jnp.transpose(pat, (0, 3, 5, 1, 2, 4, 6))            # (G,u,v,B,py,px,K)
    return pat.reshape(grid, blk * 256, 32).astype(BF16)


def simple_cnn_forward(x_nchw, params, block=None):
    n = x_nchw.shape[0]
    # batch block: amortize per-step overhead but keep >=2 grid steps when n >= 2 (v7x 2 TCs)
    blk = block if block is not None else min(16, max(1, -(-n // 2)))
    grid = -(-n // blk)
    n_pad = grid * blk

    x = jnp.transpose(x_nchw, (0, 2, 3, 1)).astype(F32)
    if n_pad != n:
        x = jnp.pad(x, ((0, n_pad - n), (0, 0), (0, 0), (0, 0)))
    x1 = _conv1_im2col(x, grid, blk)

    q = _prep_params(params)
    consts = (q["w1"], q["b1"], q["w2"], q["b2"], q["w3"], q["b3"],
              q["wd1"], q["bd1"], q["wd2"], q["bd2"], q["ff"], q["fb"])

    def const_spec(a):
        zeros = (0,) * a.ndim
        return pl.BlockSpec(a.shape, lambda i, z=zeros: z)

    kernel = functools.partial(_simple_cnn_kernel, blk)

    raw = pl.pallas_call(
        kernel,
        out_shape=jax.ShapeDtypeStruct((grid, blk * 24, 16), F32),
        grid=(grid,),
        in_specs=[pl.BlockSpec((1, blk * 256, 32), lambda i: (i, 0, 0))]
                 + [const_spec(a) for a in consts],
        out_specs=pl.BlockSpec((1, blk * 24, 16), lambda i: (i, 0, 0)),
        scratch_shapes=[
            pltpu.VMEM((blk * 80 + 24, 32), BF16),   # layer-2 input, flat H-padded slabs
            pltpu.VMEM((blk * 24 + 16, 64), BF16),   # layer-3 input, flat H-padded slabs
            pltpu.VMEM((blk * 80 - 16, 64), F32),    # pool-2 row-max staging
        ],
        compiler_params=pltpu.CompilerParams(
            dimension_semantics=("parallel",)),
    )(x1, *consts)

    # raw[g, b*24 + 4 + (4y+x), 8u+4v+2e+f] is output pixel (4y+2u+e, 4x+2v+f).
    out = raw.reshape(grid, blk, 24, 16)[:, :, 4:20, :]
    out = out.reshape(grid, blk, 4, 4, 2, 2, 2, 2)
    out = jnp.transpose(out, (0, 1, 2, 4, 6, 3, 5, 7))
    return out.reshape(n_pad, 1, 16, 16)[:n]


# ---------------------------------------------------------------------------
# Pure-JAX reference (same bf16-operand / f32-accumulate rounding points)
# ---------------------------------------------------------------------------
def reference_forward(x, p):
    def conv(x, w, b, pad):
        y = lax.conv_general_dilated(
            x.astype(BF16), w.astype(BF16), (1, 1), [(pad, pad), (pad, pad)],
            dimension_numbers=("NCHW", "OIHW", "NCHW"),
            preferred_element_type=F32)
        return y + b[None, :, None, None]

    def deconv(x, w, b):
        n, _, h, wd = x.shape
        cout = w.shape[1]
        y = jnp.einsum("nchw,codk->nohdwk", x.astype(BF16), w.astype(BF16),
                       preferred_element_type=F32)
        return y.reshape(n, cout, 2 * h, 2 * wd) + b[None, :, None, None]

    def pool(x):
        return lax.reduce_window(x, -jnp.inf, lax.max,
                                 (1, 1, 2, 2), (1, 1, 2, 2), "VALID")

    x = jnp.maximum(conv(x, p["c1w"], p["c1b"], 1), 0.0)
    x = pool(x)
    x = jnp.maximum(conv(x, p["c2w"], p["c2b"], 1), 0.0)
    x = pool(x)
    x = jnp.maximum(conv(x, p["c3w"], p["c3b"], 1), 0.0)
    x = jnp.maximum(deconv(x, p["d1w"], p["d1b"]), 0.0)
    x = jnp.maximum(deconv(x, p["d2w"], p["d2b"]), 0.0)
    x = conv(x, p["fw"], p["fb"], 0)
    return x


if __name__ == "__main__":
    key = jax.random.PRNGKey(0)
    ks = jax.random.split(key, 13)

    def nrm(k, shape, scale=0.1):
        return scale * jax.random.normal(k, shape, jnp.float32)

    # Deterministic synthetic parameters in PyTorch weight layouts.
    params = {
        "c1w": nrm(ks[0], (32, 3, 3, 3)),    "c1b": nrm(ks[1], (32,)),
        "c2w": nrm(ks[2], (64, 32, 3, 3)),   "c2b": nrm(ks[3], (64,)),
        "c3w": nrm(ks[4], (128, 64, 3, 3)),  "c3b": nrm(ks[5], (128,)),
        "d1w": nrm(ks[6], (128, 64, 2, 2)),  "d1b": nrm(ks[7], (64,)),
        "d2w": nrm(ks[8], (64, 32, 2, 2)),   "d2b": nrm(ks[9], (32,)),
        "fw":  nrm(ks[10], (1, 32, 1, 1)),   "fb":  nrm(ks[11], (1,)),
    }

    x = jax.random.normal(ks[12], (2, 3, 16, 16), jnp.float32)   # NCHW

    out = jax.jit(simple_cnn_forward)(x, params)
    out = jax.block_until_ready(out)

    ref = reference_forward(x, params)
    assert out.shape == (2, 1, 16, 16), out.shape
    err = float(jnp.max(jnp.abs(out - ref)))
    assert jnp.allclose(out, ref, atol=1e-3, rtol=1e-3), err

    print("KERNEL_OK")
</pallas_src>

<mosaic_0001>
module attributes {stable_mosaic.version = 11 : i64} {
  func.func @_simple_cnn_kernel(%arg0: i32, %arg1: memref<1x256x32xbf16, #tpu.memory_space<vmem>>, %arg2: memref<32x32xbf16, #tpu.memory_space<vmem>>, %arg3: memref<1x32xf32, #tpu.memory_space<vmem>>, %arg4: memref<9x32x64xbf16, #tpu.memory_space<vmem>>, %arg5: memref<1x64xf32, #tpu.memory_space<vmem>>, %arg6: memref<9x64x128xbf16, #tpu.memory_space<vmem>>, %arg7: memref<1x128xf32, #tpu.memory_space<vmem>>, %arg8: memref<128x256xbf16, #tpu.memory_space<vmem>>, %arg9: memref<1x256xf32, #tpu.memory_space<vmem>>, %arg10: memref<256x512xbf16, #tpu.memory_space<vmem>>, %arg11: memref<1x512xf32, #tpu.memory_space<vmem>>, %arg12: memref<512x16xbf16, #tpu.memory_space<vmem>>, %arg13: memref<1x1xf32, #tpu.memory_space<vmem>>, %arg14: memref<1x24x16xf32, #tpu.memory_space<vmem>>, %arg15: memref<104x32xbf16, #tpu.memory_space<vmem>>, %arg16: memref<40x64xbf16, #tpu.memory_space<vmem>>, %arg17: memref<64x64xf32, #tpu.memory_space<vmem>>) attributes {dimension_semantics = [#tpu.dimension_semantics<parallel>], iteration_bounds = array<i64: 2>, scalar_prefetch = 0 : i64, scratch_operands = 3 : i64, tpu.core_type = #tpu.core_type<tc>, window_params = [{transform_indices = @transform_0, window_bounds = array<i64: 1, 256, 32>}, {pipeline_mode = #tpu.pipeline_mode<synchronous>, transform_indices = @transform_1, window_bounds = array<i64: 32, 32>}, {pipeline_mode = #tpu.pipeline_mode<synchronous>, transform_indices = @transform_2, window_bounds = array<i64: 1, 32>}, {pipeline_mode = #tpu.pipeline_mode<synchronous>, transform_indices = @transform_3, window_bounds = array<i64: 9, 32, 64>}, {pipeline_mode = #tpu.pipeline_mode<synchronous>, transform_indices = @transform_4, window_bounds = array<i64: 1, 64>}, {pipeline_mode = #tpu.pipeline_mode<synchronous>, transform_indices = @transform_5, window_bounds = array<i64: 9, 64, 128>}, {pipeline_mode = #tpu.pipeline_mode<synchronous>, transform_indices = @transform_6, window_bounds = array<i64: 1, 128>}, {pipeline_mode = #tpu.pipeline_mode<synchronous>, transform_indices = @transform_7, window_bounds = array<i64: 128, 256>}, {pipeline_mode = #tpu.pipeline_mode<synchronous>, transform_indices = @transform_8, window_bounds = array<i64: 1, 256>}, {pipeline_mode = #tpu.pipeline_mode<synchronous>, transform_indices = @transform_9, window_bounds = array<i64: 256, 512>}, {pipeline_mode = #tpu.pipeline_mode<synchronous>, transform_indices = @transform_10, window_bounds = array<i64: 1, 512>}, {pipeline_mode = #tpu.pipeline_mode<synchronous>, transform_indices = @transform_11, window_bounds = array<i64: 512, 16>}, {pipeline_mode = #tpu.pipeline_mode<synchronous>, transform_indices = @transform_12, window_bounds = array<i64: 1, 1>}, {transform_indices = @transform_13, window_bounds = array<i64: 1, 24, 16>}]} {
    %cst = arith.constant 0.000000e+00 : bf16
    %0 = vector.broadcast %cst : bf16 to vector<104x32xbf16>
    %c0 = arith.constant 0 : index
    %c0_0 = arith.constant 0 : index
    %1 = vector.load %arg15[%c0, %c0_0] : memref<104x32xbf16, #tpu.memory_space<vmem>>, vector<104x32xbf16>
    tpu.vector_store %arg15[%c0, %c0_0], %0 {strides = array<i32>} : memref<104x32xbf16, #tpu.memory_space<vmem>>, vector<104x32xbf16>,
    %cst_1 = arith.constant 0.000000e+00 : bf16
    %2 = vector.broadcast %cst_1 : bf16 to vector<40x64xbf16>
    %c0_2 = arith.constant 0 : index
    %c0_3 = arith.constant 0 : index
    %3 = vector.load %arg16[%c0_2, %c0_3] : memref<40x64xbf16, #tpu.memory_space<vmem>>, vector<40x64xbf16>
    tpu.vector_store %arg16[%c0_2, %c0_3], %2 {strides = array<i32>} : memref<40x64xbf16, #tpu.memory_space<vmem>>, vector<40x64xbf16>,
    %c0_4 = arith.constant 0 : index
    %c0_5 = arith.constant 0 : index
    %c0_6 = arith.constant 0 : index
    %4 = vector.load %arg1[%c0_4, %c0_5, %c0_6] : memref<1x256x32xbf16, #tpu.memory_space<vmem>>, vector<1x256x32xbf16>
    %5 = vector.shape_cast %4 : vector<1x256x32xbf16> to vector<256x32xbf16>
    %c0_7 = arith.constant 0 : index
    %c0_8 = arith.constant 0 : index
    %6 = vector.load %arg2[%c0_7, %c0_8] : memref<32x32xbf16, #tpu.memory_space<vmem>>, vector<32x32xbf16>
    %cst_9 = arith.constant dense<0.000000e+00> : vector<256x32xf32>
    %7 = tpu.matmul %5, %6, %cst_9 {dimension_numbers = #tpu.dot_dimension_numbers<[1], [0], [0], [1], [0, 0, 1, 1], [], []>} : vector<256x32xbf16>, vector<32x32xbf16>, vector<256x32xf32> -> vector<256x32xf32>
    %c0_10 = arith.constant 0 : index
    %c0_11 = arith.constant 0 : index
    %8 = vector.load %arg3[%c0_10, %c0_11] : memref<1x32xf32, #tpu.memory_space<vmem>>, vector<1x32xf32>
    %9 = vector.broadcast %8 : vector<1x32xf32> to vector<256x32xf32>
    %10 = arith.addf %7, %9 : vector<256x32xf32>
    %cst_12 = arith.constant 0.000000e+00 : f32
    %11 = vector.broadcast %cst_12 : f32 to vector<256x32xf32>
    %12 = arith.maximumf %10, %11 : vector<256x32xf32>
    %13 = vector.extract_strided_slice %12 {offsets = [0, 0], sizes = [64, 32], strides = [1, 1]} : vector<256x32xf32> to vector<64x32xf32>
    %14 = vector.extract_strided_slice %12 {offsets = [64, 0], sizes = [64, 32], strides = [1, 1]} : vector<256x32xf32> to vector<64x32xf32>
    %15 = arith.maximumf %13, %14 : vector<64x32xf32>
    %16 = vector.extract_strided_slice %12 {offsets = [128, 0], sizes = [64, 32], strides = [1, 1]} : vector<256x32xf32> to vector<64x32xf32>
    %17 = vector.extract_strided_slice %12 {offsets = [192, 0], sizes = [64, 32], strides = [1, 1]} : vector<256x32xf32> to vector<64x32xf32>
    %18 = arith.maximumf %16, %17 : vector<64x32xf32>
    %19 = arith.maximumf %15, %18 : vector<64x32xf32>
    %20 = arith.truncf %19 : vector<64x32xf32> to vector<64x32xbf16>
    %c16 = arith.constant 16 : index
    %c0_13 = arith.constant 0 : index
    %21 = vector.load %arg15[%c16, %c0_13] : memref<104x32xbf16, #tpu.memory_space<vmem>>, vector<64x32xbf16>
    tpu.vector_store %arg15[%c16, %c0_13], %20 {strides = array<i32>} : memref<104x32xbf16, #tpu.memory_space<vmem>>, vector<64x32xbf16>,
    %22 = tpu.iota {dimensions = array<i32: 0>} : vector<72x1xi32>
    %c8_i32 = arith.constant 8 : i32
    %c0_i32 = arith.constant 0 : i32
    %23 = arith.cmpi eq, %c8_i32, %c0_i32 : i32
    %c1_i32 = arith.constant 1 : i32
    %24 = arith.select %23, %c1_i32, %c8_i32 : i32
    %25 = vector.broadcast %24 : i32 to vector<72x1xi32>
    %26 = arith.remsi %22, %25 : vector<72x1xi32>
    %c0_i32_14 = arith.constant 0 : i32
    %27 = vector.broadcast %c0_i32_14 : i32 to vector<72x1xi32>
    %28 = arith.cmpi ne, %26, %27 : vector<72x1xi32>
    %c0_i32_15 = arith.constant 0 : i32
    %29 = vector.broadcast %c0_i32_15 : i32 to vector<72x1xi32>
    %30 = arith.cmpi slt, %26, %29 : vector<72x1xi32>
    %c0_i32_16 = arith.constant 0 : i32
    %31 = arith.cmpi slt, %24, %c0_i32_16 : i32
    %32 = vector.broadcast %31 : i1 to vector<72x1xi1>
    %33 = vector.broadcast %32 : vector<72x1xi1> to vector<72x1xi1>
    %34 = arith.xori %30, %33 : vector<72x1xi1>
    %35 = arith.andi %34, %28 : vector<72x1xi1>
    %36 = vector.broadcast %24 : i32 to vector<72x1xi32>
    %37 = arith.addi %26, %36 : vector<72x1xi32>
    %38 = arith.select %35, %37, %26 : vector<72x1xi1>, vector<72x1xi32>
    %cst_17 = arith.constant 0.000000e+00 : f32
    %39 = vector.broadcast %cst_17 : f32 to vector<72x64xf32>
    %c7 = arith.constant 7 : index
    %c0_18 = arith.constant 0 : index
    %40 = vector.load %arg15[%c7, %c0_18] : memref<104x32xbf16, #tpu.memory_space<vmem>>, vector<72x32xbf16>
    %c0_19 = arith.constant 0 : index
    %c0_20 = arith.constant 0 : index
    %c0_21 = arith.constant 0 : index
    %41 = vector.load %arg4[%c0_19, %c0_20, %c0_21] : memref<9x32x64xbf16, #tpu.memory_space<vmem>>, vector<1x32x64xbf16>
    %42 = vector.shape_cast %41 : vector<1x32x64xbf16> to vector<32x64xbf16>
    %cst_22 = arith.constant dense<0.000000e+00> : vector<72x64xf32>
    %43 = tpu.matmul %40, %42, %cst_22 {dimension_numbers = #tpu.dot_dimension_numbers<[1], [0], [0], [1], [0, 0, 1, 1], [], []>} : vector<72x32xbf16>, vector<32x64xbf16>, vector<72x64xf32> -> vector<72x64xf32>
    %44 = arith.addf %39, %43 : vector<72x64xf32>
    %c15 = arith.constant 15 : index
    %c0_23 = arith.constant 0 : index
    %45 = vector.load %arg15[%c15, %c0_23] : memref<104x32xbf16, #tpu.memory_space<vmem>>, vector<72x32xbf16>
    %c3 = arith.constant 3 : index
    %c0_24 = arith.constant 0 : index
    %c0_25 = arith.constant 0 : index
    %46 = vector.load %arg4[%c3, %c0_24, %c0_25] : memref<9x32x64xbf16, #tpu.memory_space<vmem>>, vector<1x32x64xbf16>
    %47 = vector.shape_cast %46 : vector<1x32x64xbf16> to vector<32x64xbf16>
    %cst_26 = arith.constant dense<0.000000e+00> : vector<72x64xf32>
    %48 = tpu.matmul %45, %47, %cst_26 {dimension_numbers = #tpu.dot_dimension_numbers<[1], [0], [0], [1], [0, 0, 1, 1], [], []>} : vector<72x32xbf16>, vector<32x64xbf16>, vector<72x64xf32> -> vector<72x64xf32>
    %49 = arith.addf %44, %48 : vector<72x64xf32>
    %c23 = arith.constant 23 : index
    %c0_27 = arith.constant 0 : index
    %50 = vector.load %arg15[%c23, %c0_27] : memref<104x32xbf16, #tpu.memory_space<vmem>>, vector<72x32xbf16>
    %c6 = arith.constant 6 : index
    %c0_28 = arith.constant 0 : index
    %c0_29 = arith.constant 0 : index
    %51 = vector.load %arg4[%c6, %c0_28, %c0_29] : memref<9x32x64xbf16, #tpu.memory_space<vmem>>, vector<1x32x64xbf16>
    %52 = vector.shape_cast %51 : vector<1x32x64xbf16> to vector<32x64xbf16>
    %cst_30 = arith.constant dense<0.000000e+00> : vector<72x64xf32>
    %53 = tpu.matmul %50, %52, %cst_30 {dimension_numbers = #tpu.dot_dimension_numbers<[1], [0], [0], [1], [0, 0, 1, 1], [], []>} : vector<72x32xbf16>, vector<32x64xbf16>, vector<72x64xf32> -> vector<72x64xf32>
    %54 = arith.addf %49, %53 : vector<72x64xf32>
    %cst_31 = arith.constant 0.000000e+00 : f32
    %55 = vector.broadcast %cst_31 : f32 to vector<72x64xf32>
    %c8 = arith.constant 8 : index
    %c0_32 = arith.constant 0 : index
    %56 = vector.load %arg15[%c8, %c0_32] : memref<104x32xbf16, #tpu.memory_space<vmem>>, vector<72x32xbf16>
    %c1 = arith.constant 1 : index
    %c0_33 = arith.constant 0 : index
    %c0_34 = arith.constant 0 : index
    %57 = vector.load %arg4[%c1, %c0_33, %c0_34] : memref<9x32x64xbf16, #tpu.memory_space<vmem>>, vector<1x32x64xbf16>
    %58 = vector.shape_cast %57 : vector<1x32x64xbf16> to vector<32x64xbf16>
    %cst_35 = arith.constant dense<0.000000e+00> : vector<72x64xf32>
    %59 = tpu.matmul %56, %58, %cst_35 {dimension_numbers = #tpu.dot_dimension_numbers<[1], [0], [0], [1], [0, 0, 1, 1], [], []>} : vector<72x32xbf16>, vector<32x64xbf16>, vector<72x64xf32> -> vector<72x64xf32>
    %60 = arith.addf %55, %59 : vector<72x64xf32>
    %c16_36 = arith.constant 16 : index
    %c0_37 = arith.constant 0 : index
    %61 = vector.load %arg15[%c16_36, %c0_37] : memref<104x32xbf16, #tpu.memory_space<vmem>>, vector<72x32xbf16>
    %c4 = arith.constant 4 : index
    %c0_38 = arith.constant 0 : index
    %c0_39 = arith.constant 0 : index
    %62 = vector.load %arg4[%c4, %c0_38, %c0_39] : memref<9x32x64xbf16, #tpu.memory_space<vmem>>, vector<1x32x64xbf16>
    %63 = vector.shape_cast %62 : vector<1x32x64xbf16> to vector<32x64xbf16>
    %cst_40 = arith.constant dense<0.000000e+00> : vector<72x64xf32>
    %64 = tpu.matmul %61, %63, %cst_40 {dimension_numbers = #tpu.dot_dimension_numbers<[1], [0], [0], [1], [0, 0, 1, 1], [], []>} : vector<72x32xbf16>, vector<32x64xbf16>, vector<72x64xf32> -> vector<72x64xf32>
    %65 = arith.addf %60, %64 : vector<72x64xf32>
    %c24 = arith.constant 24 : index
    %c0_41 = arith.constant 0 : index
    %66 = vector.load %arg15[%c24, %c0_41] : memref<104x32xbf16, #tpu.memory_space<vmem>>, vector<72x32xbf16>
    %c7_42 = arith.constant 7 : index
    %c0_43 = arith.constant 0 : index
    %c0_44 = arith.constant 0 : index
    %67 = vector.load %arg4[%c7_42, %c0_43, %c0_44] : memref<9x32x64xbf16, #tpu.memory_space<vmem>>, vector<1x32x64xbf16>
    %68 = vector.shape_cast %67 : vector<1x32x64xbf16> to vector<32x64xbf16>
    %cst_45 = arith.constant dense<0.000000e+00> : vector<72x64xf32>
    %69 = tpu.matmul %66, %68, %cst_45 {dimension_numbers = #tpu.dot_dimension_numbers<[1], [0], [0], [1], [0, 0, 1, 1], [], []>} : vector<72x32xbf16>, vector<32x64xbf16>, vector<72x64xf32> -> vector<72x64xf32>
    %70 = arith.addf %65, %69 : vector<72x64xf32>
    %cst_46 = arith.constant 0.000000e+00 : f32
    %71 = vector.broadcast %cst_46 : f32 to vector<72x64xf32>
    %c9 = arith.constant 9 : index
    %c0_47 = arith.constant 0 : index
    %72 = vector.load %arg15[%c9, %c0_47] : memref<104x32xbf16, #tpu.memory_space<vmem>>, vector<72x32xbf16>
    %c2 = arith.constant 2 : index
    %c0_48 = arith.constant 0 : index
    %c0_49 = arith.constant 0 : index
    %73 = vector.load %arg4[%c2, %c0_48, %c0_49] : memref<9x32x64xbf16, #tpu.memory_space<vmem>>, vector<1x32x64xbf16>
    %74 = vector.shape_cast %73 : vector<1x32x64xbf16> to vector<32x64xbf16>
    %cst_50 = arith.constant dense<0.000000e+00> : vector<72x64xf32>
    %75 = tpu.matmul %72, %74, %cst_50 {dimension_numbers = #tpu.dot_dimension_numbers<[1], [0], [0], [1], [0, 0, 1, 1], [], []>} : vector<72x32xbf16>, vector<32x64xbf16>, vector<72x64xf32> -> vector<72x64xf32>
    %76 = arith.addf %71, %75 : vector<72x64xf32>
    %c17 = arith.constant 17 : index
    %c0_51 = arith.constant 0 : index
    %77 = vector.load %arg15[%c17, %c0_51] : memref<104x32xbf16, #tpu.memory_space<vmem>>, vector<72x32xbf16>
    %c5 = arith.constant 5 : index
    %c0_52 = arith.constant 0 : index
    %c0_53 = arith.constant 0 : index
    %78 = vector.load %arg4[%c5, %c0_52, %c0_53] : memref<9x32x64xbf16, #tpu.memory_space<vmem>>, vector<1x32x64xbf16>
    %79 = vector.shape_cast %78 : vector<1x32x64xbf16> to vector<32x64xbf16>
    %cst_54 = arith.constant dense<0.000000e+00> : vector<72x64xf32>
    %80 = tpu.matmul %77, %79, %cst_54 {dimension_numbers = #tpu.dot_dimension_numbers<[1], [0], [0], [1], [0, 0, 1, 1], [], []>} : vector<72x32xbf16>, vector<32x64xbf16>, vector<72x64xf32> -> vector<72x64xf32>
    %81 = arith.addf %76, %80 : vector<72x64xf32>
    %c25 = arith.constant 25 : index
    %c0_55 = arith.constant 0 : index
    %82 = vector.load %arg15[%c25, %c0_55] : memref<104x32xbf16, #tpu.memory_space<vmem>>, vector<72x32xbf16>
    %c8_56 = arith.constant 8 : index
    %c0_57 = arith.constant 0 : index
    %c0_58 = arith.constant 0 : index
    %83 = vector.load %arg4[%c8_56, %c0_57, %c0_58] : memref<9x32x64xbf16, #tpu.memory_space<vmem>>, vector<1x32x64xbf16>
    %84 = vector.shape_cast %83 : vector<1x32x64xbf16> to vector<32x64xbf16>
    %cst_59 = arith.constant dense<0.000000e+00> : vector<72x64xf32>
    %85 = tpu.matmul %82, %84, %cst_59 {dimension_numbers = #tpu.dot_dimension_numbers<[1], [0], [0], [1], [0, 0, 1, 1], [], []>} : vector<72x32xbf16>, vector<32x64xbf16>, vector<72x64xf32> -> vector<72x64xf32>
    %86 = arith.addf %81, %85 : vector<72x64xf32>
    %c0_i32_60 = arith.constant 0 : i32
    %87 = vector.broadcast %c0_i32_60 : i32 to vector<72x1xi32>
    %88 = arith.cmpi ne, %38, %87 : vector<72x1xi32>
    %cst_61 = arith.constant 0.000000e+00 : f32
    %89 = vector.shape_cast %88 : vector<72x1xi1> to vector<72x1xi1>
    %90 = vector.broadcast %89 : vector<72x1xi1> to vector<72x64xi1>
    %91 = vector.broadcast %cst_61 : f32 to vector<72x64xf32>
    %92 = arith.select %90, %54, %91 : vector<72x64xi1>, vector<72x64xf32>
    %93 = arith.addf %70, %92 : vector<72x64xf32>
    %c7_i32 = arith.constant 7 : i32
    %94 = vector.broadcast %c7_i32 : i32 to vector<72x1xi32>
    %95 = arith.cmpi ne, %38, %94 : vector<72x1xi32>
    %cst_62 = arith.constant 0.000000e+00 : f32
    %96 = vector.shape_cast %95 : vector<72x1xi1> to vector<72x1xi1>
    %97 = vector.broadcast %96 : vector<72x1xi1> to vector<72x64xi1>
    %98 = vector.broadcast %cst_62 : f32 to vector<72x64xf32>
    %99 = arith.select %97, %86, %98 : vector<72x64xi1>, vector<72x64xf32>
    %100 = arith.addf %93, %99 : vector<72x64xf32>
    %c0_63 = arith.constant 0 : index
    %c0_64 = arith.constant 0 : index
    %101 = vector.load %arg5[%c0_63, %c0_64] : memref<1x64xf32, #tpu.memory_space<vmem>>, vector<1x64xf32>
    %102 = vector.broadcast %101 : vector<1x64xf32> to vector<72x64xf32>
    %103 = arith.addf %100, %102 : vector<72x64xf32>
    %cst_65 = arith.constant 0.000000e+00 : f32
    %104 = vector.broadcast %cst_65 : f32 to vector<72x64xf32>
    %105 = arith.maximumf %103, %104 : vector<72x64xf32>
    %106 = vector.extract_strided_slice %105 {offsets = [0, 0], sizes = [64, 64], strides = [1, 1]} : vector<72x64xf32> to vector<64x64xf32>
    %107 = vector.extract_strided_slice %105 {offsets = [8, 0], sizes = [64, 64], strides = [1, 1]} : vector<72x64xf32> to vector<64x64xf32>
    %108 = arith.maximumf %106, %107 : vector<64x64xf32>
    %c0_66 = arith.constant 0 : index
    %c0_67 = arith.constant 0 : index
    %109 = vector.load %arg17[%c0_66, %c0_67] : memref<64x64xf32, #tpu.memory_space<vmem>>, vector<64x64xf32>
    tpu.vector_store %arg17[%c0_66, %c0_67], %108 {strides = array<i32>} : memref<64x64xf32, #tpu.memory_space<vmem>>, vector<64x64xf32>,
    %c0_68 = arith.constant 0 : index
    %c0_69 = arith.constant 0 : index
    %110 = tpu.strided_load %arg17[%c0_68, %c0_69] {strides = array<i32: 2, 1>} : memref<64x64xf32, #tpu.memory_space<vmem>>, vector<4x64xf32>
    %c1_70 = arith.constant 1 : index
    %c0_71 = arith.constant 0 : index
    %111 = tpu.strided_load %arg17[%c1_70, %c0_71] {strides = array<i32: 2, 1>} : memref<64x64xf32, #tpu.memory_space<vmem>>, vector<4x64xf32>
    %112 = arith.maximumf %110, %111 : vector<4x64xf32>
    %113 = arith.truncf %112 : vector<4x64xf32> to vector<4x64xbf16>
    %c12 = arith.constant 12 : index
    %c0_72 = arith.constant 0 : index
    %114 = vector.load %arg16[%c12, %c0_72] : memref<40x64xbf16, #tpu.memory_space<vmem>>, vector<4x64xbf16>
    tpu.vector_store %arg16[%c12, %c0_72], %113 {strides = array<i32>} : memref<40x64xbf16, #tpu.memory_space<vmem>>, vector<4x64xbf16>,
    %c16_73 = arith.constant 16 : index
    %c0_74 = arith.constant 0 : index
    %115 = tpu.strided_load %arg17[%c16_73, %c0_74] {strides = array<i32: 2, 1>} : memref<64x64xf32, #tpu.memory_space<vmem>>, vector<4x64xf32>
    %c17_75 = arith.constant 17 : index
    %c0_76 = arith.constant 0 : index
    %116 = tpu.strided_load %arg17[%c17_75, %c0_76] {strides = array<i32: 2, 1>} : memref<64x64xf32, #tpu.memory_space<vmem>>, vector<4x64xf32>
    %117 = arith.maximumf %115, %116 : vector<4x64xf32>
    %118 = arith.truncf %117 : vector<4x64xf32> to vector<4x64xbf16>
    %c16_77 = arith.constant 16 : index
    %c0_78 = arith.constant 0 : index
    %119 = vector.load %arg16[%c16_77, %c0_78] : memref<40x64xbf16, #tpu.memory_space<vmem>>, vector<4x64xbf16>
    tpu.vector_store %arg16[%c16_77, %c0_78], %118 {strides = array<i32>} : memref<40x64xbf16, #tpu.memory_space<vmem>>, vector<4x64xbf16>,
    %c32 = arith.constant 32 : index
    %c0_79 = arith.constant 0 : index
    %120 = tpu.strided_load %arg17[%c32, %c0_79] {strides = array<i32: 2, 1>} : memref<64x64xf32, #tpu.memory_space<vmem>>, vector<4x64xf32>
    %c33 = arith.constant 33 : index
    %c0_80 = arith.constant 0 : index
    %121 = tpu.strided_load %arg17[%c33, %c0_80] {strides = array<i32: 2, 1>} : memref<64x64xf32, #tpu.memory_space<vmem>>, vector<4x64xf32>
    %122 = arith.maximumf %120, %121 : vector<4x64xf32>
    %123 = arith.truncf %122 : vector<4x64xf32> to vector<4x64xbf16>
    %c20 = arith.constant 20 : index
    %c0_81 = arith.constant 0 : index
    %124 = vector.load %arg16[%c20, %c0_81] : memref<40x64xbf16, #tpu.memory_space<vmem>>, vector<4x64xbf16>
    tpu.vector_store %arg16[%c20, %c0_81], %123 {strides = array<i32>} : memref<40x64xbf16, #tpu.memory_space<vmem>>, vector<4x64xbf16>,
    %c48 = arith.constant 48 : index
    %c0_82 = arith.constant 0 : index
    %125 = tpu.strided_load %arg17[%c48, %c0_82] {strides = array<i32: 2, 1>} : memref<64x64xf32, #tpu.memory_space<vmem>>, vector<4x64xf32>
    %c49 = arith.constant 49 : index
    %c0_83 = arith.constant 0 : index
    %126 = tpu.strided_load %arg17[%c49, %c0_83] {strides = array<i32: 2, 1>} : memref<64x64xf32, #tpu.memory_space<vmem>>, vector<4x64xf32>
    %127 = arith.maximumf %125, %126 : vector<4x64xf32>
    %128 = arith.truncf %127 : vector<4x64xf32> to vector<4x64xbf16>
    %c24_84 = arith.constant 24 : index
    %c0_85 = arith.constant 0 : index
    %129 = vector.load %arg16[%c24_84, %c0_85] : memref<40x64xbf16, #tpu.memory_space<vmem>>, vector<4x64xbf16>
    tpu.vector_store %arg16[%c24_84, %c0_85], %128 {strides = array<i32>} : memref<40x64xbf16, #tpu.memory_space<vmem>>, vector<4x64xbf16>,
    %130 = tpu.iota {dimensions = array<i32: 0>} : vector<24x1xi32>
    %c4_i32 = arith.constant 4 : i32
    %c0_i32_86 = arith.constant 0 : i32
    %131 = arith.cmpi eq, %c4_i32, %c0_i32_86 : i32
    %c1_i32_87 = arith.constant 1 : i32
    %132 = arith.select %131, %c1_i32_87, %c4_i32 : i32
    %133 = vector.broadcast %132 : i32 to vector<24x1xi32>
    %134 = arith.remsi %130, %133 : vector<24x1xi32>
    %c0_i32_88 = arith.constant 0 : i32
    %135 = vector.broadcast %c0_i32_88 : i32 to vector<24x1xi32>
    %136 = arith.cmpi ne, %134, %135 : vector<24x1xi32>
    %c0_i32_89 = arith.constant 0 : i32
    %137 = vector.broadcast %c0_i32_89 : i32 to vector<24x1xi32>
    %138 = arith.cmpi slt, %134, %137 : vector<24x1xi32>
    %c0_i32_90 = arith.constant 0 : i32
    %139 = arith.cmpi slt, %132, %c0_i32_90 : i32
    %140 = vector.broadcast %139 : i1 to vector<24x1xi1>
    %141 = vector.broadcast %140 : vector<24x1xi1> to vector<24x1xi1>
    %142 = arith.xori %138, %141 : vector<24x1xi1>
    %143 = arith.andi %142, %136 : vector<24x1xi1>
    %144 = vector.broadcast %132 : i32 to vector<24x1xi32>
    %145 = arith.addi %134, %144 : vector<24x1xi32>
    %146 = arith.select %143, %145, %134 : vector<24x1xi1>, vector<24x1xi32>
    %cst_91 = arith.constant 0.000000e+00 : f32
    %147 = vector.broadcast %cst_91 : f32 to vector<24x128xf32>
    %c3_92 = arith.constant 3 : index
    %c0_93 = arith.constant 0 : index
    %148 = vector.load %arg16[%c3_92, %c0_93] : memref<40x64xbf16, #tpu.memory_space<vmem>>, vector<24x64xbf16>
    %c0_94 = arith.constant 0 : index
    %c0_95 = arith.constant 0 : index
    %c0_96 = arith.constant 0 : index
    %149 = vector.load %arg6[%c0_94, %c0_95, %c0_96] : memref<9x64x128xbf16, #tpu.memory_space<vmem>>, vector<1x64x128xbf16>
    %150 = vector.shape_cast %149 : vector<1x64x128xbf16> to vector<64x128xbf16>
    %cst_97 = arith.constant dense<0.000000e+00> : vector<24x128xf32>
    %151 = tpu.matmul %148, %150, %cst_97 {dimension_numbers = #tpu.dot_dimension_numbers<[1], [0], [0], [1], [0, 0, 1, 1], [], []>} : vector<24x64xbf16>, vector<64x128xbf16>, vector<24x128xf32> -> vector<24x128xf32>
    %152 = arith.addf %147, %151 : vector<24x128xf32>
    %c7_98 = arith.constant 7 : index
    %c0_99 = arith.constant 0 : index
    %153 = vector.load %arg16[%c7_98, %c0_99] : memref<40x64xbf16, #tpu.memory_space<vmem>>, vector<24x64xbf16>
    %c3_100 = arith.constant 3 : index
    %c0_101 = arith.constant 0 : index
    %c0_102 = arith.constant 0 : index
    %154 = vector.load %arg6[%c3_100, %c0_101, %c0_102] : memref<9x64x128xbf16, #tpu.memory_space<vmem>>, vector<1x64x128xbf16>
    %155 = vector.shape_cast %154 : vector<1x64x128xbf16> to vector<64x128xbf16>
    %cst_103 = arith.constant dense<0.000000e+00> : vector<24x128xf32>
    %156 = tpu.matmul %153, %155, %cst_103 {dimension_numbers = #tpu.dot_dimension_numbers<[1], [0], [0], [1], [0, 0, 1, 1], [], []>} : vector<24x64xbf16>, vector<64x128xbf16>, vector<24x128xf32> -> vector<24x128xf32>
    %157 = arith.addf %152, %156 : vector<24x128xf32>
    %c11 = arith.constant 11 : index
    %c0_104 = arith.constant 0 : index
    %158 = vector.load %arg16[%c11, %c0_104] : memref<40x64xbf16, #tpu.memory_space<vmem>>, vector<24x64xbf16>
    %c6_105 = arith.constant 6 : index
    %c0_106 = arith.constant 0 : index
    %c0_107 = arith.constant 0 : index
    %159 = vector.load %arg6[%c6_105, %c0_106, %c0_107] : memref<9x64x128xbf16, #tpu.memory_space<vmem>>, vector<1x64x128xbf16>
    %160 = vector.shape_cast %159 : vector<1x64x128xbf16> to vector<64x128xbf16>
    %cst_108 = arith.constant dense<0.000000e+00> : vector<24x128xf32>
    %161 = tpu.matmul %158, %160, %cst_108 {dimension_numbers = #tpu.dot_dimension_numbers<[1], [0], [0], [1], [0, 0, 1, 1], [], []>} : vector<24x64xbf16>, vector<64x128xbf16>, vector<24x128xf32> -> vector<24x128xf32>
    %162 = arith.addf %157, %161 : vector<24x128xf32>
    %cst_109 = arith.constant 0.000000e+00 : f32
    %163 = vector.broadcast %cst_109 : f32 to vector<24x128xf32>
    %c4_110 = arith.constant 4 : index
    %c0_111 = arith.constant 0 : index
    %164 = vector.load %arg16[%c4_110, %c0_111] : memref<40x64xbf16, #tpu.memory_space<vmem>>, vector<24x64xbf16>
    %c1_112 = arith.constant 1 : index
    %c0_113 = arith.constant 0 : index
    %c0_114 = arith.constant 0 : index
    %165 = vector.load %arg6[%c1_112, %c0_113, %c0_114] : memref<9x64x128xbf16, #tpu.memory_space<vmem>>, vector<1x64x128xbf16>
    %166 = vector.shape_cast %165 : vector<1x64x128xbf16> to vector<64x128xbf16>
    %cst_115 = arith.constant dense<0.000000e+00> : vector<24x128xf32>
    %167 = tpu.matmul %164, %166, %cst_115 {dimension_numbers = #tpu.dot_dimension_numbers<[1], [0], [0], [1], [0, 0, 1, 1], [], []>} : vector<24x64xbf16>, vector<64x128xbf16>, vector<24x128xf32> -> vector<24x128xf32>
    %168 = arith.addf %163, %167 : vector<24x128xf32>
    %c8_116 = arith.constant 8 : index
    %c0_117 = arith.constant 0 : index
    %169 = vector.load %arg16[%c8_116, %c0_117] : memref<40x64xbf16, #tpu.memory_space<vmem>>, vector<24x64xbf16>
    %c4_118 = arith.constant 4 : index
    %c0_119 = arith.constant 0 : index
    %c0_120 = arith.constant 0 : index
    %170 = vector.load %arg6[%c4_118, %c0_119, %c0_120] : memref<9x64x128xbf16, #tpu.memory_space<vmem>>, vector<1x64x128xbf16>
    %171 = vector.shape_cast %170 : vector<1x64x128xbf16> to vector<64x128xbf16>
    %cst_121 = arith.constant dense<0.000000e+00> : vector<24x128xf32>
    %172 = tpu.matmul %169, %171, %cst_121 {dimension_numbers = #tpu.dot_dimension_numbers<[1], [0], [0], [1], [0, 0, 1, 1], [], []>} : vector<24x64xbf16>, vector<64x128xbf16>, vector<24x128xf32> -> vector<24x128xf32>
    %173 = arith.addf %168, %172 : vector<24x128xf32>
    %c12_122 = arith.constant 12 : index
    %c0_123 = arith.constant 0 : index
    %174 = vector.load %arg16[%c12_122, %c0_123] : memref<40x64xbf16, #tpu.memory_space<vmem>>, vector<24x64xbf16>
    %c7_124 = arith.constant 7 : index
    %c0_125 = arith.constant 0 : index
    %c0_126 = arith.constant 0 : index
    %175 = vector.load %arg6[%c7_124, %c0_125, %c0_126] : memref<9x64x128xbf16, #tpu.memory_space<vmem>>, vector<1x64x128xbf16>
    %176 = vector.shape_cast %175 : vector<1x64x128xbf16> to vector<64x128xbf16>
    %cst_127 = arith.constant dense<0.000000e+00> : vector<24x128xf32>
    %177 = tpu.matmul %174, %176, %cst_127 {dimension_numbers = #tpu.dot_dimension_numbers<[1], [0], [0], [1], [0, 0, 1, 1], [], []>} : vector<24x64xbf16>, vector<64x128xbf16>, vector<24x128xf32> -> vector<24x128xf32>
    %178 = arith.addf %173, %177 : vector<24x128xf32>
    %cst_128 = arith.constant 0.000000e+00 : f32
    %179 = vector.broadcast %cst_128 : f32 to vector<24x128xf32>
    %c5_129 = arith.constant 5 : index
    %c0_130 = arith.constant 0 : index
    %180 = vector.load %arg16[%c5_129, %c0_130] : memref<40x64xbf16, #tpu.memory_space<vmem>>, vector<24x64xbf16>
    %c2_131 = arith.constant 2 : index
    %c0_132 = arith.constant 0 : index
    %c0_133 = arith.constant 0 : index
    %181 = vector.load %arg6[%c2_131, %c0_132, %c0_133] : memref<9x64x128xbf16, #tpu.memory_space<vmem>>, vector<1x64x128xbf16>
    %182 = vector.shape_cast %181 : vector<1x64x128xbf16> to vector<64x128xbf16>
    %cst_134 = arith.constant dense<0.000000e+00> : vector<24x128xf32>
    %183 = tpu.matmul %180, %182, %cst_134 {dimension_numbers = #tpu.dot_dimension_numbers<[1], [0], [0], [1], [0, 0, 1, 1], [], []>} : vector<24x64xbf16>, vector<64x128xbf16>, vector<24x128xf32> -> vector<24x128xf32>
    %184 = arith.addf %179, %183 : vector<24x128xf32>
    %c9_135 = arith.constant 9 : index
    %c0_136 = arith.constant 0 : index
    %185 = vector.load %arg16[%c9_135, %c0_136] : memref<40x64xbf16, #tpu.memory_space<vmem>>, vector<24x64xbf16>
    %c5_137 = arith.constant 5 : index
    %c0_138 = arith.constant 0 : index
    %c0_139 = arith.constant 0 : index
    %186 = vector.load %arg6[%c5_137, %c0_138, %c0_139] : memref<9x64x128xbf16, #tpu.memory_space<vmem>>, vector<1x64x128xbf16>
    %187 = vector.shape_cast %186 : vector<1x64x128xbf16> to vector<64x128xbf16>
    %cst_140 = arith.constant dense<0.000000e+00> : vector<24x128xf32>
    %188 = tpu.matmul %185, %187, %cst_140 {dimension_numbers = #tpu.dot_dimension_numbers<[1], [0], [0], [1], [0, 0, 1, 1], [], []>} : vector<24x64xbf16>, vector<64x128xbf16>, vector<24x128xf32> -> vector<24x128xf32>
    %189 = arith.addf %184, %188 : vector<24x128xf32>
    %c13 = arith.constant 13 : index
    %c0_141 = arith.constant 0 : index
    %190 = vector.load %arg16[%c13, %c0_141] : memref<40x64xbf16, #tpu.memory_space<vmem>>, vector<24x64xbf16>
    %c8_142 = arith.constant 8 : index
    %c0_143 = arith.constant 0 : index
    %c0_144 = arith.constant 0 : index
    %191 = vector.load %arg6[%c8_142, %c0_143, %c0_144] : memref<9x64x128xbf16, #tpu.memory_space<vmem>>, vector<1x64x128xbf16>
    %192 = vector.shape_cast %191 : vector<1x64x128xbf16> to vector<64x128xbf16>
    %cst_145 = arith.constant dense<0.000000e+00> : vector<24x128xf32>
    %193 = tpu.matmul %190, %192, %cst_145 {dimension_numbers = #tpu.dot_dimension_numbers<[1], [0], [0], [1], [0, 0, 1, 1], [], []>} : vector<24x64xbf16>, vector<64x128xbf16>, vector<24x128xf32> -> vector<24x128xf32>
    %194 = arith.addf %189, %193 : vector<24x128xf32>
    %c0_i32_146 = arith.constant 0 : i32
    %195 = vector.broadcast %c0_i32_146 : i32 to vector<24x1xi32>
    %196 = arith.cmpi ne, %146, %195 : vector<24x1xi32>
    %cst_147 = arith.constant 0.000000e+00 : f32
    %197 = vector.shape_cast %196 : vector<24x1xi1> to vector<24x1xi1>
    %198 = vector.broadcast %197 : vector<24x1xi1> to vector<24x128xi1>
    %199 = vector.broadcast %cst_147 : f32 to vector<24x128xf32>
    %200 = arith.select %198, %162, %199 : vector<24x128xi1>, vector<24x128xf32>
    %201 = arith.addf %178, %200 : vector<24x128xf32>
    %c3_i32 = arith.constant 3 : i32
    %202 = vector.broadcast %c3_i32 : i32 to vector<24x1xi32>
    %203 = arith.cmpi ne, %146, %202 : vector<24x1xi32>
    %cst_148 = arith.constant 0.000000e+00 : f32
    %204 = vector.shape_cast %203 : vector<24x1xi1> to vector<24x1xi1>
    %205 = vector.broadcast %204 : vector<24x1xi1> to vector<24x128xi1>
    %206 = vector.broadcast %cst_148 : f32 to vector<24x128xf32>
    %207 = arith.select %205, %194, %206 : vector<24x128xi1>, vector<24x128xf32>
    %208 = arith.addf %201, %207 : vector<24x128xf32>
    %c0_149 = arith.constant 0 : index
    %c0_150 = arith.constant 0 : index
    %209 = vector.load %arg7[%c0_149, %c0_150] : memref<1x128xf32, #tpu.memory_space<vmem>>, vector<1x128xf32>
    %210 = vector.broadcast %209 : vector<1x128xf32> to vector<24x128xf32>
    %211 = arith.addf %208, %210 : vector<24x128xf32>
    %cst_151 = arith.constant 0.000000e+00 : f32
    %212 = vector.broadcast %cst_151 : f32 to vector<24x128xf32>
    %213 = arith.maximumf %211, %212 : vector<24x128xf32>
    %214 = arith.truncf %213 : vector<24x128xf32> to vector<24x128xbf16>
    %c0_152 = arith.constant 0 : index
    %c0_153 = arith.constant 0 : index
    %215 = vector.load %arg8[%c0_152, %c0_153] : memref<128x256xbf16, #tpu.memory_space<vmem>>, vector<128x256xbf16>
    %cst_154 = arith.constant dense<0.000000e+00> : vector<24x256xf32>
    %216 = tpu.matmul %214, %215, %cst_154 {dimension_numbers = #tpu.dot_dimension_numbers<[1], [0], [0], [1], [0, 0, 1, 1], [], []>} : vector<24x128xbf16>, vector<128x256xbf16>, vector<24x256xf32> -> vector<24x256xf32>
    %c0_155 = arith.constant 0 : index
    %c0_156 = arith.constant 0 : index
    %217 = vector.load %arg9[%c0_155, %c0_156] : memref<1x256xf32, #tpu.memory_space<vmem>>, vector<1x256xf32>
    %218 = vector.broadcast %217 : vector<1x256xf32> to vector<24x256xf32>
    %219 = arith.addf %216, %218 : vector<24x256xf32>
    %cst_157 = arith.constant 0.000000e+00 : f32
    %220 = vector.broadcast %cst_157 : f32 to vector<24x256xf32>
    %221 = arith.maximumf %219, %220 : vector<24x256xf32>
    %222 = arith.truncf %221 : vector<24x256xf32> to vector<24x256xbf16>
    %c0_158 = arith.constant 0 : index
    %c0_159 = arith.constant 0 : index
    %223 = vector.load %arg10[%c0_158, %c0_159] : memref<256x512xbf16, #tpu.memory_space<vmem>>, vector<256x512xbf16>
    %cst_160 = arith.constant dense<0.000000e+00> : vector<24x512xf32>
    %224 = tpu.matmul %222, %223, %cst_160 {dimension_numbers = #tpu.dot_dimension_numbers<[1], [0], [0], [1], [0, 0, 1, 1], [], []>} : vector<24x256xbf16>, vector<256x512xbf16>, vector<24x512xf32> -> vector<24x512xf32>
    %c0_161 = arith.constant 0 : index
    %c0_162 = arith.constant 0 : index
    %225 = vector.load %arg11[%c0_161, %c0_162] : memref<1x512xf32, #tpu.memory_space<vmem>>, vector<1x512xf32>
    %226 = vector.broadcast %225 : vector<1x512xf32> to vector<24x512xf32>
    %227 = arith.addf %224, %226 : vector<24x512xf32>
    %cst_163 = arith.constant 0.000000e+00 : f32
    %228 = vector.broadcast %cst_163 : f32 to vector<24x512xf32>
    %229 = arith.maximumf %227, %228 : vector<24x512xf32>
    %230 = arith.truncf %229 : vector<24x512xf32> to vector<24x512xbf16>
    %c0_164 = arith.constant 0 : index
    %c0_165 = arith.constant 0 : index
    %231 = vector.load %arg12[%c0_164, %c0_165] : memref<512x16xbf16, #tpu.memory_space<vmem>>, vector<512x16xbf16>
    %cst_166 = arith.constant dense<0.000000e+00> : vector<24x16xf32>
    %232 = tpu.matmul %230, %231, %cst_166 {dimension_numbers = #tpu.dot_dimension_numbers<[1], [0], [0], [1], [0, 0, 1, 1], [], []>} : vector<24x512xbf16>, vector<512x16xbf16>, vector<24x16xf32> -> vector<24x16xf32>
    %c0_167 = arith.constant 0 : index
    %c0_168 = arith.constant 0 : index
    %233 = vector.load %arg13[%c0_167, %c0_168] : memref<1x1xf32, #tpu.memory_space<vmem>>, vector<1x1xf32>
    %234 = vector.broadcast %233 : vector<1x1xf32> to vector<24x16xf32>
    %235 = arith.addf %232, %234 : vector<24x16xf32>
    %c0_169 = arith.constant 0 : index
    %c0_170 = arith.constant 0 : index
    %c0_171 = arith.constant 0 : index
    %236 = vector.load %arg14[%c0_169, %c0_170, %c0_171] : memref<1x24x16xf32, #tpu.memory_space<vmem>>, vector<1x24x16xf32>
    %237 = vector.shape_cast %236 : vector<1x24x16xf32> to vector<24x16xf32>
    %238 = vector.shape_cast %235 : vector<24x16xf32> to vector<1x24x16xf32>
    tpu.vector_store %arg14[%c0_169, %c0_170, %c0_171], %238 {strides = array<i32>} : memref<1x24x16xf32, #tpu.memory_space<vmem>>, vector<1x24x16xf32>,
    return
  }
  func.func @transform_0(%arg0: i32) -> (i32, i32, i32) {
    %c0_i32 = arith.constant 0 : i32
    %c0_i32_0 = arith.constant 0 : i32
    %c0_i32_1 = arith.constant 0 : i32
    return %arg0, %c0_i32, %c0_i32_0 : i32, i32, i32
  }
  func.func @transform_1(%arg0: i32) -> (i32, i32) {
    %c0_i32 = arith.constant 0 : i32
    %c0_i32_0 = arith.constant 0 : i32
    %c0_i32_1 = arith.constant 0 : i32
    return %c0_i32, %c0_i32_0 : i32, i32
  }
  func.func @transform_2(%arg0: i32) -> (i32, i32) {
    %c0_i32 = arith.constant 0 : i32
    %c0_i32_0 = arith.constant 0 : i32
    %c0_i32_1 = arith.constant 0 : i32
    return %c0_i32, %c0_i32_0 : i32, i32
  }
  func.func @transform_3(%arg0: i32) -> (i32, i32, i32) {
    %c0_i32 = arith.constant 0 : i32
    %c0_i32_0 = arith.constant 0 : i32
    %c0_i32_1 = arith.constant 0 : i32
    %c0_i32_2 = arith.constant 0 : i32
    return %c0_i32, %c0_i32_0, %c0_i32_1 : i32, i32, i32
  }
  func.func @transform_4(%arg0: i32) -> (i32, i32) {
    %c0_i32 = arith.constant 0 : i32
    %c0_i32_0 = arith.constant 0 : i32
    %c0_i32_1 = arith.constant 0 : i32
    return %c0_i32, %c0_i32_0 : i32, i32
  }
  func.func @transform_5(%arg0: i32) -> (i32, i32, i32) {
    %c0_i32 = arith.constant 0 : i32
    %c0_i32_0 = arith.constant 0 : i32
    %c0_i32_1 = arith.constant 0 : i32
    %c0_i32_2 = arith.constant 0 : i32
    return %c0_i32, %c0_i32_0, %c0_i32_1 : i32, i32, i32
  }
  func.func @transform_6(%arg0: i32) -> (i32, i32) {
    %c0_i32 = arith.constant 0 : i32
    %c0_i32_0 = arith.constant 0 : i32
    %c0_i32_1 = arith.constant 0 : i32
    return %c0_i32, %c0_i32_0 : i32, i32
  }
  func.func @transform_7(%arg0: i32) -> (i32, i32) {
    %c0_i32 = arith.constant 0 : i32
    %c0_i32_0 = arith.constant 0 : i32
    %c0_i32_1 = arith.constant 0 : i32
    return %c0_i32, %c0_i32_0 : i32, i32
  }
  func.func @transform_8(%arg0: i32) -> (i32, i32) {
    %c0_i32 = arith.constant 0 : i32
    %c0_i32_0 = arith.constant 0 : i32
    %c0_i32_1 = arith.constant 0 : i32
    return %c0_i32, %c0_i32_0 : i32, i32
  }
  func.func @transform_9(%arg0: i32) -> (i32, i32) {
    %c0_i32 = arith.constant 0 : i32
    %c0_i32_0 = arith.constant 0 : i32
    %c0_i32_1 = arith.constant 0 : i32
    return %c0_i32, %c0_i32_0 : i32, i32
  }
  func.func @transform_10(%arg0: i32) -> (i32, i32) {
    %c0_i32 = arith.constant 0 : i32
    %c0_i32_0 = arith.constant 0 : i32
    %c0_i32_1 = arith.constant 0 : i32
    return %c0_i32, %c0_i32_0 : i32, i32
  }
  func.func @transform_11(%arg0: i32) -> (i32, i32) {
    %c0_i32 = arith.constant 0 : i32
    %c0_i32_0 = arith.constant 0 : i32
    %c0_i32_1 = arith.constant 0 : i32
    return %c0_i32, %c0_i32_0 : i32, i32
  }
  func.func @transform_12(%arg0: i32) -> (i32, i32) {
    %c0_i32 = arith.constant 0 : i32
    %c0_i32_0 = arith.constant 0 : i32
    %c0_i32_1 = arith.constant 0 : i32
    return %c0_i32, %c0_i32_0 : i32, i32
  }
  func.func @transform_13(%arg0: i32) -> (i32, i32, i32) {
    %c0_i32 = arith.constant 0 : i32
    %c0_i32_0 = arith.constant 0 : i32
    %c0_i32_1 = arith.constant 0 : i32
    return %arg0, %c0_i32, %c0_i32_0 : i32, i32, i32
  }
}

</mosaic_0001>

<llo_original>
// kernel: simple_cnn_forward.1
$region0: #{simple_cnn_forward.1}
  #allocation0 [shape = 'u32[]', space=smem, size = 0x4, offset = 0x4, fixed_abs, tag = 'smem constant byte address 0x4 - core index']
  #allocation1 [shape = 'u32[144,128]{1,0:T(1,128)}', space=vmem, size = 0x12000, scoped, tag = 'internal scratch']
  #allocation2 [shape = 'bf16[104,32]{1,0:T(8,128)(2,1)}', space=vmem, size = 0x6800, scoped, tag = 'scratch operand']
  #allocation3 [shape = 'bf16[40,64]{1,0:T(8,128)(2,1)}', space=vmem, size = 0x2800, scoped, tag = 'scratch operand']
  #allocation4 [shape = 'f32[64,64]{1,0:T(8,128)}', space=vmem, size = 0x8000, scoped, tag = 'scratch operand']
  #allocation5 [shape = 'f32[1,1]{1,0:T(1,128)S(1)}', space=vmem, size = 0x200, scoped, tag = 'scoped memory for simple_cnn_forward.1']
  %s0 = inlined_call_operand.vmem [shape: bf16[2,256,32], index: 0, kind: input, shape index: {}]
  %s1 = inlined_call_operand.vmem [shape: bf16[32,32], index: 1, kind: input, shape index: {}]
  %s2 = inlined_call_operand.vmem [shape: f32[1,32], index: 2, kind: input, shape index: {}]
  %s3 = inlined_call_operand.vmem [shape: bf16[9,32,64], index: 3, kind: input, shape index: {}]
  %s4 = inlined_call_operand.vmem [shape: f32[1,64], index: 4, kind: input, shape index: {}]
  %s5 = inlined_call_operand.vmem [shape: bf16[9,64,128], index: 5, kind: input, shape index: {}]
  %s6 = inlined_call_operand.vmem [shape: f32[1,128], index: 6, kind: input, shape index: {}]
  %s7 = inlined_call_operand.vmem [shape: bf16[128,256], index: 7, kind: input, shape index: {}]
  %s8 = inlined_call_operand.vmem [shape: f32[1,256], index: 8, kind: input, shape index: {}]
  %s9 = inlined_call_operand.vmem [shape: bf16[256,512], index: 9, kind: input, shape index: {}]
  %s10 = inlined_call_operand.vmem [shape: f32[1,512], index: 10, kind: input, shape index: {}]
  %s11 = inlined_call_operand.vmem [shape: bf16[512,16], index: 11, kind: input, shape index: {}]
  %s12 = inlined_call_operand.<no memory space> [shape: f32[1,1], index: 12, kind: input, shape index: {}]
  %s13 = inlined_call_operand.vmem [shape: f32[2,24,16], index: 13, kind: output, shape index: {}]
  %s14 = sld [smem:[#allocation0]]
  $region85: #{simple_cnn_forward.1} parent=0
    _
  %s16 = ssub.s32 1, %s14
  %s17 = scalar_select 0, %s16, %s14
  %v18 = vstv %s12
  %19 = vst [vmem:[#allocation5] sm:$0x1] %v18
  loop: start=0, step=1, limit=4
  $region2: #{simple_cnn_forward.1} parent=0 // loop_pre_header
    _
  $region3: #{simple_cnn_forward.1} parent=0 // loop_header
    %s21 = sphi 0, %s25
    %p22 = scmp.ge.s32.totalorder %s21, 4
    %s31 = sphi 0, %s33
    %s34 = sphi 0, %s31
    %s35 = sphi 0, %s34
    %s51 = sphi 0, %s35
    %s55 = sphi 0, %s55
    %s57 = sphi 0, %s55
    %s58 = sphi 0, %s57
    %s72 = sphi 0, %s58
    %s76 = sphi 0, %s76
    %s78 = sphi 0, %s76
    %s79 = sphi 0, %s78
    %s93 = sphi 0, %s79
    %s97 = sphi 0, %s97
    %s99 = sphi 0, %s97
    %s100 = sphi 0, %s99
    %s114 = sphi 0, %s100
    %s118 = sphi 0, %s118
    %s120 = sphi 0, %s118
    %s121 = sphi 0, %s120
    %s135 = sphi 0, %s121
    %s139 = sphi 0, %s139
    %s141 = sphi 0, %s139
    %s142 = sphi 0, %s141
    %s156 = sphi 0, %s142
    %s160 = sphi 0, %s160
    %s162 = sphi 0, %s160
    %s163 = sphi 0, %s162
    %s177 = sphi 0, %s163
    %s181 = sphi 0, %s181
    %s183 = sphi 0, %s181
    %s184 = sphi 0, %s183
    %s198 = sphi 0, %s184
    %s202 = sphi 0, %s202
    %s204 = sphi 0, %s202
    %s205 = sphi 0, %s204
    %s219 = sphi 0, %s205
    %s223 = sphi 0, %s223
    %s225 = sphi 0, %s223
    %s226 = sphi 0, %s225
    %s240 = sphi 0, %s226
    %s244 = sphi 0, %s244
    %s246 = sphi 0, %s244
    %s247 = sphi 0, %s246
    %s261 = sphi 0, %s247
    %s265 = sphi 0, %s265
    %s267 = sphi 0, %s265
    %s268 = sphi 0, %s267
    %s282 = sphi 0, %s268
    %s286 = sphi 0, %s286
    %s288 = sphi 0, %s286
    %s289 = sphi 0, %s288
    %s303 = sphi 0, %s289
    %s309 = sphi 0, %s311
    %s312 = sphi 0, %s309
    %s313 = sphi 0, %s312
    %s329 = sphi 0, %s313
  $region4: #{simple_cnn_forward.1} parent=0 // loop_header_branch
    %24 = sbr.rel (%p22) target = $region8
  $region5: #{simple_cnn_forward.1} parent=0 // loop_body
    %s26 = ssub.s32 %s21, 1
    %s27 = ssub.s32 %s21, 2
    %s28 = sadd.s32 %s21, 1
    %s29 = ssub.s32 %s21, %s28
    %p30 = scmp.eq.s32.totalorder %s29, 0
    %s32 = sadd.s32 %s31, 1
    %s33 = scalar_select %p30, %s31, %s32
    %p36 = pneg %p30
    %p37 = scmp.eq.s32.totalorder %s21, 1
    %p38 = por %p36, %p37
    %p39 = scmp.ne.s32.totalorder %s31, %s34
    %p40 = scmp.eq.s32.totalorder %s21, 0
    %p41 = por %p39, %p40
    %p42 = scmp.ne.s32.totalorder %s31, %s34
    %p43 = scmp.eq.s32.totalorder %s26, 1
    %p44 = por %p42, %p43
    %p45 = scmp.ne.s32.totalorder %s34, %s35
    %p46 = scmp.eq.s32.totalorder %s26, 0
    %p47 = por %p45, %p46
    %p48 = scmp.ne.s32.totalorder %s34, %s35
    %p49 = scmp.eq.s32.totalorder %s27, 1
    %p50 = por %p48, %p49
    %p52 = scmp.ne.s32.totalorder %s35, %s51
    %p53 = scmp.eq.s32.totalorder %s27, 0
    %p54 = por %p52, %p53
    %s56 = sadd.s32 %s55, 1
    %p59 = scmp.eq.s32.totalorder %s21, 1
    %p60 = scmp.ne.s32.totalorder %s55, %s57
    %p61 = scmp.eq.s32.totalorder %s21, 0
    %p62 = por %p60, %p61
    %p63 = scmp.ne.s32.totalorder %s55, %s57
    %p64 = scmp.eq.s32.totalorder %s26, 1
    %p65 = por %p63, %p64
    %p66 = scmp.ne.s32.totalorder %s57, %s58
    %p67 = scmp.eq.s32.totalorder %s26, 0
    %p68 = por %p66, %p67
    %p69 = scmp.ne.s32.totalorder %s57, %s58
    %p70 = scmp.eq.s32.totalorder %s27, 1
    %p71 = por %p69, %p70
    %p73 = scmp.ne.s32.totalorder %s58, %s72
    %p74 = scmp.eq.s32.totalorder %s27, 0
    %p75 = por %p73, %p74
    %s77 = sadd.s32 %s76, 1
    %p80 = scmp.eq.s32.totalorder %s21, 1
    %p81 = scmp.ne.s32.totalorder %s76, %s78
    %p82 = scmp.eq.s32.totalorder %s21, 0
    %p83 = por %p81, %p82
    %p84 = scmp.ne.s32.totalorder %s76, %s78
    %p85 = scmp.eq.s32.totalorder %s26, 1
    %p86 = por %p84, %p85
    %p87 = scmp.ne.s32.totalorder %s78, %s79
    %p88 = scmp.eq.s32.totalorder %s26, 0
    %p89 = por %p87, %p88
    %p90 = scmp.ne.s32.totalorder %s78, %s79
    %p91 = scmp.eq.s32.totalorder %s27, 1
    %p92 = por %p90, %p91
    %p94 = scmp.ne.s32.totalorder %s79, %s93
    %p95 = scmp.eq.s32.totalorder %s27, 0
    %p96 = por %p94, %p95
    %s98 = sadd.s32 %s97, 1
    %p101 = scmp.eq.s32.totalorder %s21, 1
    %p102 = scmp.ne.s32.totalorder %s97, %s99
    %p103 = scmp.eq.s32.totalorder %s21, 0
    %p104 = por %p102, %p103
    %p105 = scmp.ne.s32.totalorder %s97, %s99
    %p106 = scmp.eq.s32.totalorder %s26, 1
    %p107 = por %p105, %p106
    %p108 = scmp.ne.s32.totalorder %s99, %s100
    %p109 = scmp.eq.s32.totalorder %s26, 0
    %p110 = por %p108, %p109
    %p111 = scmp.ne.s32.totalorder %s99, %s100
    %p112 = scmp.eq.s32.totalorder %s27, 1
    %p113 = por %p111, %p112
    %p115 = scmp.ne.s32.totalorder %s100, %s114
    %p116 = scmp.eq.s32.totalorder %s27, 0
    %p117 = por %p115, %p116
    %s119 = sadd.s32 %s118, 1
    %p122 = scmp.eq.s32.totalorder %s21, 1
    %p123 = scmp.ne.s32.totalorder %s118, %s120
    %p124 = scmp.eq.s32.totalorder %s21, 0
    %p125 = por %p123, %p124
    %p126 = scmp.ne.s32.totalorder %s118, %s120
    %p127 = scmp.eq.s32.totalorder %s26, 1
    %p128 = por %p126, %p127
    %p129 = scmp.ne.s32.totalorder %s120, %s121
    %p130 = scmp.eq.s32.totalorder %s26, 0
    %p131 = por %p129, %p130
    %p132 = scmp.ne.s32.totalorder %s120, %s121
    %p133 = scmp.eq.s32.totalorder %s27, 1
    %p134 = por %p132, %p133
    %p136 = scmp.ne.s32.totalorder %s121, %s135
    %p137 = scmp.eq.s32.totalorder %s27, 0
    %p138 = por %p136, %p137
    %s140 = sadd.s32 %s139, 1
    %p143 = scmp.eq.s32.totalorder %s21, 1
    %p144 = scmp.ne.s32.totalorder %s139, %s141
    %p145 = scmp.eq.s32.totalorder %s21, 0
    %p146 = por %p144, %p145
    %p147 = scmp.ne.s32.totalorder %s139, %s141
    %p148 = scmp.eq.s32.totalorder %s26, 1
    %p149 = por %p147, %p148
    %p150 = scmp.ne.s32.totalorder %s141, %s142
    %p151 = scmp.eq.s32.totalorder %s26, 0
    %p152 = por %p150, %p151
    %p153 = scmp.ne.s32.totalorder %s141, %s142
    %p154 = scmp.eq.s32.totalorder %s27, 1
    %p155 = por %p153, %p154
    %p157 = scmp.ne.s32.totalorder %s142, %s156
    %p158 = scmp.eq.s32.totalorder %s27, 0
    %p159 = por %p157, %p158
    %s161 = sadd.s32 %s160, 1
    %p164 = scmp.eq.s32.totalorder %s21, 1
    %p165 = scmp.ne.s32.totalorder %s160, %s162
    %p166 = scmp.eq.s32.totalorder %s21, 0
    %p167 = por %p165, %p166
    %p168 = scmp.ne.s32.totalorder %s160, %s162
    %p169 = scmp.eq.s32.totalorder %s26, 1
    %p170 = por %p168, %p169
    %p171 = scmp.ne.s32.totalorder %s162, %s163
    %p172 = scmp.eq.s32.totalorder %s26, 0
    %p173 = por %p171, %p172
    %p174 = scmp.ne.s32.totalorder %s162, %s163
    %p175 = scmp.eq.s32.totalorder %s27, 1
    %p176 = por %p174, %p175
    %p178 = scmp.ne.s32.totalorder %s163, %s177
    %p179 = scmp.eq.s32.totalorder %s27, 0
    %p180 = por %p178, %p179
    %s182 = sadd.s32 %s181, 1
    %p185 = scmp.eq.s32.totalorder %s21, 1
    %p186 = scmp.ne.s32.totalorder %s181, %s183
    %p187 = scmp.eq.s32.totalorder %s21, 0
    %p188 = por %p186, %p187
    %p189 = scmp.ne.s32.totalorder %s181, %s183
    %p190 = scmp.eq.s32.totalorder %s26, 1
    %p191 = por %p189, %p190
    %p192 = scmp.ne.s32.totalorder %s183, %s184
    %p193 = scmp.eq.s32.totalorder %s26, 0
    %p194 = por %p192, %p193
    %p195 = scmp.ne.s32.totalorder %s183, %s184
    %p196 = scmp.eq.s32.totalorder %s27, 1
    %p197 = por %p195, %p196
    %p199 = scmp.ne.s32.totalorder %s184, %s198
    %p200 = scmp.eq.s32.totalorder %s27, 0
    %p201 = por %p199, %p200
    %s203 = sadd.s32 %s202, 1
    %p206 = scmp.eq.s32.totalorder %s21, 1
    %p207 = scmp.ne.s32.totalorder %s202, %s204
    %p208 = scmp.eq.s32.totalorder %s21, 0
    %p209 = por %p207, %p208
    %p210 = scmp.ne.s32.totalorder %s202, %s204
    %p211 = scmp.eq.s32.totalorder %s26, 1
    %p212 = por %p210, %p211
    %p213 = scmp.ne.s32.totalorder %s204, %s205
    %p214 = scmp.eq.s32.totalorder %s26, 0
    %p215 = por %p213, %p214
    %p216 = scmp.ne.s32.totalorder %s204, %s205
    %p217 = scmp.eq.s32.totalorder %s27, 1
    %p218 = por %p216, %p217
    %p220 = scmp.ne.s32.totalorder %s205, %s219
    %p221 = scmp.eq.s32.totalorder %s27, 0
    %p222 = por %p220, %p221
    %s224 = sadd.s32 %s223, 1
    %p227 = scmp.eq.s32.totalorder %s21, 1
    %p228 = scmp.ne.s32.totalorder %s223, %s225
    %p229 = scmp.eq.s32.totalorder %s21, 0
    %p230 = por %p228, %p229
    %p231 = scmp.ne.s32.totalorder %s223, %s225
    %p232 = scmp.eq.s32.totalorder %s26, 1
    %p233 = por %p231, %p232
    %p234 = scmp.ne.s32.totalorder %s225, %s226
    %p235 = scmp.eq.s32.totalorder %s26, 0
    %p236 = por %p234, %p235
    %p237 = scmp.ne.s32.totalorder %s225, %s226
    %p238 = scmp.eq.s32.totalorder %s27, 1
    %p239 = por %p237, %p238
    %p241 = scmp.ne.s32.totalorder %s226, %s240
    %p242 = scmp.eq.s32.totalorder %s27, 0
    %p243 = por %p241, %p242
    %s245 = sadd.s32 %s244, 1
    %p248 = scmp.eq.s32.totalorder %s21, 1
    %p249 = scmp.ne.s32.totalorder %s244, %s246
    %p250 = scmp.eq.s32.totalorder %s21, 0
    %p251 = por %p249, %p250
    %p252 = scmp.ne.s32.totalorder %s244, %s246
    %p253 = scmp.eq.s32.totalorder %s26, 1
    %p254 = por %p252, %p253
    %p255 = scmp.ne.s32.totalorder %s246, %s247
    %p256 = scmp.eq.s32.totalorder %s26, 0
    %p257 = por %p255, %p256
    %p258 = scmp.ne.s32.totalorder %s246, %s247
    %p259 = scmp.eq.s32.totalorder %s27, 1
    %p260 = por %p258, %p259
    %p262 = scmp.ne.s32.totalorder %s247, %s261
    %p263 = scmp.eq.s32.totalorder %s27, 0
    %p264 = por %p262, %p263
    %s266 = sadd.s32 %s265, 1
    %p269 = scmp.eq.s32.totalorder %s21, 1
    %p270 = scmp.ne.s32.totalorder %s265, %s267
    %p271 = scmp.eq.s32.totalorder %s21, 0
    %p272 = por %p270, %p271
    %p273 = scmp.ne.s32.totalorder %s265, %s267
    %p274 = scmp.eq.s32.totalorder %s26, 1
    %p275 = por %p273, %p274
    %p276 = scmp.ne.s32.totalorder %s267, %s268
    %p277 = scmp.eq.s32.totalorder %s26, 0
    %p278 = por %p276, %p277
    %p279 = scmp.ne.s32.totalorder %s267, %s268
    %p280 = scmp.eq.s32.totalorder %s27, 1
    %p281 = por %p279, %p280
    %p283 = scmp.ne.s32.totalorder %s268, %s282
    %p284 = scmp.eq.s32.totalorder %s27, 0
    %p285 = por %p283, %p284
    %s287 = sadd.s32 %s286, 1
    %p290 = scmp.eq.s32.totalorder %s21, 1
    %p291 = scmp.ne.s32.totalorder %s286, %s288
    %p292 = scmp.eq.s32.totalorder %s21, 0
    %p293 = por %p291, %p292
    %p294 = scmp.ne.s32.totalorder %s286, %s288
    %p295 = scmp.eq.s32.totalorder %s26, 1
    %p296 = por %p294, %p295
    %p297 = scmp.ne.s32.totalorder %s288, %s289
    %p298 = scmp.eq.s32.totalorder %s26, 0
    %p299 = por %p297, %p298
    %p300 = scmp.ne.s32.totalorder %s288, %s289
    %p301 = scmp.eq.s32.totalorder %s27, 1
    %p302 = por %p300, %p301
    %p304 = scmp.ne.s32.totalorder %s289, %s303
    %p305 = scmp.eq.s32.totalorder %s27, 0
    %p306 = por %p304, %p305
    %s307 = ssub.s32 %s21, %s28
    %p308 = scmp.eq.s32.totalorder %s307, 0
    %s310 = sadd.s32 %s309, 1
    %s311 = scalar_select %p308, %s309, %s310
    %p314 = pneg %p308
    %p315 = scmp.eq.s32.totalorder %s21, 1
    %p316 = por %p314, %p315
    %p317 = scmp.ne.s32.totalorder %s309, %s312
    %p318 = scmp.eq.s32.totalorder %s21, 0
    %p319 = por %p317, %p318
    %p320 = scmp.ne.s32.totalorder %s309, %s312
    %p321 = scmp.eq.s32.totalorder %s26, 1
    %p322 = por %p320, %p321
    %p323 = scmp.ne.s32.totalorder %s312, %s313
    %p324 = scmp.eq.s32.totalorder %s26, 0
    %p325 = por %p323, %p324
    %p326 = scmp.ne.s32.totalorder %s312, %s313
    %p327 = scmp.eq.s32.totalorder %s27, 1
    %p328 = por %p326, %p327
    %p330 = scmp.ne.s32.totalorder %s313, %s329
    %p331 = scmp.eq.s32.totalorder %s27, 0
    %p332 = por %p330, %p331
    %p333 = scmp.le.s32.totalorder 1, %s21
    %p334 = scmp.lt.s32.totalorder %s21, 3
    %p335 = pnand %p333, %p334
    %p336 = pneg %p335
    // Predicated region
    $region9: #{simple_cnn_forward.1} parent=5 // pred_check
      _
    $region10: #{simple_cnn_forward.1} parent=5 // pred_check_branch
      %338 = sbr.rel (%p335) target = $region12
    $region11: #{simple_cnn_forward.1} parent=5 // pred_region
      %s339 = ssub.s32 %s21, 1
      // Predicated region
      $region13: #{simple_cnn_forward.1} parent=11 // pred_check
        %p340 = pneg %p68
      $region14: #{simple_cnn_forward.1} parent=11 // pred_check_branch
        %342 = sbr.rel (%p340) target = $region16
      $region15: #{simple_cnn_forward.1} parent=11 // pred_region
        _
      $region16: #{simple_cnn_forward.1} parent=11 // pred_fallthru
        _
      // Predicated region
      $region17: #{simple_cnn_forward.1} parent=11 // pred_check
        %p343 = pneg %p89
      $region18: #{simple_cnn_forward.1} parent=11 // pred_check_branch
        %345 = sbr.rel (%p343) target = $region20
      $region19: #{simple_cnn_forward.1} parent=11 // pred_region
        _
      $region20: #{simple_cnn_forward.1} parent=11 // pred_fallthru
        _
      // Predicated region
      $region21: #{simple_cnn_forward.1} parent=11 // pred_check
        %p346 = pneg %p110
      $region22: #{simple_cnn_forward.1} parent=11 // pred_check_branch
        %348 = sbr.rel (%p346) target = $region24
      $region23: #{simple_cnn_forward.1} parent=11 // pred_region
        _
      $region24: #{simple_cnn_forward.1} parent=11 // pred_fallthru
        _
      // Predicated region
      $region25: #{simple_cnn_forward.1} parent=11 // pred_check
        %p349 = pneg %p131
      $region26: #{simple_cnn_forward.1} parent=11 // pred_check_branch
        %351 = sbr.rel (%p349) target = $region28
      $region27: #{simple_cnn_forward.1} parent=11 // pred_region
        _
      $region28: #{simple_cnn_forward.1} parent=11 // pred_fallthru
        _
      // Predicated region
      $region29: #{simple_cnn_forward.1} parent=11 // pred_check
        %p352 = pneg %p152
      $region30: #{simple_cnn_forward.1} parent=11 // pred_check_branch
        %354 = sbr.rel (%p352) target = $region32
      $region31: #{simple_cnn_forward.1} parent=11 // pred_region
        _
      $region32: #{simple_cnn_forward.1} parent=11 // pred_fallthru
        _
      // Predicated region
      $region33: #{simple_cnn_forward.1} parent=11 // pred_check
        %p355 = pneg %p173
      $region34: #{simple_cnn_forward.1} parent=11 // pred_check_branch
        %357 = sbr.rel (%p355) target = $region36
      $region35: #{simple_cnn_forward.1} parent=11 // pred_region
        _
      $region36: #{simple_cnn_forward.1} parent=11 // pred_fallthru
        _
      // Predicated region
      $region37: #{simple_cnn_forward.1} parent=11 // pred_check
        %p358 = pneg %p194
      $region38: #{simple_cnn_forward.1} parent=11 // pred_check_branch
        %360 = sbr.rel (%p358) target = $region40
      $region39: #{simple_cnn_forward.1} parent=11 // pred_region
        _
      $region40: #{simple_cnn_forward.1} parent=11 // pred_fallthru
        _
      // Predicated region
      $region41: #{simple_cnn_forward.1} parent=11 // pred_check
        %p361 = pneg %p215
      $region42: #{simple_cnn_forward.1} parent=11 // pred_check_branch
        %363 = sbr.rel (%p361) target = $region44
      $region43: #{simple_cnn_forward.1} parent=11 // pred_region
        _
      $region44: #{simple_cnn_forward.1} parent=11 // pred_fallthru
        _
      // Predicated region
      $region45: #{simple_cnn_forward.1} parent=11 // pred_check
        %p364 = pneg %p236
      $region46: #{simple_cnn_forward.1} parent=11 // pred_check_branch
        %366 = sbr.rel (%p364) target = $region48
      $region47: #{simple_cnn_forward.1} parent=11 // pred_region
        _
      $region48: #{simple_cnn_forward.1} parent=11 // pred_fallthru
        _
      // Predicated region
      $region49: #{simple_cnn_forward.1} parent=11 // pred_check
        %p367 = pneg %p257
      $region50: #{simple_cnn_forward.1} parent=11 // pred_check_branch
        %369 = sbr.rel (%p367) target = $region52
      $region51: #{simple_cnn_forward.1} parent=11 // pred_region
        _
      $region52: #{simple_cnn_forward.1} parent=11 // pred_fallthru
        _
      // Predicated region
      $region53: #{simple_cnn_forward.1} parent=11 // pred_check
        %p370 = pneg %p278
      $region54: #{simple_cnn_forward.1} parent=11 // pred_check_branch
        %372 = sbr.rel (%p370) target = $region56
      $region55: #{simple_cnn_forward.1} parent=11 // pred_region
        _
      $region56: #{simple_cnn_forward.1} parent=11 // pred_fallthru
        _
      // Predicated region
      $region57: #{simple_cnn_forward.1} parent=11 // pred_check
        %p373 = pneg %p299
      $region58: #{simple_cnn_forward.1} parent=11 // pred_check_branch
        %375 = sbr.rel (%p373) target = $region60
      $region59: #{simple_cnn_forward.1} parent=11 // pred_region
        _
      $region60: #{simple_cnn_forward.1} parent=11 // pred_fallthru
        _
    $region12: #{simple_cnn_forward.1} parent=5 // pred_fallthru
      _
    %p376 = scmp.lt.s32.totalorder %s21, 2
    // Predicated region
    $region61: #{simple_cnn_forward.1} parent=5 // pred_check
      %p377 = pneg %p376
    $region62: #{simple_cnn_forward.1} parent=5 // pred_check_branch
      %379 = sbr.rel (%p377) target = $region64
    $region63: #{simple_cnn_forward.1} parent=5 // pred_region
      // Predicated region
      $region65: #{simple_cnn_forward.1} parent=63 // pred_check
        %p380 = pneg %p41
      $region66: #{simple_cnn_forward.1} parent=63 // pred_check_branch
        %382 = sbr.rel (%p380) target = $region68
      $region67: #{simple_cnn_forward.1} parent=63 // pred_region
        %p383 = scmp.lt.s32.totalorder %s21, 1
        %s384 = scalar_select %p383, %s21, 1
        %s385 = smul.addr %s384, 32
        %s386 = smul.addr %s385, 4
        %s387 = scalar_lea.vmem %s0, %s386
      $region68: #{simple_cnn_forward.1} parent=63 // pred_fallthru
        _
    $region64: #{simple_cnn_forward.1} parent=5 // pred_fallthru
      _
    %p388 = scmp.le.s32.totalorder 1, %s21
    %p389 = scmp.lt.s32.totalorder %s21, 3
    %p390 = pnand %p388, %p389
    %p391 = pneg %p390
    // Predicated region
    $region69: #{simple_cnn_forward.1} parent=5 // pred_check
      _
    $region70: #{simple_cnn_forward.1} parent=5 // pred_check_branch
      %393 = sbr.rel (%p390) target = $region72
    $region71: #{simple_cnn_forward.1} parent=5 // pred_region
      %s394 = ssub.s32 %s21, 1
      %p395 = scmp.lt.s32.totalorder %s26, 1
      %s396 = scalar_select %p395, %s26, 1
      %s397 = smul.addr %s396, 32
      %s398 = smul.addr %s397, 4
      %s399 = scalar_lea.vmem %s0, %s398
      %p400 = pneg %p47
      %p401 = pneg %p44
      %p402 = pneg %p68
      %p403 = pneg %p65
      %p404 = pneg %p89
      %p405 = pneg %p86
      %p406 = pneg %p110
      %p407 = pneg %p107
      %p408 = pneg %p131
      %p409 = pneg %p128
      %p410 = pneg %p152
      %p411 = pneg %p149
      %p412 = pneg %p173
      %p413 = pneg %p170
      %p414 = pneg %p194
      %p415 = pneg %p191
      %p416 = pneg %p215
      %p417 = pneg %p212
      %p418 = pneg %p236
      %p419 = pneg %p233
      %p420 = pneg %p257
      %p421 = pneg %p254
      %p422 = pneg %p278
      %p423 = pneg %p275
      %p424 = pneg %p299
      %p425 = pneg %p296
      %p426 = pneg %p325
      %p427 = pneg %p322
      %p428 = scmp.lt.s32.totalorder %s26, 1
      %s429 = scalar_select %p428, %s26, 1
      %s430 = smul.addr %s429, 3
      %s431 = smul.addr %s430, 8
      %s432 = scalar_lea.vmem %s13, %s431
      %p433 = scmp.lt.s32.totalorder %s26, 1
      %s434 = scalar_select %p433, %s26, 1
      %s435 = smul.addr %s434, 32
      %s436 = smul.addr %s435, 4
      %s437 = scalar_lea.vmem %s0, %s436
      %p438 = scmp.lt.s32.totalorder %s26, 1
      %s439 = scalar_select %p438, %s26, 1
      %s440 = smul.addr %s439, 3
      %s441 = smul.addr %s440, 8
      %s442 = scalar_lea.vmem %s13, %s441
      %vm444 = vcmask 257024
      %445 = vst.msk [vmem:[#allocation2] sm:$0xf] %vm444, 0
      %446 = vst.msk [vmem:[#allocation2 + $0x4] sm:$0xf] %vm444, 0
      %447 = vst.msk [vmem:[#allocation2 + $0x8] sm:$0xf] %vm444, 0
      %448 = vst.msk [vmem:[#allocation2 + $0xc] sm:$0xf] %vm444, 0
      %449 = vst.msk [vmem:[#allocation2 + $0x10] sm:$0xf] %vm444, 0
      %450 = vst.msk [vmem:[#allocation2 + $0x14] sm:$0xf] %vm444, 0
      %451 = vst.msk [vmem:[#allocation2 + $0x18] sm:$0xf] %vm444, 0
      %452 = vst.msk [vmem:[#allocation2 + $0x1c] sm:$0xf] %vm444, 0
      %453 = vst.msk [vmem:[#allocation2 + $0x20] sm:$0xf] %vm444, 0
      %454 = vst.msk [vmem:[#allocation2 + $0x24] sm:$0xf] %vm444, 0
      %455 = vst.msk [vmem:[#allocation2 + $0x28] sm:$0xf] %vm444, 0
      %456 = vst.msk [vmem:[#allocation2 + $0x2c] sm:$0xf] %vm444, 0
      %457 = vst.msk [vmem:[#allocation2 + $0x30] sm:$0xf] %vm444, 0
      %vm458 = vcmask 519168
      %459 = vst.msk [vmem:[#allocation3] sm:$0xf] %vm458, 0
      %460 = vst.msk [vmem:[#allocation3 + $0x4] sm:$0xf] %vm458, 0
      %461 = vst.msk [vmem:[#allocation3 + $0x8] sm:$0xf] %vm458, 0
      %462 = vst.msk [vmem:[#allocation3 + $0xc] sm:$0xf] %vm458, 0
      %463 = vst.msk [vmem:[#allocation3 + $0x10] sm:$0xf] %vm458, 0
      %v464 = vld [vmem:[%s437] sm:$0xf]
      %v465 = vld [vmem:[%s437 + $0x4] sm:$0xf]
      %v466 = vld [vmem:[%s437 + $0x8] sm:$0xf]
      %v467 = vld [vmem:[%s437 + $0xc] sm:$0xf]
      %v468 = vld [vmem:[%s437 + $0x10] sm:$0xf]
      %v469 = vld [vmem:[%s437 + $0x14] sm:$0xf]
      %v470 = vld [vmem:[%s437 + $0x18] sm:$0xf]
      %v471 = vld [vmem:[%s437 + $0x1c] sm:$0xf]
      %v472 = vld [vmem:[%s437 + $0x20] sm:$0xf]
      %v473 = vld [vmem:[%s437 + $0x24] sm:$0xf]
      %v474 = vld [vmem:[%s437 + $0x28] sm:$0xf]
      %v475 = vld [vmem:[%s437 + $0x2c] sm:$0xf]
      %v476 = vld [vmem:[%s437 + $0x30] sm:$0xf]
      %v477 = vld [vmem:[%s437 + $0x34] sm:$0xf]
      %v478 = vld [vmem:[%s437 + $0x38] sm:$0xf]
      %v479 = vld [vmem:[%s437 + $0x3c] sm:$0xf]
      %v480 = vld [vmem:[%s437 + $0x40] sm:$0xf]
      %v481 = vld [vmem:[%s437 + $0x44] sm:$0xf]
      %v482 = vld [vmem:[%s437 + $0x48] sm:$0xf]
      %v483 = vld [vmem:[%s437 + $0x4c] sm:$0xf]
      %v484 = vld [vmem:[%s437 + $0x50] sm:$0xf]
      %v485 = vld [vmem:[%s437 + $0x54] sm:$0xf]
      %v486 = vld [vmem:[%s437 + $0x58] sm:$0xf]
      %v487 = vld [vmem:[%s437 + $0x5c] sm:$0xf]
      %v488 = vld [vmem:[%s437 + $0x60] sm:$0xf]
      %v489 = vld [vmem:[%s437 + $0x64] sm:$0xf]
      %v490 = vld [vmem:[%s437 + $0x68] sm:$0xf]
      %v491 = vld [vmem:[%s437 + $0x6c] sm:$0xf]
      %v492 = vld [vmem:[%s437 + $0x70] sm:$0xf]
      %v493 = vld [vmem:[%s437 + $0x74] sm:$0xf]
      %v494 = vld [vmem:[%s437 + $0x78] sm:$0xf]
      %v495 = vld [vmem:[%s437 + $0x7c] sm:$0xf]
      %v496 = vld [vmem:[%s1] sm:$0xf]
      %v497 = vld [vmem:[%s1 + $0x4] sm:$0xf]
      %v498 = vld [vmem:[%s1 + $0x8] sm:$0xf]
      %v499 = vld [vmem:[%s1 + $0xc] sm:$0xf]
      %v500 = vld [vmem:[%s2] sm:$0x1]
      %v502 = vlaneseq
      %v503 = vshrl.u32 %v502, 7
      %v504 = vsub.s32 0, %v503
      %v505 = vrot.slane %v500, %v504
      %v539 = vunpack.c.l.b16 %v464
      %v540 = vunpack.c.l.b16 %v465
      %v541 = vunpack.c.l.b16 %v466
      %v542 = vunpack.c.l.b16 %v467
      %v543 = vunpack.c.l.b16 %v468
      %v544 = vunpack.c.l.b16 %v469
      %v545 = vunpack.c.l.b16 %v470
      %v546 = vunpack.c.l.b16 %v471
      %v547 = vunpack.c.l.b16 %v472
      %v548 = vunpack.c.l.b16 %v473
      %v549 = vunpack.c.l.b16 %v474
      %v550 = vunpack.c.l.b16 %v475
      %v551 = vunpack.c.l.b16 %v476
      %v552 = vunpack.c.l.b16 %v477
      %v553 = vunpack.c.l.b16 %v478
      %v554 = vunpack.c.l.b16 %v479
      %v555 = vunpack.c.l.b16 %v480
      %v556 = vunpack.c.l.b16 %v481
      %v557 = vunpack.c.l.b16 %v482
      %v558 = vunpack.c.l.b16 %v483
      %v559 = vunpack.c.l.b16 %v484
      %v560 = vunpack.c.l.b16 %v485
      %v561 = vunpack.c.l.b16 %v486
      %v562 = vunpack.c.l.b16 %v487
      %v563 = vunpack.c.l.b16 %v488
      %v564 = vunpack.c.l.b16 %v489
      %v565 = vunpack.c.l.b16 %v490
      %v566 = vunpack.c.l.b16 %v491
      %v567 = vunpack.c.l.b16 %v492
      %v568 = vunpack.c.l.b16 %v493
      %v569 = vunpack.c.l.b16 %v494
      %v570 = vunpack.c.l.b16 %v495
      %v571 = vpack.c.b16 %v540, %v539
      %v572 = vpack.c.b16 %v542, %v541
      %v573 = vpack.c.b16 %v544, %v543
      %v574 = vpack.c.b16 %v546, %v545
      %v575 = vpack.c.b16 %v548, %v547
      %v576 = vpack.c.b16 %v550, %v549
      %v577 = vpack.c.b16 %v552, %v551
      %v578 = vpack.c.b16 %v554, %v553
      %v579 = vpack.c.b16 %v556, %v555
      %v580 = vpack.c.b16 %v558, %v557
      %v581 = vpack.c.b16 %v560, %v559
      %v582 = vpack.c.b16 %v562, %v561
      %v583 = vpack.c.b16 %v564, %v563
      %v584 = vpack.c.b16 %v566, %v565
      %v585 = vpack.c.b16 %v568, %v567
      %v586 = vpack.c.b16 %v570, %v569
      %v591 = vunpack.c.l.b16 %v496
      %v592 = vunpack.c.l.b16 %v497
      %v593 = vunpack.c.l.b16 %v498
      %v594 = vunpack.c.l.b16 %v499
      %v595 = vpack.c.b16 %v592, %v591
      %v596 = vpack.c.b16 %v594, %v593
      %vm599 = vcmask 261120
      %v601 = vsel %vm599, %v571, 0
      %v604 = vsel %vm599, %v572, 0
      %v607 = vsel %vm599, %v573, 0
      %v610 = vsel %vm599, %v574, 0
      %v613 = vsel %vm599, %v575, 0
      %v616 = vsel %vm599, %v576, 0
      %v619 = vsel %vm599, %v577, 0
      %v622 = vsel %vm599, %v578, 0
      %v625 = vsel %vm599, %v579, 0
      %v628 = vsel %vm599, %v580, 0
      %v631 = vsel %vm599, %v581, 0
      %v634 = vsel %vm599, %v582, 0
      %v637 = vsel %vm599, %v583, 0
      %v640 = vsel %vm599, %v584, 0
      %v643 = vsel %vm599, %v585, 0
      %v646 = vsel %vm599, %v586, 0
      %648 = vmatprep.subr.bf16.mxu0 0
      %649 = vmatpush1.bf16.msra.mxu0 0
      %650 = vmatprep.subr.bf16.mxu0 0
      %651 = vmatpush1.bf16.msra.mxu0 0
      %652 = vmatprep.subr.bf16.mxu0 0
      %653 = vmatpush1.bf16.msra.mxu0 0
      %654 = vmatprep.subr.bf16.mxu0 0
      %655 = vmatpush1.bf16.msra.mxu0 0
      %656 = vmatprep.subr.bf16.mxu0 0
      %657 = vmatpush1.bf16.msra.mxu0 0
      %658 = vmatprep.subr.bf16.mxu0 0
      %659 = vmatpush1.bf16.msra.mxu0 0
      %660 = vmatprep.subr.bf16.mxu0 0
      %661 = vmatpush1.bf16.msra.mxu0 %v596
      %662 = vmatprep.subr.bf16.mxu0 0
      %663 = vmatpush1.bf16.msra.mxu0 %v595
      %664 = vmatprep.subr.bf16.mxu0 0
      %665 = vmatpush2.bf16.msra.mxu0 0
      %666 = vmatprep.subr.bf16.mxu0 0
      %667 = vmatpush2.bf16.msra.mxu0 0
      %668 = vmatprep.subr.bf16.mxu0 0
      %669 = vmatpush2.bf16.msra.mxu0 0
      %670 = vmatprep.subr.bf16.mxu0 0
      %671 = vmatpush2.bf16.msra.mxu0 0
      %672 = vmatprep.subr.bf16.mxu0 0
      %673 = vmatpush2.bf16.msra.mxu0 0
      %674 = vmatprep.subr.bf16.mxu0 0
      %675 = vmatpush2.bf16.msra.mxu0 0
      %676 = vmatprep.subr.bf16.mxu0 0
      %677 = vmatpush2.bf16.msra.mxu0 0
      %678 = vmatprep.subr.bf16.mxu0 0
      %679 = vmatpush2.bf16.msra.mxu0 0
      %680 = vmatprep.mubr.bf16.mxu0 0
      %681 = vmatmul.mubr.bf16.gmra.mxu0 %v601
      %v682 = vpop.f32.mrf.mxu0
      %v683 = vadd.f32 %v505, %v682
      %v684 = vpop.f32.mrf.mxu0
      %v685 = vpop.f32.mrf.mxu0
      %v686 = vadd.f32 %v505, %v685
      %v687 = vpop.f32.mrf.mxu0
      %688 = vmatprep.mubr.bf16.mxu0 0
      %689 = vmatmul.mubr.bf16.gmra.mxu0 %v604
      %v690 = vpop.f32.mrf.mxu0
      %v691 = vadd.f32 %v505, %v690
      %v692 = vpop.f32.mrf.mxu0
      %v693 = vpop.f32.mrf.mxu0
      %v694 = vadd.f32 %v505, %v693
      %v695 = vpop.f32.mrf.mxu0
      %696 = vmatprep.mubr.bf16.mxu0 0
      %697 = vmatmul.mubr.bf16.gmra.mxu0 %v607
      %v698 = vpop.f32.mrf.mxu0
      %v699 = vadd.f32 %v505, %v698
      %v700 = vpop.f32.mrf.mxu0
      %v701 = vpop.f32.mrf.mxu0
      %v702 = vadd.f32 %v505, %v701
      %v703 = vpop.f32.mrf.mxu0
      %704 = vmatprep.mubr.bf16.mxu0 0
      %705 = vmatmul.mubr.bf16.gmra.mxu0 %v610
      %v706 = vpop.f32.mrf.mxu0
      %v707 = vadd.f32 %v505, %v706
      %v708 = vpop.f32.mrf.mxu0
      %v709 = vpop.f32.mrf.mxu0
      %v710 = vadd.f32 %v505, %v709
      %v711 = vpop.f32.mrf.mxu0
      %712 = vmatprep.mubr.bf16.mxu0 0
      %713 = vmatmul.mubr.bf16.gmra.mxu0 %v613
      %v714 = vpop.f32.mrf.mxu0
      %v715 = vadd.f32 %v505, %v714
      %v716 = vpop.f32.mrf.mxu0
      %v717 = vpop.f32.mrf.mxu0
      %v718 = vadd.f32 %v505, %v717
      %v719 = vpop.f32.mrf.mxu0
      %720 = vmatprep.mubr.bf16.mxu0 0
      %721 = vmatmul.mubr.bf16.gmra.mxu0 %v616
      %v722 = vpop.f32.mrf.mxu0
      %v723 = vadd.f32 %v505, %v722
      %v724 = vpop.f32.mrf.mxu0
      %v725 = vpop.f32.mrf.mxu0
      %v726 = vadd.f32 %v505, %v725
      %v727 = vpop.f32.mrf.mxu0
      %728 = vmatprep.mubr.bf16.mxu0 0
      %729 = vmatmul.mubr.bf16.gmra.mxu0 %v619
      %v730 = vpop.f32.mrf.mxu0
      %v731 = vadd.f32 %v505, %v730
      %v732 = vpop.f32.mrf.mxu0
      %v733 = vpop.f32.mrf.mxu0
      %v734 = vadd.f32 %v505, %v733
      %v735 = vpop.f32.mrf.mxu0
      %736 = vmatprep.mubr.bf16.mxu0 0
      %737 = vmatmul.mubr.bf16.gmra.mxu0 %v622
      %v738 = vpop.f32.mrf.mxu0
      %v739 = vadd.f32 %v505, %v738
      %v740 = vpop.f32.mrf.mxu0
      %v741 = vpop.f32.mrf.mxu0
      %v742 = vadd.f32 %v505, %v741
      %v743 = vpop.f32.mrf.mxu0
      %744 = vmatprep.mubr.bf16.mxu0 0
      %745 = vmatmul.mubr.bf16.gmra.mxu0 %v625
      %v746 = vpop.f32.mrf.mxu0
      %v747 = vadd.f32 %v505, %v746
      %v748 = vpop.f32.mrf.mxu0
      %v749 = vpop.f32.mrf.mxu0
      %v750 = vadd.f32 %v505, %v749
      %v751 = vpop.f32.mrf.mxu0
      %752 = vmatprep.mubr.bf16.mxu0 0
      %753 = vmatmul.mubr.bf16.gmra.mxu0 %v628
      %v754 = vpop.f32.mrf.mxu0
      %v755 = vadd.f32 %v505, %v754
      %v756 = vpop.f32.mrf.mxu0
      %v757 = vpop.f32.mrf.mxu0
      %v758 = vadd.f32 %v505, %v757
      %v759 = vpop.f32.mrf.mxu0
      %760 = vmatprep.mubr.bf16.mxu0 0
      %761 = vmatmul.mubr.bf16.gmra.mxu0 %v631
      %v762 = vpop.f32.mrf.mxu0
      %v763 = vadd.f32 %v505, %v762
      %v764 = vpop.f32.mrf.mxu0
      %v765 = vpop.f32.mrf.mxu0
      %v766 = vadd.f32 %v505, %v765
      %v767 = vpop.f32.mrf.mxu0
      %768 = vmatprep.mubr.bf16.mxu0 0
      %769 = vmatmul.mubr.bf16.gmra.mxu0 %v634
      %v770 = vpop.f32.mrf.mxu0
      %v771 = vadd.f32 %v505, %v770
      %v772 = vpop.f32.mrf.mxu0
      %v773 = vpop.f32.mrf.mxu0
      %v774 = vadd.f32 %v505, %v773
      %v775 = vpop.f32.mrf.mxu0
      %776 = vmatprep.mubr.bf16.mxu0 0
      %777 = vmatmul.mubr.bf16.gmra.mxu0 %v637
      %v778 = vpop.f32.mrf.mxu0
      %v779 = vadd.f32 %v505, %v778
      %v780 = vpop.f32.mrf.mxu0
      %v781 = vpop.f32.mrf.mxu0
      %v782 = vadd.f32 %v505, %v781
      %v783 = vpop.f32.mrf.mxu0
      %784 = vmatprep.mubr.bf16.mxu0 0
      %785 = vmatmul.mubr.bf16.gmra.mxu0 %v640
      %v786 = vpop.f32.mrf.mxu0
      %v787 = vadd.f32 %v505, %v786
      %v788 = vpop.f32.mrf.mxu0
      %v789 = vpop.f32.mrf.mxu0
      %v790 = vadd.f32 %v505, %v789
      %v791 = vpop.f32.mrf.mxu0
      %792 = vmatprep.mubr.bf16.mxu0 0
      %793 = vmatmul.mubr.bf16.gmra.mxu0 %v643
      %v794 = vpop.f32.mrf.mxu0
      %v795 = vadd.f32 %v505, %v794
      %v796 = vpop.f32.mrf.mxu0
      %v797 = vpop.f32.mrf.mxu0
      %v798 = vadd.f32 %v505, %v797
      %v799 = vpop.f32.mrf.mxu0
      %800 = vmatprep.mubr.bf16.mxu0 0
      %801 = vmatmul.mubr.bf16.gmra.mxu0 %v646
      %v802 = vpop.f32.mrf.mxu0
      %v803 = vadd.f32 %v505, %v802
      %v804 = vpop.f32.mrf.mxu0
      %v805 = vpop.f32.mrf.mxu0
      %v806 = vadd.f32 %v505, %v805
      %v807 = vpop.f32.mrf.mxu0
      %808 = vdwg.mxu0
      %v809 = vmax.f32 %v683, 0.0
      %v810 = vmax.f32 %v686, 0.0
      %v811 = vmax.f32 %v691, 0.0
      %v812 = vmax.f32 %v694, 0.0
      %v813 = vmax.f32 %v699, 0.0
      %v814 = vmax.f32 %v702, 0.0
      %v815 = vmax.f32 %v707, 0.0
      %v816 = vmax.f32 %v710, 0.0
      %v817 = vmax.f32 %v715, 0.0
      %v818 = vmax.f32 %v718, 0.0
      %v819 = vmax.f32 %v723, 0.0
      %v820 = vmax.f32 %v726, 0.0
      %v821 = vmax.f32 %v731, 0.0
      %v822 = vmax.f32 %v734, 0.0
      %v823 = vmax.f32 %v739, 0.0
      %v824 = vmax.f32 %v742, 0.0
      %v825 = vmax.f32 %v747, 0.0
      %v826 = vmax.f32 %v750, 0.0
      %v827 = vmax.f32 %v755, 0.0
      %v828 = vmax.f32 %v758, 0.0
      %v829 = vmax.f32 %v763, 0.0
      %v830 = vmax.f32 %v766, 0.0
      %v831 = vmax.f32 %v771, 0.0
      %v832 = vmax.f32 %v774, 0.0
      %v833 = vmax.f32 %v779, 0.0
      %v834 = vmax.f32 %v782, 0.0
      %v835 = vmax.f32 %v787, 0.0
      %v836 = vmax.f32 %v790, 0.0
      %v837 = vmax.f32 %v795, 0.0
      %v838 = vmax.f32 %v798, 0.0
      %v839 = vmax.f32 %v803, 0.0
      %v840 = vmax.f32 %v806, 0.0
      %v841 = vmax.f32 %v809, %v817
      %v842 = vmax.f32 %v810, %v818
      %v843 = vmax.f32 %v811, %v819
      %v844 = vmax.f32 %v812, %v820
      %v845 = vmax.f32 %v813, %v821
      %v846 = vmax.f32 %v814, %v822
      %v847 = vmax.f32 %v815, %v823
      %v848 = vmax.f32 %v816, %v824
      %v849 = vmax.f32 %v825, %v833
      %v850 = vmax.f32 %v826, %v834
      %v851 = vmax.f32 %v827, %v835
      %v852 = vmax.f32 %v828, %v836
      %v853 = vmax.f32 %v829, %v837
      %v854 = vmax.f32 %v830, %v838
      %v855 = vmax.f32 %v831, %v839
      %v856 = vmax.f32 %v832, %v840
      %v857 = vmax.f32 %v841, %v849
      %v858 = vmax.f32 %v842, %v850
      %v859 = vmax.f32 %v843, %v851
      %v860 = vmax.f32 %v844, %v852
      %v861 = vmax.f32 %v845, %v853
      %v862 = vmax.f32 %v846, %v854
      %v863 = vmax.f32 %v847, %v855
      %v864 = vmax.f32 %v848, %v856
      %v865 = vpack.c.bf16 %v858, %v857
      %v866 = vpack.c.bf16 %v860, %v859
      %v867 = vpack.c.bf16 %v862, %v861
      %v868 = vpack.c.bf16 %v864, %v863
      %v873 = vunpack.c.l.b16 %v865
      %v874 = vunpack.c.h.b16 %v865
      %v875 = vunpack.c.l.b16 %v866
      %v876 = vunpack.c.h.b16 %v866
      %v877 = vunpack.c.l.b16 %v867
      %v878 = vunpack.c.h.b16 %v867
      %v879 = vunpack.c.l.b16 %v868
      %v880 = vunpack.c.h.b16 %v868
      %v881 = vpack.c.b16 %v873, %v873
      %v882 = vpack.c.b16 %v874, %v874
      %v883 = vpack.c.b16 %v875, %v875
      %v884 = vpack.c.b16 %v876, %v876
      %v885 = vpack.c.b16 %v877, %v877
      %v886 = vpack.c.b16 %v878, %v878
      %v887 = vpack.c.b16 %v879, %v879
      %v888 = vpack.c.b16 %v880, %v880
      %897 = vst.msk [vmem:[#allocation2 + $0x8] sm:$0xf] %vm444, %v881
      %898 = vst.msk [vmem:[#allocation2 + $0xc] sm:$0xf] %vm444, %v882
      %899 = vst.msk [vmem:[#allocation2 + $0x10] sm:$0xf] %vm444, %v883
      %900 = vst.msk [vmem:[#allocation2 + $0x14] sm:$0xf] %vm444, %v884
      %901 = vst.msk [vmem:[#allocation2 + $0x18] sm:$0xf] %vm444, %v885
      %902 = vst.msk [vmem:[#allocation2 + $0x1c] sm:$0xf] %vm444, %v886
      %903 = vst.msk [vmem:[#allocation2 + $0x20] sm:$0xf] %vm444, %v887
      %904 = vst.msk [vmem:[#allocation2 + $0x24] sm:$0xf] %vm444, %v888
      %v905 = vlaneseq
      %v906 = vshrl.u32 %v905, 7
      %v907 = vadd.s32 %v906, 8
      %v908 = vadd.s32 %v906, 16
      %v909 = vadd.s32 %v906, 24
      %v910 = vadd.s32 %v906, 32
      %v911 = vadd.s32 %v906, 40
      %v912 = vadd.s32 %v906, 48
      %v913 = vadd.s32 %v906, 56
      %v914 = vadd.s32 %v906, 64
      %vm915 = vcmp.lt.s32.totalorder %v906, 0
      %v916 = vsub.s32 0, %v906
      %v917 = vsel %vm915, %v916, %v906
      %v918 = vshrl.u32 %v917, 3
      %v919 = vand.u32 %v917, 7
      %v920 = vsub.s32 0, %v919
      %v921 = vsel %vm915, %v920, %v919
      %vm922 = vcmp.lt.s32.totalorder %v907, 0
      %v923 = vsub.s32 0, %v907
      %v924 = vsel %vm922, %v923, %v907
      %v925 = vshrl.u32 %v924, 3
      %v926 = vand.u32 %v924, 7
      %v927 = vsub.s32 0, %v926
      %v928 = vsel %vm922, %v927, %v926
      %vm929 = vcmp.lt.s32.totalorder %v908, 0
      %v930 = vsub.s32 0, %v908
      %v931 = vsel %vm929, %v930, %v908
      %v932 = vshrl.u32 %v931, 3
      %v933 = vand.u32 %v931, 7
      %v934 = vsub.s32 0, %v933
      %v935 = vsel %vm929, %v934, %v933
      %vm936 = vcmp.lt.s32.totalorder %v909, 0
      %v937 = vsub.s32 0, %v909
      %v938 = vsel %vm936, %v937, %v909
      %v939 = vshrl.u32 %v938, 3
      %v940 = vand.u32 %v938, 7
      %v941 = vsub.s32 0, %v940
      %v942 = vsel %vm936, %v941, %v940
      %vm943 = vcmp.lt.s32.totalorder %v910, 0
      %v944 = vsub.s32 0, %v910
      %v945 = vsel %vm943, %v944, %v910
      %v946 = vshrl.u32 %v945, 3
      %v947 = vand.u32 %v945, 7
      %v948 = vsub.s32 0, %v947
      %v949 = vsel %vm943, %v948, %v947
      %vm950 = vcmp.lt.s32.totalorder %v911, 0
      %v951 = vsub.s32 0, %v911
      %v952 = vsel %vm950, %v951, %v911
      %v953 = vshrl.u32 %v952, 3
      %v954 = vand.u32 %v952, 7
      %v955 = vsub.s32 0, %v954
      %v956 = vsel %vm950, %v955, %v954
      %vm957 = vcmp.lt.s32.totalorder %v912, 0
      %v958 = vsub.s32 0, %v912
      %v959 = vsel %vm957, %v958, %v912
      %v960 = vshrl.u32 %v959, 3
      %v961 = vand.u32 %v959, 7
      %v962 = vsub.s32 0, %v961
      %v963 = vsel %vm957, %v962, %v961
      %vm964 = vcmp.lt.s32.totalorder %v913, 0
      %v965 = vsub.s32 0, %v913
      %v966 = vsel %vm964, %v965, %v913
      %v967 = vshrl.u32 %v966, 3
      %v968 = vand.u32 %v966, 7
      %v969 = vsub.s32 0, %v968
      %v970 = vsel %vm964, %v969, %v968
      %vm971 = vcmp.lt.s32.totalorder %v914, 0
      %v972 = vsub.s32 0, %v914
      %v973 = vsel %vm971, %v972, %v914
      %v974 = vshrl.u32 %v973, 3
      %v975 = vand.u32 %v973, 7
      %v976 = vsub.s32 0, %v975
      %v977 = vsel %vm971, %v976, %v975
      %vm978 = vcmp.ne.s32.totalorder %v921, 0
      %vm979 = vcmp.ne.s32.totalorder %v928, 0
      %vm980 = vcmp.ne.s32.totalorder %v935, 0
      %vm981 = vcmp.ne.s32.totalorder %v942, 0
      %vm982 = vcmp.ne.s32.totalorder %v949, 0
      %vm983 = vcmp.ne.s32.totalorder %v956, 0
      %vm984 = vcmp.ne.s32.totalorder %v963, 0
      %vm985 = vcmp.ne.s32.totalorder %v970, 0
      %vm986 = vcmp.ne.s32.totalorder %v977, 0
      %vm987 = vcmp.lt.s32.totalorder %v921, 0
      %vm988 = vcmp.lt.s32.totalorder %v928, 0
      %vm989 = vcmp.lt.s32.totalorder %v935, 0
      %vm990 = vcmp.lt.s32.totalorder %v942, 0
      %vm991 = vcmp.lt.s32.totalorder %v949, 0
      %vm992 = vcmp.lt.s32.totalorder %v956, 0
      %vm993 = vcmp.lt.s32.totalorder %v963, 0
      %vm994 = vcmp.lt.s32.totalorder %v970, 0
      %vm995 = vcmp.lt.s32.totalorder %v977, 0
      %vm996 = vmand %vm987, %vm978
      %vm997 = vmand %vm988, %vm979
      %vm998 = vmand %vm989, %vm980
      %vm999 = vmand %vm990, %vm981
      %vm1000 = vmand %vm991, %vm982
      %vm1001 = vmand %vm992, %vm983
      %vm1002 = vmand %vm993, %vm984
      %vm1003 = vmand %vm994, %vm985
      %vm1004 = vmand %vm995, %vm986
      %v1005 = vadd.s32 %v921, 8
      %v1006 = vadd.s32 %v928, 8
      %v1007 = vadd.s32 %v935, 8
      %v1008 = vadd.s32 %v942, 8
      %v1009 = vadd.s32 %v949, 8
      %v1010 = vadd.s32 %v956, 8
      %v1011 = vadd.s32 %v963, 8
      %v1012 = vadd.s32 %v970, 8
      %v1013 = vadd.s32 %v977, 8
      %v1014 = vsel %vm996, %v1005, %v921
      %v1015 = vsel %vm997, %v1006, %v928
      %v1016 = vsel %vm998, %v1007, %v935
      %v1017 = vsel %vm999, %v1008, %v942
      %v1018 = vsel %vm1000, %v1009, %v949
      %v1019 = vsel %vm1001, %v1010, %v956
      %v1020 = vsel %vm1002, %v1011, %v963
      %v1021 = vsel %vm1003, %v1012, %v970
      %v1022 = vsel %vm1004, %v1013, %v977
      %v1023 = vld [vmem:[#allocation2] sm:$0x8]
      %v1024 = vld [vmem:[#allocation2 + $0x4] sm:$0xf]
      %v1025 = vld [vmem:[#allocation2 + $0x8] sm:$0xf]
      %v1026 = vld [vmem:[#allocation2 + $0xc] sm:$0xf]
      %v1027 = vld [vmem:[#allocation2 + $0x10] sm:$0xf]
      %v1028 = vld [vmem:[#allocation2 + $0x14] sm:$0xf]
      %v1029 = vld [vmem:[#allocation2 + $0x18] sm:$0xf]
      %v1030 = vld [vmem:[#allocation2 + $0x1c] sm:$0xf]
      %v1031 = vld [vmem:[#allocation2 + $0x20] sm:$0xf]
      %v1032 = vld [vmem:[#allocation2 + $0x24] sm:$0xf]
      %v1033 = vld [vmem:[%s3] sm:$0xf]
      %v1034 = vld [vmem:[%s3 + $0x4] sm:$0xf]
      %v1035 = vld [vmem:[%s3 + $0x8] sm:$0xf]
      %v1036 = vld [vmem:[%s3 + $0xc] sm:$0xf]
      %v1037 = vld [vmem:[#allocation2 + $0x4] sm:$0x8]
      %v1038 = vld [vmem:[#allocation2 + $0x28] sm:$0xf]
      %s1039 = scalar_lea.vmem %s3, 48
      %v1040 = vld [vmem:[%s1039] sm:$0xf]
      %v1041 = vld [vmem:[%s1039 + $0x4] sm:$0xf]
      %v1042 = vld [vmem:[%s1039 + $0x8] sm:$0xf]
      %v1043 = vld [vmem:[%s1039 + $0xc] sm:$0xf]
      %v1054 = vunpack.c.l.b16 %v1037
      %v1055 = vunpack.c.l.b16 %v1025
      %v1056 = vunpack.c.l.b16 %v1026
      %v1057 = vunpack.c.l.b16 %v1027
      %v1058 = vunpack.c.l.b16 %v1028
      %v1059 = vunpack.c.l.b16 %v1029
      %v1060 = vunpack.c.l.b16 %v1030
      %v1061 = vunpack.c.l.b16 %v1031
      %v1062 = vunpack.c.l.b16 %v1032
      %v1063 = vunpack.c.l.b16 %v1038
      %v1064 = vpack.c.b16 %v1055, %v1054
      %v1065 = vpack.c.b16 %v1057, %v1056
      %v1066 = vpack.c.b16 %v1059, %v1058
      %v1067 = vpack.c.b16 %v1061, %v1060
      %v1068 = vpack.c.b16 %v1063, %v1062
      %vm1069 = vsmask.f32 4352
      %v1071 = vshrl.u32 %v1064, 16
      %v1073 = vrot.slane %v1071, 3
      %v1074 = vshll.u32 %v1064, 16
      %v1076 = vrot.slane %v1074, 4
      %v1077 = vor.u32 %v1073, %v1076
      %v1079 = vshrl.u32 %v1065, 16
      %v1081 = vrot.slane %v1079, 3
      %v1082 = vshll.u32 %v1065, 16
      %v1084 = vrot.slane %v1082, 4
      %v1085 = vor.u32 %v1081, %v1084
      %v1086 = vsel %vm1069, %v1077, %v1085
      %v1088 = vshrl.u32 %v1066, 16
      %v1090 = vrot.slane %v1088, 3
      %v1091 = vshll.u32 %v1066, 16
      %v1093 = vrot.slane %v1091, 4
      %v1094 = vor.u32 %v1090, %v1093
      %v1095 = vsel %vm1069, %v1085, %v1094
      %v1097 = vshrl.u32 %v1067, 16
      %v1099 = vrot.slane %v1097, 3
      %v1100 = vshll.u32 %v1067, 16
      %v1102 = vrot.slane %v1100, 4
      %v1103 = vor.u32 %v1099, %v1102
      %v1104 = vsel %vm1069, %v1094, %v1103
      %v1106 = vshrl.u32 %v1068, 16
      %v1108 = vrot.slane %v1106, 3
      %v1109 = vshll.u32 %v1068, 16
      %v1111 = vrot.slane %v1109, 4
      %v1112 = vor.u32 %v1108, %v1111
      %v1113 = vsel %vm1069, %v1103, %v1112
      %v1118 = vunpack.c.l.b16 %v1040
      %v1119 = vunpack.c.l.b16 %v1041
      %v1120 = vunpack.c.l.b16 %v1042
      %v1121 = vunpack.c.l.b16 %v1043
      %v1122 = vpack.c.b16 %v1119, %v1118
      %v1123 = vpack.c.b16 %v1121, %v1120
      %v1127 = vsel %vm599, %v1086, 0
      %v1130 = vsel %vm599, %v1095, 0
      %v1133 = vsel %vm599, %v1104, 0
      %v1136 = vsel %vm599, %v1113, 0
      %v1139 = vsel %vm599, %v1112, 0
      %1141 = vmatprep.subr.bf16.mxu0 0
      %1142 = vmatpush1.bf16.msra.mxu0 0
      %1143 = vmatprep.subr.bf16.mxu0 0
      %1144 = vmatpush1.bf16.msra.mxu0 0
      %1145 = vmatprep.subr.bf16.mxu0 0
      %1146 = vmatpush1.bf16.msra.mxu0 0
      %1147 = vmatprep.subr.bf16.mxu0 0
      %1148 = vmatpush1.bf16.msra.mxu0 0
      %1149 = vmatprep.subr.bf16.mxu0 0
      %1150 = vmatpush1.bf16.msra.mxu0 0
      %1151 = vmatprep.subr.bf16.mxu0 0
      %1152 = vmatpush1.bf16.msra.mxu0 0
      %1153 = vmatprep.subr.bf16.mxu0 0
      %1154 = vmatpush1.bf16.msra.mxu0 %v1123
      %1155 = vmatprep.subr.bf16.mxu0 0
      %1156 = vmatpush1.bf16.msra.mxu0 %v1122
      %1157 = vmatprep.subr.bf16.mxu0 0
      %1158 = vmatpush2.bf16.msra.mxu0 0
      %1159 = vmatprep.subr.bf16.mxu0 0
      %1160 = vmatpush2.bf16.msra.mxu0 0
      %1161 = vmatprep.subr.bf16.mxu0 0
      %1162 = vmatpush2.bf16.msra.mxu0 0
      %1163 = vmatprep.subr.bf16.mxu0 0
      %1164 = vmatpush2.bf16.msra.mxu0 0
      %1165 = vmatprep.subr.bf16.mxu0 0
      %1166 = vmatpush2.bf16.msra.mxu0 0
      %1167 = vmatprep.subr.bf16.mxu0 0
      %1168 = vmatpush2.bf16.msra.mxu0 0
      %1169 = vmatprep.subr.bf16.mxu0 0
      %1170 = vmatpush2.bf16.msra.mxu0 0
      %1171 = vmatprep.subr.bf16.mxu0 0
      %1172 = vmatpush2.bf16.msra.mxu0 0
      %1173 = vmatprep.mubr.bf16.mxu0 0
      %1174 = vmatmul.mubr.bf16.gmra.mxu0 %v1127
      %v1175 = vpop.f32.mrf.mxu0
      %v1176 = vadd.f32 0.0, %v1175
      %v1177 = vpop.f32.mrf.mxu0
      %v1178 = vpop.f32.mrf.mxu0
      %v1179 = vadd.f32 0.0, %v1178
      %v1180 = vpop.f32.mrf.mxu0
      %1181 = vmatprep.mubr.bf16.mxu0 0
      %1182 = vmatmul.mubr.bf16.gmra.mxu0 %v1130
      %v1183 = vpop.f32.mrf.mxu0
      %v1184 = vadd.f32 0.0, %v1183
      %v1185 = vpop.f32.mrf.mxu0
      %v1186 = vpop.f32.mrf.mxu0
      %v1187 = vadd.f32 0.0, %v1186
      %v1188 = vpop.f32.mrf.mxu0
      %1189 = vmatprep.mubr.bf16.mxu0 0
      %1190 = vmatmul.mubr.bf16.gmra.mxu0 %v1133
      %v1191 = vpop.f32.mrf.mxu0
      %v1192 = vadd.f32 0.0, %v1191
      %v1193 = vpop.f32.mrf.mxu0
      %v1194 = vpop.f32.mrf.mxu0
      %v1195 = vadd.f32 0.0, %v1194
      %v1196 = vpop.f32.mrf.mxu0
      %1197 = vmatprep.mubr.bf16.mxu0 0
      %1198 = vmatmul.mubr.bf16.gmra.mxu0 %v1136
      %v1199 = vpop.f32.mrf.mxu0
      %v1200 = vadd.f32 0.0, %v1199
      %v1201 = vpop.f32.mrf.mxu0
      %v1202 = vpop.f32.mrf.mxu0
      %v1203 = vadd.f32 0.0, %v1202
      %v1204 = vpop.f32.mrf.mxu0
      %1205 = vmatprep.mubr.bf16.mxu0 0
      %1206 = vmatmul.mubr.bf16.gmra.mxu0 %v1139
      %v1207 = vpop.f32.mrf.mxu0
      %v1208 = vadd.f32 0.0, %v1207
      %v1209 = vpop.f32.mrf.mxu0
      %v1210 = vpop.f32.mrf.mxu0
      %v1211 = vpop.f32.mrf.mxu0
      %1212 = vdwg.mxu0
      %v1215 = vunpack.c.l.b16 %v1023
      %v1216 = vunpack.c.l.b16 %v1024
      %v1217 = vpack.c.b16 %v1216, %v1215
      %v1218 = vpack.c.b16 %v1056, %v1055
      %v1219 = vpack.c.b16 %v1058, %v1057
      %v1220 = vpack.c.b16 %v1060, %v1059
      %v1221 = vpack.c.b16 %v1062, %v1061
      %v1223 = vshrl.u32 %v1217, 16
      %v1225 = vrot.slane %v1223, 3
      %v1226 = vshll.u32 %v1217, 16
      %v1228 = vrot.slane %v1226, 4
      %v1229 = vor.u32 %v1225, %v1228
      %v1231 = vshrl.u32 %v1218, 16
      %v1233 = vrot.slane %v1231, 3
      %v1234 = vshll.u32 %v1218, 16
      %v1236 = vrot.slane %v1234, 4
      %v1237 = vor.u32 %v1233, %v1236
      %v1238 = vsel %vm1069, %v1229, %v1237
      %v1240 = vshrl.u32 %v1219, 16
      %v1242 = vrot.slane %v1240, 3
      %v1243 = vshll.u32 %v1219, 16
      %v1245 = vrot.slane %v1243, 4
      %v1246 = vor.u32 %v1242, %v1245
      %v1247 = vsel %vm1069, %v1237, %v1246
      %v1249 = vshrl.u32 %v1220, 16
      %v1251 = vrot.slane %v1249, 3
      %v1252 = vshll.u32 %v1220, 16
      %v1254 = vrot.slane %v1252, 4
      %v1255 = vor.u32 %v1251, %v1254
      %v1256 = vsel %vm1069, %v1246, %v1255
      %v1258 = vshrl.u32 %v1221, 16
      %v1260 = vrot.slane %v1258, 3
      %v1261 = vshll.u32 %v1221, 16
      %v1263 = vrot.slane %v1261, 4
      %v1264 = vor.u32 %v1260, %v1263
      %v1265 = vsel %vm1069, %v1255, %v1264
      %v1270 = vunpack.c.l.b16 %v1033
      %v1271 = vunpack.c.l.b16 %v1034
      %v1272 = vunpack.c.l.b16 %v1035
      %v1273 = vunpack.c.l.b16 %v1036
      %v1274 = vpack.c.b16 %v1271, %v1270
      %v1275 = vpack.c.b16 %v1273, %v1272
      %v1279 = vsel %vm599, %v1238, 0
      %v1282 = vsel %vm599, %v1247, 0
      %v1285 = vsel %vm599, %v1256, 0
      %v1288 = vsel %vm599, %v1265, 0
      %v1291 = vsel %vm599, %v1264, 0
      %1293 = vmatprep.subr.bf16.mxu0 0
      %1294 = vmatpush1.bf16.msra.mxu0 0
      %1295 = vmatprep.subr.bf16.mxu0 0
      %1296 = vmatpush1.bf16.msra.mxu0 0
      %1297 = vmatprep.subr.bf16.mxu0 0
      %1298 = vmatpush1.bf16.msra.mxu0 0
      %1299 = vmatprep.subr.bf16.mxu0 0
      %1300 = vmatpush1.bf16.msra.mxu0 0
      %1301 = vmatprep.subr.bf16.mxu0 0
      %1302 = vmatpush1.bf16.msra.mxu0 0
      %1303 = vmatprep.subr.bf16.mxu0 0
      %1304 = vmatpush1.bf16.msra.mxu0 0
      %1305 = vmatprep.subr.bf16.mxu0 0
      %1306 = vmatpush1.bf16.msra.mxu0 %v1275
      %1307 = vmatprep.subr.bf16.mxu0 0
      %1308 = vmatpush1.bf16.msra.mxu0 %v1274
      %1309 = vmatprep.subr.bf16.mxu0 0
      %1310 = vmatpush2.bf16.msra.mxu0 0
      %1311 = vmatprep.subr.bf16.mxu0 0
      %1312 = vmatpush2.bf16.msra.mxu0 0
      %1313 = vmatprep.subr.bf16.mxu0 0
      %1314 = vmatpush2.bf16.msra.mxu0 0
      %1315 = vmatprep.subr.bf16.mxu0 0
      %1316 = vmatpush2.bf16.msra.mxu0 0
      %1317 = vmatprep.subr.bf16.mxu0 0
      %1318 = vmatpush2.bf16.msra.mxu0 0
      %1319 = vmatprep.subr.bf16.mxu0 0
      %1320 = vmatpush2.bf16.msra.mxu0 0
      %1321 = vmatprep.subr.bf16.mxu0 0
      %1322 = vmatpush2.bf16.msra.mxu0 0
      %1323 = vmatprep.subr.bf16.mxu0 0
      %1324 = vmatpush2.bf16.msra.mxu0 0
      %1325 = vmatprep.mubr.bf16.mxu0 0
      %1326 = vmatmul.mubr.bf16.gmra.mxu0 %v1279
      %v1327 = vpop.f32.mrf.mxu0
      %v1328 = vadd.f32 %v1176, %v1327
      %v1329 = vpop.f32.mrf.mxu0
      %v1330 = vpop.f32.mrf.mxu0
      %v1331 = vadd.f32 %v1179, %v1330
      %v1332 = vpop.f32.mrf.mxu0
      %1333 = vmatprep.mubr.bf16.mxu0 0
      %1334 = vmatmul.mubr.bf16.gmra.mxu0 %v1282
      %v1335 = vpop.f32.mrf.mxu0
      %v1336 = vadd.f32 %v1184, %v1335
      %v1337 = vpop.f32.mrf.mxu0
      %v1338 = vpop.f32.mrf.mxu0
      %v1339 = vadd.f32 %v1187, %v1338
      %v1340 = vpop.f32.mrf.mxu0
      %1341 = vmatprep.mubr.bf16.mxu0 0
      %1342 = vmatmul.mubr.bf16.gmra.mxu0 %v1285
      %v1343 = vpop.f32.mrf.mxu0
      %v1344 = vadd.f32 %v1192, %v1343
      %v1345 = vpop.f32.mrf.mxu0
      %v1346 = vpop.f32.mrf.mxu0
      %v1347 = vadd.f32 %v1195, %v1346
      %v1348 = vpop.f32.mrf.mxu0
      %1349 = vmatprep.mubr.bf16.mxu0 0
      %1350 = vmatmul.mubr.bf16.gmra.mxu0 %v1288
      %v1351 = vpop.f32.mrf.mxu0
      %v1352 = vadd.f32 %v1200, %v1351
      %v1353 = vpop.f32.mrf.mxu0
      %v1354 = vpop.f32.mrf.mxu0
      %v1355 = vadd.f32 %v1203, %v1354
      %v1356 = vpop.f32.mrf.mxu0
      %1357 = vmatprep.mubr.bf16.mxu0 0
      %1358 = vmatmul.mubr.bf16.gmra.mxu0 %v1291
      %v1359 = vpop.f32.mrf.mxu0
      %v1360 = vadd.f32 %v1208, %v1359
      %v1361 = vpop.f32.mrf.mxu0
      %v1362 = vpop.f32.mrf.mxu0
      %v1363 = vpop.f32.mrf.mxu0
      %1364 = vdwg.mxu0
      %v1365 = vld [vmem:[#allocation2 + $0x8] sm:$0x8]
      %v1366 = vld [vmem:[#allocation2 + $0xc] sm:$0xf]
      %v1367 = vld [vmem:[#allocation2 + $0x10] sm:$0xf]
      %v1368 = vld [vmem:[#allocation2 + $0x14] sm:$0xf]
      %v1369 = vld [vmem:[#allocation2 + $0x18] sm:$0xf]
      %v1370 = vld [vmem:[#allocation2 + $0x1c] sm:$0xf]
      %v1371 = vld [vmem:[#allocation2 + $0x20] sm:$0xf]
      %v1372 = vld [vmem:[#allocation2 + $0x24] sm:$0xf]
      %v1373 = vld [vmem:[#allocation2 + $0x28] sm:$0xf]
      %v1374 = vld [vmem:[#allocation2 + $0x2c] sm:$0xf]
      %s1375 = scalar_lea.vmem %s3, 96
      %v1376 = vld [vmem:[%s1375] sm:$0xf]
      %v1377 = vld [vmem:[%s1375 + $0x4] sm:$0xf]
      %v1378 = vld [vmem:[%s1375 + $0x8] sm:$0xf]
      %v1379 = vld [vmem:[%s1375 + $0xc] sm:$0xf]
      %v1390 = vunpack.c.l.b16 %v1365
      %v1391 = vunpack.c.l.b16 %v1366
      %v1392 = vunpack.c.l.b16 %v1367
      %v1393 = vunpack.c.l.b16 %v1368
      %v1394 = vunpack.c.l.b16 %v1369
      %v1395 = vunpack.c.l.b16 %v1370
      %v1396 = vunpack.c.l.b16 %v1371
      %v1397 = vunpack.c.l.b16 %v1372
      %v1398 = vunpack.c.l.b16 %v1373
      %v1399 = vunpack.c.l.b16 %v1374
      %v1400 = vpack.c.b16 %v1391, %v1390
      %v1401 = vpack.c.b16 %v1393, %v1392
      %v1402 = vpack.c.b16 %v1395, %v1394
      %v1403 = vpack.c.b16 %v1397, %v1396
      %v1404 = vpack.c.b16 %v1399, %v1398
      %v1406 = vshrl.u32 %v1400, 16
      %v1408 = vrot.slane %v1406, 3
      %v1409 = vshll.u32 %v1400, 16
      %v1411 = vrot.slane %v1409, 4
      %v1412 = vor.u32 %v1408, %v1411
      %v1414 = vshrl.u32 %v1401, 16
      %v1416 = vrot.slane %v1414, 3
      %v1417 = vshll.u32 %v1401, 16
      %v1419 = vrot.slane %v1417, 4
      %v1420 = vor.u32 %v1416, %v1419
      %v1421 = vsel %vm1069, %v1412, %v1420
      %v1423 = vshrl.u32 %v1402, 16
      %v1425 = vrot.slane %v1423, 3
      %v1426 = vshll.u32 %v1402, 16
      %v1428 = vrot.slane %v1426, 4
      %v1429 = vor.u32 %v1425, %v1428
      %v1430 = vsel %vm1069, %v1420, %v1429
      %v1432 = vshrl.u32 %v1403, 16
      %v1434 = vrot.slane %v1432, 3
      %v1435 = vshll.u32 %v1403, 16
      %v1437 = vrot.slane %v1435, 4
      %v1438 = vor.u32 %v1434, %v1437
      %v1439 = vsel %vm1069, %v1429, %v1438
      %v1441 = vshrl.u32 %v1404, 16
      %v1443 = vrot.slane %v1441, 3
      %v1444 = vshll.u32 %v1404, 16
      %v1446 = vrot.slane %v1444, 4
      %v1447 = vor.u32 %v1443, %v1446
      %v1448 = vsel %vm1069, %v1438, %v1447
      %v1453 = vunpack.c.l.b16 %v1376
      %v1454 = vunpack.c.l.b16 %v1377
      %v1455 = vunpack.c.l.b16 %v1378
      %v1456 = vunpack.c.l.b16 %v1379
      %v1457 = vpack.c.b16 %v1454, %v1453
      %v1458 = vpack.c.b16 %v1456, %v1455
      %v1462 = vsel %vm599, %v1421, 0
      %v1465 = vsel %vm599, %v1430, 0
      %v1468 = vsel %vm599, %v1439, 0
      %v1471 = vsel %vm599, %v1448, 0
      %v1474 = vsel %vm599, %v1447, 0
      %1476 = vmatprep.subr.bf16.mxu0 0
      %1477 = vmatpush1.bf16.msra.mxu0 0
      %1478 = vmatprep.subr.bf16.mxu0 0
      %1479 = vmatpush1.bf16.msra.mxu0 0
      %1480 = vmatprep.subr.bf16.mxu0 0
      %1481 = vmatpush1.bf16.msra.mxu0 0
      %1482 = vmatprep.subr.bf16.mxu0 0
      %1483 = vmatpush1.bf16.msra.mxu0 0
      %1484 = vmatprep.subr.bf16.mxu0 0
      %1485 = vmatpush1.bf16.msra.mxu0 0
      %1486 = vmatprep.subr.bf16.mxu0 0
      %1487 = vmatpush1.bf16.msra.mxu0 0
      %1488 = vmatprep.subr.bf16.mxu0 0
      %1489 = vmatpush1.bf16.msra.mxu0 %v1458
      %1490 = vmatprep.subr.bf16.mxu0 0
      %1491 = vmatpush1.bf16.msra.mxu0 %v1457
      %1492 = vmatprep.subr.bf16.mxu0 0
      %1493 = vmatpush2.bf16.msra.mxu0 0
      %1494 = vmatprep.subr.bf16.mxu0 0
      %1495 = vmatpush2.bf16.msra.mxu0 0
      %1496 = vmatprep.subr.bf16.mxu0 0
      %1497 = vmatpush2.bf16.msra.mxu0 0
      %1498 = vmatprep.subr.bf16.mxu0 0
      %1499 = vmatpush2.bf16.msra.mxu0 0
      %1500 = vmatprep.subr.bf16.mxu0 0
      %1501 = vmatpush2.bf16.msra.mxu0 0
      %1502 = vmatprep.subr.bf16.mxu0 0
      %1503 = vmatpush2.bf16.msra.mxu0 0
      %1504 = vmatprep.subr.bf16.mxu0 0
      %1505 = vmatpush2.bf16.msra.mxu0 0
      %1506 = vmatprep.subr.bf16.mxu0 0
      %1507 = vmatpush2.bf16.msra.mxu0 0
      %1508 = vmatprep.mubr.bf16.mxu0 0
      %1509 = vmatmul.mubr.bf16.gmra.mxu0 %v1462
      %v1510 = vpop.f32.mrf.mxu0
      %v1511 = vadd.f32 0.0, %v1510
      %v1512 = vpop.f32.mrf.mxu0
      %v1513 = vpop.f32.mrf.mxu0
      %v1514 = vadd.f32 0.0, %v1513
      %v1515 = vpop.f32.mrf.mxu0
      %1516 = vmatprep.mubr.bf16.mxu0 0
      %1517 = vmatmul.mubr.bf16.gmra.mxu0 %v1465
      %v1518 = vpop.f32.mrf.mxu0
      %v1519 = vadd.f32 0.0, %v1518
      %v1520 = vpop.f32.mrf.mxu0
      %v1521 = vpop.f32.mrf.mxu0
      %v1522 = vadd.f32 0.0, %v1521
      %v1523 = vpop.f32.mrf.mxu0
      %1524 = vmatprep.mubr.bf16.mxu0 0
      %1525 = vmatmul.mubr.bf16.gmra.mxu0 %v1468
      %v1526 = vpop.f32.mrf.mxu0
      %v1527 = vadd.f32 0.0, %v1526
      %v1528 = vpop.f32.mrf.mxu0
      %v1529 = vpop.f32.mrf.mxu0
      %v1530 = vadd.f32 0.0, %v1529
      %v1531 = vpop.f32.mrf.mxu0
      %1532 = vmatprep.mubr.bf16.mxu0 0
      %1533 = vmatmul.mubr.bf16.gmra.mxu0 %v1471
      %v1534 = vpop.f32.mrf.mxu0
      %v1535 = vadd.f32 0.0, %v1534
      %v1536 = vpop.f32.mrf.mxu0
      %v1537 = vpop.f32.mrf.mxu0
      %v1538 = vadd.f32 0.0, %v1537
      %v1539 = vpop.f32.mrf.mxu0
      %1540 = vmatprep.mubr.bf16.mxu0 0
      %1541 = vmatmul.mubr.bf16.gmra.mxu0 %v1474
      %v1542 = vpop.f32.mrf.mxu0
      %v1543 = vadd.f32 0.0, %v1542
      %v1544 = vpop.f32.mrf.mxu0
      %v1545 = vpop.f32.mrf.mxu0
      %v1546 = vpop.f32.mrf.mxu0
      %1547 = vdwg.mxu0
      %v1548 = vadd.f32 %v1328, %v1511
      %v1549 = vadd.f32 %v1331, %v1514
      %v1550 = vadd.f32 %v1336, %v1519
      %v1551 = vadd.f32 %v1339, %v1522
      %v1552 = vadd.f32 %v1344, %v1527
      %v1553 = vadd.f32 %v1347, %v1530
      %v1554 = vadd.f32 %v1352, %v1535
      %v1555 = vadd.f32 %v1355, %v1538
      %v1556 = vadd.f32 %v1360, %v1543
      %s1557 = scalar_lea.vmem %s3, 16
      %v1558 = vld [vmem:[%s1557] sm:$0xf]
      %v1559 = vld [vmem:[%s1557 + $0x4] sm:$0xf]
      %v1560 = vld [vmem:[%s1557 + $0x8] sm:$0xf]
      %v1561 = vld [vmem:[%s1557 + $0xc] sm:$0xf]
      %s1562 = scalar_lea.vmem %s3, 64
      %v1563 = vld [vmem:[%s1562] sm:$0xf]
      %v1564 = vld [vmem:[%s1562 + $0x4] sm:$0xf]
      %v1565 = vld [vmem:[%s1562 + $0x8] sm:$0xf]
      %v1566 = vld [vmem:[%s1562 + $0xc] sm:$0xf]
      %v1567 = vpack.c.b16 %v1063, %v1063
      %v1572 = vunpack.c.l.b16 %v1563
      %v1573 = vunpack.c.l.b16 %v1564
      %v1574 = vunpack.c.l.b16 %v1565
      %v1575 = vunpack.c.l.b16 %v1566
      %v1576 = vpack.c.b16 %v1573, %v1572
      %v1577 = vpack.c.b16 %v1575, %v1574
      %v1580 = vsel %vm599, %v1218, 0
      %v1582 = vsel %vm599, %v1219, 0
      %v1584 = vsel %vm599, %v1220, 0
      %v1586 = vsel %vm599, %v1221, 0
      %v1589 = vsel %vm599, %v1567, 0
      %1591 = vmatprep.subr.bf16.mxu0 0
      %1592 = vmatpush1.bf16.msra.mxu0 0
      %1593 = vmatprep.subr.bf16.mxu0 0
      %1594 = vmatpush1.bf16.msra.mxu0 0
      %1595 = vmatprep.subr.bf16.mxu0 0
      %1596 = vmatpush1.bf16.msra.mxu0 0
      %1597 = vmatprep.subr.bf16.mxu0 0
      %1598 = vmatpush1.bf16.msra.mxu0 0
      %1599 = vmatprep.subr.bf16.mxu0 0
      %1600 = vmatpush1.bf16.msra.mxu0 0
      %1601 = vmatprep.subr.bf16.mxu0 0
      %1602 = vmatpush1.bf16.msra.mxu0 0
      %1603 = vmatprep.subr.bf16.mxu0 0
      %1604 = vmatpush1.bf16.msra.mxu0 %v1577
      %1605 = vmatprep.subr.bf16.mxu0 0
      %1606 = vmatpush1.bf16.msra.mxu0 %v1576
      %1607 = vmatprep.subr.bf16.mxu0 0
      %1608 = vmatpush2.bf16.msra.mxu0 0
      %1609 = vmatprep.subr.bf16.mxu0 0
      %1610 = vmatpush2.bf16.msra.mxu0 0
      %1611 = vmatprep.subr.bf16.mxu0 0
      %1612 = vmatpush2.bf16.msra.mxu0 0
      %1613 = vmatprep.subr.bf16.mxu0 0
      %1614 = vmatpush2.bf16.msra.mxu0 0
      %1615 = vmatprep.subr.bf16.mxu0 0
      %1616 = vmatpush2.bf16.msra.mxu0 0
      %1617 = vmatprep.subr.bf16.mxu0 0
      %1618 = vmatpush2.bf16.msra.mxu0 0
      %1619 = vmatprep.subr.bf16.mxu0 0
      %1620 = vmatpush2.bf16.msra.mxu0 0
      %1621 = vmatprep.subr.bf16.mxu0 0
      %1622 = vmatpush2.bf16.msra.mxu0 0
      %1623 = vmatprep.mubr.bf16.mxu0 0
      %1624 = vmatmul.mubr.bf16.gmra.mxu0 %v1580
      %v1625 = vpop.f32.mrf.mxu0
      %v1626 = vadd.f32 0.0, %v1625
      %v1627 = vpop.f32.mrf.mxu0
      %v1628 = vpop.f32.mrf.mxu0
      %v1629 = vadd.f32 0.0, %v1628
      %v1630 = vpop.f32.mrf.mxu0
      %1631 = vmatprep.mubr.bf16.mxu0 0
      %1632 = vmatmul.mubr.bf16.gmra.mxu0 %v1582
      %v1633 = vpop.f32.mrf.mxu0
      %v1634 = vadd.f32 0.0, %v1633
      %v1635 = vpop.f32.mrf.mxu0
      %v1636 = vpop.f32.mrf.mxu0
      %v1637 = vadd.f32 0.0, %v1636
      %v1638 = vpop.f32.mrf.mxu0
      %1639 = vmatprep.mubr.bf16.mxu0 0
      %1640 = vmatmul.mubr.bf16.gmra.mxu0 %v1584
      %v1641 = vpop.f32.mrf.mxu0
      %v1642 = vadd.f32 0.0, %v1641
      %v1643 = vpop.f32.mrf.mxu0
      %v1644 = vpop.f32.mrf.mxu0
      %v1645 = vadd.f32 0.0, %v1644
      %v1646 = vpop.f32.mrf.mxu0
      %1647 = vmatprep.mubr.bf16.mxu0 0
      %1648 = vmatmul.mubr.bf16.gmra.mxu0 %v1586
      %v1649 = vpop.f32.mrf.mxu0
      %v1650 = vadd.f32 0.0, %v1649
      %v1651 = vpop.f32.mrf.mxu0
      %v1652 = vpop.f32.mrf.mxu0
      %v1653 = vadd.f32 0.0, %v1652
      %v1654 = vpop.f32.mrf.mxu0
      %1655 = vmatprep.mubr.bf16.mxu0 0
      %1656 = vmatmul.mubr.bf16.gmra.mxu0 %v1589
      %v1657 = vpop.f32.mrf.mxu0
      %v1658 = vadd.f32 0.0, %v1657
      %v1659 = vpop.f32.mrf.mxu0
      %v1660 = vpop.f32.mrf.mxu0
      %v1661 = vpop.f32.mrf.mxu0
      %1662 = vdwg.mxu0
      %v1663 = vpack.c.b16 %v1055, %v1216
      %v1664 = vpack.c.b16 %v1062, %v1062
      %v1669 = vunpack.c.l.b16 %v1558
      %v1670 = vunpack.c.l.b16 %v1559
      %v1671 = vunpack.c.l.b16 %v1560
      %v1672 = vunpack.c.l.b16 %v1561
      %v1673 = vpack.c.b16 %v1670, %v1669
      %v1674 = vpack.c.b16 %v1672, %v1671
      %v1678 = vsel %vm599, %v1663, 0
      %v1680 = vsel %vm599, %v1065, 0
      %v1682 = vsel %vm599, %v1066, 0
      %v1684 = vsel %vm599, %v1067, 0
      %v1687 = vsel %vm599, %v1664, 0
      %1689 = vmatprep.subr.bf16.mxu0 0
      %1690 = vmatpush1.bf16.msra.mxu0 0
      %1691 = vmatprep.subr.bf16.mxu0 0
      %1692 = vmatpush1.bf16.msra.mxu0 0
      %1693 = vmatprep.subr.bf16.mxu0 0
      %1694 = vmatpush1.bf16.msra.mxu0 0
      %1695 = vmatprep.subr.bf16.mxu0 0
      %1696 = vmatpush1.bf16.msra.mxu0 0
      %1697 = vmatprep.subr.bf16.mxu0 0
      %1698 = vmatpush1.bf16.msra.mxu0 0
      %1699 = vmatprep.subr.bf16.mxu0 0
      %1700 = vmatpush1.bf16.msra.mxu0 0
      %1701 = vmatprep.subr.bf16.mxu0 0
      %1702 = vmatpush1.bf16.msra.mxu0 %v1674
      %1703 = vmatprep.subr.bf16.mxu0 0
      %1704 = vmatpush1.bf16.msra.mxu0 %v1673
      %1705 = vmatprep.subr.bf16.mxu0 0
      %1706 = vmatpush2.bf16.msra.mxu0 0
      %1707 = vmatprep.subr.bf16.mxu0 0
      %1708 = vmatpush2.bf16.msra.mxu0 0
      %1709 = vmatprep.subr.bf16.mxu0 0
      %1710 = vmatpush2.bf16.msra.mxu0 0
      %1711 = vmatprep.subr.bf16.mxu0 0
      %1712 = vmatpush2.bf16.msra.mxu0 0
      %1713 = vmatprep.subr.bf16.mxu0 0
      %1714 = vmatpush2.bf16.msra.mxu0 0
      %1715 = vmatprep.subr.bf16.mxu0 0
      %1716 = vmatpush2.bf16.msra.mxu0 0
      %1717 = vmatprep.subr.bf16.mxu0 0
      %1718 = vmatpush2.bf16.msra.mxu0 0
      %1719 = vmatprep.subr.bf16.mxu0 0
      %1720 = vmatpush2.bf16.msra.mxu0 0
      %1721 = vmatprep.mubr.bf16.mxu0 0
      %1722 = vmatmul.mubr.bf16.gmra.mxu0 %v1678
      %v1723 = vpop.f32.mrf.mxu0
      %v1724 = vadd.f32 %v1626, %v1723
      %v1725 = vpop.f32.mrf.mxu0
      %v1726 = vpop.f32.mrf.mxu0
      %v1727 = vadd.f32 %v1629, %v1726
      %v1728 = vpop.f32.mrf.mxu0
      %1729 = vmatprep.mubr.bf16.mxu0 0
      %1730 = vmatmul.mubr.bf16.gmra.mxu0 %v1680
      %v1731 = vpop.f32.mrf.mxu0
      %v1732 = vadd.f32 %v1634, %v1731
      %v1733 = vpop.f32.mrf.mxu0
      %v1734 = vpop.f32.mrf.mxu0
      %v1735 = vadd.f32 %v1637, %v1734
      %v1736 = vpop.f32.mrf.mxu0
      %1737 = vmatprep.mubr.bf16.mxu0 0
      %1738 = vmatmul.mubr.bf16.gmra.mxu0 %v1682
      %v1739 = vpop.f32.mrf.mxu0
      %v1740 = vadd.f32 %v1642, %v1739
      %v1741 = vpop.f32.mrf.mxu0
      %v1742 = vpop.f32.mrf.mxu0
      %v1743 = vadd.f32 %v1645, %v1742
      %v1744 = vpop.f32.mrf.mxu0
      %1745 = vmatprep.mubr.bf16.mxu0 0
      %1746 = vmatmul.mubr.bf16.gmra.mxu0 %v1684
      %v1747 = vpop.f32.mrf.mxu0
      %v1748 = vadd.f32 %v1650, %v1747
      %v1749 = vpop.f32.mrf.mxu0
      %v1750 = vpop.f32.mrf.mxu0
      %v1751 = vadd.f32 %v1653, %v1750
      %v1752 = vpop.f32.mrf.mxu0
      %1753 = vmatprep.mubr.bf16.mxu0 0
      %1754 = vmatmul.mubr.bf16.gmra.mxu0 %v1687
      %v1755 = vpop.f32.mrf.mxu0
      %v1756 = vadd.f32 %v1658, %v1755
      %v1757 = vpop.f32.mrf.mxu0
      %v1758 = vpop.f32.mrf.mxu0
      %v1759 = vpop.f32.mrf.mxu0
      %1760 = vdwg.mxu0
      %s1761 = scalar_lea.vmem %s3, 112
      %v1762 = vld [vmem:[%s1761] sm:$0xf]
      %v1763 = vld [vmem:[%s1761 + $0x4] sm:$0xf]
      %v1764 = vld [vmem:[%s1761 + $0x8] sm:$0xf]
      %v1765 = vld [vmem:[%s1761 + $0xc] sm:$0xf]
      %v1766 = vpack.c.b16 %v1392, %v1391
      %v1767 = vpack.c.b16 %v1394, %v1393
      %v1768 = vpack.c.b16 %v1396, %v1395
      %v1769 = vpack.c.b16 %v1398, %v1397
      %v1770 = vpack.c.b16 %v1399, %v1399
      %v1775 = vunpack.c.l.b16 %v1762
      %v1776 = vunpack.c.l.b16 %v1763
      %v1777 = vunpack.c.l.b16 %v1764
      %v1778 = vunpack.c.l.b16 %v1765
      %v1779 = vpack.c.b16 %v1776, %v1775
      %v1780 = vpack.c.b16 %v1778, %v1777
      %v1784 = vsel %vm599, %v1766, 0
      %v1787 = vsel %vm599, %v1767, 0
      %v1790 = vsel %vm599, %v1768, 0
      %v1793 = vsel %vm599, %v1769, 0
      %v1796 = vsel %vm599, %v1770, 0
      %1798 = vmatprep.subr.bf16.mxu0 0
      %1799 = vmatpush1.bf16.msra.mxu0 0
      %1800 = vmatprep.subr.bf16.mxu0 0
      %1801 = vmatpush1.bf16.msra.mxu0 0
      %1802 = vmatprep.subr.bf16.mxu0 0
      %1803 = vmatpush1.bf16.msra.mxu0 0
      %1804 = vmatprep.subr.bf16.mxu0 0
      %1805 = vmatpush1.bf16.msra.mxu0 0
      %1806 = vmatprep.subr.bf16.mxu0 0
      %1807 = vmatpush1.bf16.msra.mxu0 0
      %1808 = vmatprep.subr.bf16.mxu0 0
      %1809 = vmatpush1.bf16.msra.mxu0 0
      %1810 = vmatprep.subr.bf16.mxu0 0
      %1811 = vmatpush1.bf16.msra.mxu0 %v1780
      %1812 = vmatprep.subr.bf16.mxu0 0
      %1813 = vmatpush1.bf16.msra.mxu0 %v1779
      %1814 = vmatprep.subr.bf16.mxu0 0
      %1815 = vmatpush2.bf16.msra.mxu0 0
      %1816 = vmatprep.subr.bf16.mxu0 0
      %1817 = vmatpush2.bf16.msra.mxu0 0
      %1818 = vmatprep.subr.bf16.mxu0 0
      %1819 = vmatpush2.bf16.msra.mxu0 0
      %1820 = vmatprep.subr.bf16.mxu0 0
      %1821 = vmatpush2.bf16.msra.mxu0 0
      %1822 = vmatprep.subr.bf16.mxu0 0
      %1823 = vmatpush2.bf16.msra.mxu0 0
      %1824 = vmatprep.subr.bf16.mxu0 0
      %1825 = vmatpush2.bf16.msra.mxu0 0
      %1826 = vmatprep.subr.bf16.mxu0 0
      %1827 = vmatpush2.bf16.msra.mxu0 0
      %1828 = vmatprep.subr.bf16.mxu0 0
      %1829 = vmatpush2.bf16.msra.mxu0 0
      %1830 = vmatprep.mubr.bf16.mxu0 0
      %1831 = vmatmul.mubr.bf16.gmra.mxu0 %v1784
      %v1832 = vpop.f32.mrf.mxu0
      %v1833 = vadd.f32 0.0, %v1832
      %v1834 = vpop.f32.mrf.mxu0
      %v1835 = vpop.f32.mrf.mxu0
      %v1836 = vadd.f32 0.0, %v1835
      %v1837 = vpop.f32.mrf.mxu0
      %1838 = vmatprep.mubr.bf16.mxu0 0
      %1839 = vmatmul.mubr.bf16.gmra.mxu0 %v1787
      %v1840 = vpop.f32.mrf.mxu0
      %v1841 = vadd.f32 0.0, %v1840
      %v1842 = vpop.f32.mrf.mxu0
      %v1843 = vpop.f32.mrf.mxu0
      %v1844 = vadd.f32 0.0, %v1843
      %v1845 = vpop.f32.mrf.mxu0
      %1846 = vmatprep.mubr.bf16.mxu0 0
      %1847 = vmatmul.mubr.bf16.gmra.mxu0 %v1790
      %v1848 = vpop.f32.mrf.mxu0
      %v1849 = vadd.f32 0.0, %v1848
      %v1850 = vpop.f32.mrf.mxu0
      %v1851 = vpop.f32.mrf.mxu0
      %v1852 = vadd.f32 0.0, %v1851
      %v1853 = vpop.f32.mrf.mxu0
      %1854 = vmatprep.mubr.bf16.mxu0 0
      %1855 = vmatmul.mubr.bf16.gmra.mxu0 %v1793
      %v1856 = vpop.f32.mrf.mxu0
      %v1857 = vadd.f32 0.0, %v1856
      %v1858 = vpop.f32.mrf.mxu0
      %v1859 = vpop.f32.mrf.mxu0
      %v1860 = vadd.f32 0.0, %v1859
      %v1861 = vpop.f32.mrf.mxu0
      %1862 = vmatprep.mubr.bf16.mxu0 0
      %1863 = vmatmul.mubr.bf16.gmra.mxu0 %v1796
      %v1864 = vpop.f32.mrf.mxu0
      %v1865 = vadd.f32 0.0, %v1864
      %v1866 = vpop.f32.mrf.mxu0
      %v1867 = vpop.f32.mrf.mxu0
      %v1868 = vpop.f32.mrf.mxu0
      %1869 = vdwg.mxu0
      %v1870 = vadd.f32 %v1724, %v1833
      %v1871 = vadd.f32 %v1727, %v1836
      %v1872 = vadd.f32 %v1732, %v1841
      %v1873 = vadd.f32 %v1735, %v1844
      %v1874 = vadd.f32 %v1740, %v1849
      %v1875 = vadd.f32 %v1743, %v1852
      %v1876 = vadd.f32 %v1748, %v1857
      %v1877 = vadd.f32 %v1751, %v1860
      %v1878 = vadd.f32 %v1756, %v1865
      %v1879 = vld [vmem:[#allocation2 + $0x4] sm:$0xf]
      %v1880 = vld [vmem:[#allocation2 + $0x28] sm:$0x1]
      %s1881 = scalar_lea.vmem %s3, 32
      %v1882 = vld [vmem:[%s1881] sm:$0xf]
      %v1883 = vld [vmem:[%s1881 + $0x4] sm:$0xf]
      %v1884 = vld [vmem:[%s1881 + $0x8] sm:$0xf]
      %v1885 = vld [vmem:[%s1881 + $0xc] sm:$0xf]
      %v1886 = vld [vmem:[#allocation2 + $0x8] sm:$0xf]
      %v1887 = vld [vmem:[#allocation2 + $0x2c] sm:$0x1]
      %s1888 = scalar_lea.vmem %s3, 80
      %v1889 = vld [vmem:[%s1888] sm:$0xf]
      %v1890 = vld [vmem:[%s1888 + $0x4] sm:$0xf]
      %v1891 = vld [vmem:[%s1888 + $0x8] sm:$0xf]
      %v1892 = vld [vmem:[%s1888 + $0xc] sm:$0xf]
      %v1895 = vunpack.c.l.b16 %v1886
      %v1896 = vunpack.c.l.b16 %v1887
      %v1897 = vpack.c.b16 %v1391, %v1895
      %v1898 = vpack.c.b16 %v1896, %v1398
      %vm1899 = vsmask.f32 7424
      %v1901 = vshrl.u32 %v1897, 16
      %v1903 = vshll.u32 %v1897, 16
      %v1905 = vrot.slane %v1903, 1
      %v1906 = vor.u32 %v1901, %v1905
      %v1907 = vrot.slane %v1417, 1
      %v1908 = vsel %vm1899, %v1906, %v1907
      %v1909 = vor.u32 %v1414, %v1907
      %v1910 = vrot.slane %v1426, 1
      %v1911 = vsel %vm1899, %v1909, %v1910
      %v1912 = vor.u32 %v1423, %v1910
      %v1913 = vrot.slane %v1435, 1
      %v1914 = vsel %vm1899, %v1912, %v1913
      %v1915 = vor.u32 %v1432, %v1913
      %v1917 = vshll.u32 %v1898, 16
      %v1919 = vrot.slane %v1917, 1
      %v1920 = vsel %vm1899, %v1915, %v1919
      %v1921 = vshrl.u32 %v1898, 16
      %v1923 = vor.u32 %v1921, %v1919
      %v1928 = vunpack.c.l.b16 %v1889
      %v1929 = vunpack.c.l.b16 %v1890
      %v1930 = vunpack.c.l.b16 %v1891
      %v1931 = vunpack.c.l.b16 %v1892
      %v1932 = vpack.c.b16 %v1929, %v1928
      %v1933 = vpack.c.b16 %v1931, %v1930
      %v1937 = vsel %vm599, %v1908, 0
      %v1940 = vsel %vm599, %v1911, 0
      %v1943 = vsel %vm599, %v1914, 0
      %v1946 = vsel %vm599, %v1920, 0
      %v1949 = vsel %vm599, %v1923, 0
      %1951 = vmatprep.subr.bf16.mxu0 0
      %1952 = vmatpush1.bf16.msra.mxu0 0
      %1953 = vmatprep.subr.bf16.mxu0 0
      %1954 = vmatpush1.bf16.msra.mxu0 0
      %1955 = vmatprep.subr.bf16.mxu0 0
      %1956 = vmatpush1.bf16.msra.mxu0 0
      %1957 = vmatprep.subr.bf16.mxu0 0
      %1958 = vmatpush1.bf16.msra.mxu0 0
      %1959 = vmatprep.subr.bf16.mxu0 0
      %1960 = vmatpush1.bf16.msra.mxu0 0
      %1961 = vmatprep.subr.bf16.mxu0 0
      %1962 = vmatpush1.bf16.msra.mxu0 0
      %1963 = vmatprep.subr.bf16.mxu0 0
      %1964 = vmatpush1.bf16.msra.mxu0 %v1933
      %1965 = vmatprep.subr.bf16.mxu0 0
      %1966 = vmatpush1.bf16.msra.mxu0 %v1932
      %1967 = vmatprep.subr.bf16.mxu0 0
      %1968 = vmatpush2.bf16.msra.mxu0 0
      %1969 = vmatprep.subr.bf16.mxu0 0
      %1970 = vmatpush2.bf16.msra.mxu0 0
      %1971 = vmatprep.subr.bf16.mxu0 0
      %1972 = vmatpush2.bf16.msra.mxu0 0
      %1973 = vmatprep.subr.bf16.mxu0 0
      %1974 = vmatpush2.bf16.msra.mxu0 0
      %1975 = vmatprep.subr.bf16.mxu0 0
      %1976 = vmatpush2.bf16.msra.mxu0 0
      %1977 = vmatprep.subr.bf16.mxu0 0
      %1978 = vmatpush2.bf16.msra.mxu0 0
      %1979 = vmatprep.subr.bf16.mxu0 0
      %1980 = vmatpush2.bf16.msra.mxu0 0
      %1981 = vmatprep.subr.bf16.mxu0 0
      %1982 = vmatpush2.bf16.msra.mxu0 0
      %1983 = vmatprep.mubr.bf16.mxu0 0
      %1984 = vmatmul.mubr.bf16.gmra.mxu0 %v1937
      %v1985 = vpop.f32.mrf.mxu0
      %v1986 = vadd.f32 0.0, %v1985
      %v1987 = vpop.f32.mrf.mxu0
      %v1988 = vpop.f32.mrf.mxu0
      %v1989 = vadd.f32 0.0, %v1988
      %v1990 = vpop.f32.mrf.mxu0
      %1991 = vmatprep.mubr.bf16.mxu0 0
      %1992 = vmatmul.mubr.bf16.gmra.mxu0 %v1940
      %v1993 = vpop.f32.mrf.mxu0
      %v1994 = vadd.f32 0.0, %v1993
      %v1995 = vpop.f32.mrf.mxu0
      %v1996 = vpop.f32.mrf.mxu0
      %v1997 = vadd.f32 0.0, %v1996
      %v1998 = vpop.f32.mrf.mxu0
      %1999 = vmatprep.mubr.bf16.mxu0 0
      %2000 = vmatmul.mubr.bf16.gmra.mxu0 %v1943
      %v2001 = vpop.f32.mrf.mxu0
      %v2002 = vadd.f32 0.0, %v2001
      %v2003 = vpop.f32.mrf.mxu0
      %v2004 = vpop.f32.mrf.mxu0
      %v2005 = vadd.f32 0.0, %v2004
      %v2006 = vpop.f32.mrf.mxu0
      %2007 = vmatprep.mubr.bf16.mxu0 0
      %2008 = vmatmul.mubr.bf16.gmra.mxu0 %v1946
      %v2009 = vpop.f32.mrf.mxu0
      %v2010 = vadd.f32 0.0, %v2009
      %v2011 = vpop.f32.mrf.mxu0
      %v2012 = vpop.f32.mrf.mxu0
      %v2013 = vadd.f32 0.0, %v2012
      %v2014 = vpop.f32.mrf.mxu0
      %2015 = vmatprep.mubr.bf16.mxu0 0
      %2016 = vmatmul.mubr.bf16.gmra.mxu0 %v1949
      %v2017 = vpop.f32.mrf.mxu0
      %v2018 = vadd.f32 0.0, %v2017
      %v2019 = vpop.f32.mrf.mxu0
      %v2020 = vpop.f32.mrf.mxu0
      %v2021 = vpop.f32.mrf.mxu0
      %2022 = vdwg.mxu0
      %v2025 = vunpack.c.l.b16 %v1879
      %v2026 = vunpack.c.l.b16 %v1880
      %v2027 = vpack.c.b16 %v1055, %v2025
      %v2028 = vpack.c.b16 %v2026, %v1062
      %v2030 = vshrl.u32 %v2027, 16
      %v2032 = vshll.u32 %v2027, 16
      %v2034 = vrot.slane %v2032, 1
      %v2035 = vor.u32 %v2030, %v2034
      %v2036 = vrot.slane %v1082, 1
      %v2037 = vsel %vm1899, %v2035, %v2036
      %v2038 = vor.u32 %v1079, %v2036
      %v2039 = vrot.slane %v1091, 1
      %v2040 = vsel %vm1899, %v2038, %v2039
      %v2041 = vor.u32 %v1088, %v2039
      %v2042 = vrot.slane %v1100, 1
      %v2043 = vsel %vm1899, %v2041, %v2042
      %v2044 = vor.u32 %v1097, %v2042
      %v2046 = vshll.u32 %v2028, 16
      %v2048 = vrot.slane %v2046, 1
      %v2049 = vsel %vm1899, %v2044, %v2048
      %v2050 = vshrl.u32 %v2028, 16
      %v2052 = vor.u32 %v2050, %v2048
      %v2057 = vunpack.c.l.b16 %v1882
      %v2058 = vunpack.c.l.b16 %v1883
      %v2059 = vunpack.c.l.b16 %v1884
      %v2060 = vunpack.c.l.b16 %v1885
      %v2061 = vpack.c.b16 %v2058, %v2057
      %v2062 = vpack.c.b16 %v2060, %v2059
      %v2066 = vsel %vm599, %v2037, 0
      %v2069 = vsel %vm599, %v2040, 0
      %v2072 = vsel %vm599, %v2043, 0
      %v2075 = vsel %vm599, %v2049, 0
      %v2078 = vsel %vm599, %v2052, 0
      %2080 = vmatprep.subr.bf16.mxu0 0
      %2081 = vmatpush1.bf16.msra.mxu0 0
      %2082 = vmatprep.subr.bf16.mxu0 0
      %2083 = vmatpush1.bf16.msra.mxu0 0
      %2084 = vmatprep.subr.bf16.mxu0 0
      %2085 = vmatpush1.bf16.msra.mxu0 0
      %2086 = vmatprep.subr.bf16.mxu0 0
      %2087 = vmatpush1.bf16.msra.mxu0 0
      %2088 = vmatprep.subr.bf16.mxu0 0
      %2089 = vmatpush1.bf16.msra.mxu0 0
      %2090 = vmatprep.subr.bf16.mxu0 0
      %2091 = vmatpush1.bf16.msra.mxu0 0
      %2092 = vmatprep.subr.bf16.mxu0 0
      %2093 = vmatpush1.bf16.msra.mxu0 %v2062
      %2094 = vmatprep.subr.bf16.mxu0 0
      %2095 = vmatpush1.bf16.msra.mxu0 %v2061
      %2096 = vmatprep.subr.bf16.mxu0 0
      %2097 = vmatpush2.bf16.msra.mxu0 0
      %2098 = vmatprep.subr.bf16.mxu0 0
      %2099 = vmatpush2.bf16.msra.mxu0 0
      %2100 = vmatprep.subr.bf16.mxu0 0
      %2101 = vmatpush2.bf16.msra.mxu0 0
      %2102 = vmatprep.subr.bf16.mxu0 0
      %2103 = vmatpush2.bf16.msra.mxu0 0
      %2104 = vmatprep.subr.bf16.mxu0 0
      %2105 = vmatpush2.bf16.msra.mxu0 0
      %2106 = vmatprep.subr.bf16.mxu0 0
      %2107 = vmatpush2.bf16.msra.mxu0 0
      %2108 = vmatprep.subr.bf16.mxu0 0
      %2109 = vmatpush2.bf16.msra.mxu0 0
      %2110 = vmatprep.subr.bf16.mxu0 0
      %2111 = vmatpush2.bf16.msra.mxu0 0
      %2112 = vmatprep.mubr.bf16.mxu0 0
      %2113 = vmatmul.mubr.bf16.gmra.mxu0 %v2066
      %v2114 = vpop.f32.mrf.mxu0
      %v2115 = vadd.f32 %v1986, %v2114
      %v2116 = vpop.f32.mrf.mxu0
      %v2117 = vpop.f32.mrf.mxu0
      %v2118 = vadd.f32 %v1989, %v2117
      %v2119 = vpop.f32.mrf.mxu0
      %2120 = vmatprep.mubr.bf16.mxu0 0
      %2121 = vmatmul.mubr.bf16.gmra.mxu0 %v2069
      %v2122 = vpop.f32.mrf.mxu0
      %v2123 = vadd.f32 %v1994, %v2122
      %v2124 = vpop.f32.mrf.mxu0
      %v2125 = vpop.f32.mrf.mxu0
      %v2126 = vadd.f32 %v1997, %v2125
      %v2127 = vpop.f32.mrf.mxu0
      %2128 = vmatprep.mubr.bf16.mxu0 0
      %2129 = vmatmul.mubr.bf16.gmra.mxu0 %v2072
      %v2130 = vpop.f32.mrf.mxu0
      %v2131 = vadd.f32 %v2002, %v2130
      %v2132 = vpop.f32.mrf.mxu0
      %v2133 = vpop.f32.mrf.mxu0
      %v2134 = vadd.f32 %v2005, %v2133
      %v2135 = vpop.f32.mrf.mxu0
      %2136 = vmatprep.mubr.bf16.mxu0 0
      %2137 = vmatmul.mubr.bf16.gmra.mxu0 %v2075
      %v2138 = vpop.f32.mrf.mxu0
      %v2139 = vadd.f32 %v2010, %v2138
      %v2140 = vpop.f32.mrf.mxu0
      %v2141 = vpop.f32.mrf.mxu0
      %v2142 = vadd.f32 %v2013, %v2141
      %v2143 = vpop.f32.mrf.mxu0
      %2144 = vmatprep.mubr.bf16.mxu0 0
      %2145 = vmatmul.mubr.bf16.gmra.mxu0 %v2078
      %v2146 = vpop.f32.mrf.mxu0
      %v2147 = vadd.f32 %v2018, %v2146
      %v2148 = vpop.f32.mrf.mxu0
      %v2149 = vpop.f32.mrf.mxu0
      %v2150 = vpop.f32.mrf.mxu0
      %2151 = vdwg.mxu0
      %v2152 = vld [vmem:[#allocation2 + $0xc] sm:$0xf]
      %v2153 = vld [vmem:[#allocation2 + $0x10] sm:$0xf]
      %v2154 = vld [vmem:[#allocation2 + $0x14] sm:$0xf]
      %v2155 = vld [vmem:[#allocation2 + $0x18] sm:$0xf]
      %v2156 = vld [vmem:[#allocation2 + $0x1c] sm:$0xf]
      %v2157 = vld [vmem:[#allocation2 + $0x20] sm:$0xf]
      %v2158 = vld [vmem:[#allocation2 + $0x24] sm:$0xf]
      %v2159 = vld [vmem:[#allocation2 + $0x28] sm:$0xf]
      %v2160 = vld [vmem:[#allocation2 + $0x2c] sm:$0xf]
      %v2161 = vld [vmem:[#allocation2 + $0x30] sm:$0x1]
      %s2162 = scalar_lea.vmem %s3, 128
      %v2163 = vld [vmem:[%s2162] sm:$0xf]
      %v2164 = vld [vmem:[%s2162 + $0x4] sm:$0xf]
      %v2165 = vld [vmem:[%s2162 + $0x8] sm:$0xf]
      %v2166 = vld [vmem:[%s2162 + $0xc] sm:$0xf]
      %v2177 = vunpack.c.l.b16 %v2152
      %v2178 = vunpack.c.l.b16 %v2153
      %v2179 = vunpack.c.l.b16 %v2154
      %v2180 = vunpack.c.l.b16 %v2155
      %v2181 = vunpack.c.l.b16 %v2156
      %v2182 = vunpack.c.l.b16 %v2157
      %v2183 = vunpack.c.l.b16 %v2158
      %v2184 = vunpack.c.l.b16 %v2159
      %v2185 = vunpack.c.l.b16 %v2160
      %v2186 = vunpack.c.l.b16 %v2161
      %v2187 = vpack.c.b16 %v2178, %v2177
      %v2188 = vpack.c.b16 %v2180, %v2179
      %v2189 = vpack.c.b16 %v2182, %v2181
      %v2190 = vpack.c.b16 %v2184, %v2183
      %v2191 = vpack.c.b16 %v2186, %v2185
      %v2193 = vshrl.u32 %v2187, 16
      %v2195 = vshll.u32 %v2187, 16
      %v2197 = vrot.slane %v2195, 1
      %v2198 = vor.u32 %v2193, %v2197
      %v2200 = vshll.u32 %v2188, 16
      %v2202 = vrot.slane %v2200, 1
      %v2203 = vsel %vm1899, %v2198, %v2202
      %v2204 = vshrl.u32 %v2188, 16
      %v2206 = vor.u32 %v2204, %v2202
      %v2208 = vshll.u32 %v2189, 16
      %v2210 = vrot.slane %v2208, 1
      %v2211 = vsel %vm1899, %v2206, %v2210
      %v2212 = vshrl.u32 %v2189, 16
      %v2214 = vor.u32 %v2212, %v2210
      %v2216 = vshll.u32 %v2190, 16
      %v2218 = vrot.slane %v2216, 1
      %v2219 = vsel %vm1899, %v2214, %v2218
      %v2220 = vshrl.u32 %v2190, 16
      %v2222 = vor.u32 %v2220, %v2218
      %v2224 = vshll.u32 %v2191, 16
      %v2226 = vrot.slane %v2224, 1
      %v2227 = vsel %vm1899, %v2222, %v2226
      %v2228 = vshrl.u32 %v2191, 16
      %v2230 = vor.u32 %v2228, %v2226
      %v2235 = vunpack.c.l.b16 %v2163
      %v2236 = vunpack.c.l.b16 %v2164
      %v2237 = vunpack.c.l.b16 %v2165
      %v2238 = vunpack.c.l.b16 %v2166
      %v2239 = vpack.c.b16 %v2236, %v2235
      %v2240 = vpack.c.b16 %v2238, %v2237
      %v2244 = vsel %vm599, %v2203, 0
      %v2247 = vsel %vm599, %v2211, 0
      %v2250 = vsel %vm599, %v2219, 0
      %v2253 = vsel %vm599, %v2227, 0
      %v2256 = vsel %vm599, %v2230, 0
      %2258 = vmatprep.subr.bf16.mxu0 0
      %2259 = vmatpush1.bf16.msra.mxu0 0
      %2260 = vmatprep.subr.bf16.mxu0 0
      %2261 = vmatpush1.bf16.msra.mxu0 0
      %2262 = vmatprep.subr.bf16.mxu0 0
      %2263 = vmatpush1.bf16.msra.mxu0 0
      %2264 = vmatprep.subr.bf16.mxu0 0
      %2265 = vmatpush1.bf16.msra.mxu0 0
      %2266 = vmatprep.subr.bf16.mxu0 0
      %2267 = vmatpush1.bf16.msra.mxu0 0
      %2268 = vmatprep.subr.bf16.mxu0 0
      %2269 = vmatpush1.bf16.msra.mxu0 0
      %2270 = vmatprep.subr.bf16.mxu0 0
      %2271 = vmatpush1.bf16.msra.mxu0 %v2240
      %2272 = vmatprep.subr.bf16.mxu0 0
      %2273 = vmatpush1.bf16.msra.mxu0 %v2239
      %2274 = vmatprep.subr.bf16.mxu0 0
      %2275 = vmatpush2.bf16.msra.mxu0 0
      %2276 = vmatprep.subr.bf16.mxu0 0
      %2277 = vmatpush2.bf16.msra.mxu0 0
      %2278 = vmatprep.subr.bf16.mxu0 0
      %2279 = vmatpush2.bf16.msra.mxu0 0
      %2280 = vmatprep.subr.bf16.mxu0 0
      %2281 = vmatpush2.bf16.msra.mxu0 0
      %2282 = vmatprep.subr.bf16.mxu0 0
      %2283 = vmatpush2.bf16.msra.mxu0 0
      %2284 = vmatprep.subr.bf16.mxu0 0
      %2285 = vmatpush2.bf16.msra.mxu0 0
      %2286 = vmatprep.subr.bf16.mxu0 0
      %2287 = vmatpush2.bf16.msra.mxu0 0
      %2288 = vmatprep.subr.bf16.mxu0 0
      %2289 = vmatpush2.bf16.msra.mxu0 0
      %2290 = vmatprep.mubr.bf16.mxu0 0
      %2291 = vmatmul.mubr.bf16.gmra.mxu0 %v2244
      %v2292 = vpop.f32.mrf.mxu0
      %v2293 = vadd.f32 0.0, %v2292
      %v2294 = vpop.f32.mrf.mxu0
      %v2295 = vpop.f32.mrf.mxu0
      %v2296 = vadd.f32 0.0, %v2295
      %v2297 = vpop.f32.mrf.mxu0
      %2298 = vmatprep.mubr.bf16.mxu0 0
      %2299 = vmatmul.mubr.bf16.gmra.mxu0 %v2247
      %v2300 = vpop.f32.mrf.mxu0
      %v2301 = vadd.f32 0.0, %v2300
      %v2302 = vpop.f32.mrf.mxu0
      %v2303 = vpop.f32.mrf.mxu0
      %v2304 = vadd.f32 0.0, %v2303
      %v2305 = vpop.f32.mrf.mxu0
      %2306 = vmatprep.mubr.bf16.mxu0 0
      %2307 = vmatmul.mubr.bf16.gmra.mxu0 %v2250
      %v2308 = vpop.f32.mrf.mxu0
      %v2309 = vadd.f32 0.0, %v2308
      %v2310 = vpop.f32.mrf.mxu0
      %v2311 = vpop.f32.mrf.mxu0
      %v2312 = vadd.f32 0.0, %v2311
      %v2313 = vpop.f32.mrf.mxu0
      %2314 = vmatprep.mubr.bf16.mxu0 0
      %2315 = vmatmul.mubr.bf16.gmra.mxu0 %v2253
      %v2316 = vpop.f32.mrf.mxu0
      %v2317 = vadd.f32 0.0, %v2316
      %v2318 = vpop.f32.mrf.mxu0
      %v2319 = vpop.f32.mrf.mxu0
      %v2320 = vadd.f32 0.0, %v2319
      %v2321 = vpop.f32.mrf.mxu0
      %2322 = vmatprep.mubr.bf16.mxu0 0
      %2323 = vmatmul.mubr.bf16.gmra.mxu0 %v2256
      %v2324 = vpop.f32.mrf.mxu0
      %v2325 = vadd.f32 0.0, %v2324
      %v2326 = vpop.f32.mrf.mxu0
      %v2327 = vpop.f32.mrf.mxu0
      %v2328 = vpop.f32.mrf.mxu0
      %2329 = vdwg.mxu0
      %v2330 = vadd.f32 %v2115, %v2293
      %v2331 = vadd.f32 %v2118, %v2296
      %v2332 = vadd.f32 %v2123, %v2301
      %v2333 = vadd.f32 %v2126, %v2304
      %v2334 = vadd.f32 %v2131, %v2309
      %v2335 = vadd.f32 %v2134, %v2312
      %v2336 = vadd.f32 %v2139, %v2317
      %v2337 = vadd.f32 %v2142, %v2320
      %v2338 = vadd.f32 %v2147, %v2325
      %vm2339 = vcmp.ne.s32.totalorder %v1014, 0
      %vm2340 = vcmp.ne.s32.totalorder %v1015, 0
      %vm2341 = vcmp.ne.s32.totalorder %v1016, 0
      %vm2342 = vcmp.ne.s32.totalorder %v1017, 0
      %vm2343 = vcmp.ne.s32.totalorder %v1018, 0
      %vm2344 = vcmp.ne.s32.totalorder %v1019, 0
      %vm2345 = vcmp.ne.s32.totalorder %v1020, 0
      %vm2346 = vcmp.ne.s32.totalorder %v1021, 0
      %vm2347 = vcmp.ne.s32.totalorder %v1022, 0
      %v2348 = vsel %vm2339, 1, 0
      %v2349 = vsel %vm2340, 1, 0
      %v2350 = vsel %vm2341, 1, 0
      %v2351 = vsel %vm2342, 1, 0
      %v2352 = vsel %vm2343, 1, 0
      %v2353 = vsel %vm2344, 1, 0
      %v2354 = vsel %vm2345, 1, 0
      %v2355 = vsel %vm2346, 1, 0
      %v2356 = vsel %vm2347, 1, 0
      %vm2357 = vcmp.eq.s32.totalorder %v2348, 1
      %vm2358 = vcmp.eq.s32.totalorder %v2349, 1
      %vm2359 = vcmp.eq.s32.totalorder %v2350, 1
      %vm2360 = vcmp.eq.s32.totalorder %v2351, 1
      %vm2361 = vcmp.eq.s32.totalorder %v2352, 1
      %vm2362 = vcmp.eq.s32.totalorder %v2353, 1
      %vm2363 = vcmp.eq.s32.totalorder %v2354, 1
      %vm2364 = vcmp.eq.s32.totalorder %v2355, 1
      %vm2365 = vcmp.eq.s32.totalorder %v2356, 1
      %v2366 = vsel %vm2357, %v1548, 0.0
      %v2367 = vsel %vm2358, %v1549, 0.0
      %v2368 = vsel %vm2359, %v1550, 0.0
      %v2369 = vsel %vm2360, %v1551, 0.0
      %v2370 = vsel %vm2361, %v1552, 0.0
      %v2371 = vsel %vm2362, %v1553, 0.0
      %v2372 = vsel %vm2363, %v1554, 0.0
      %v2373 = vsel %vm2364, %v1555, 0.0
      %v2374 = vsel %vm2365, %v1556, 0.0
      %v2375 = vadd.f32 %v1870, %v2366
      %v2376 = vadd.f32 %v1871, %v2367
      %v2377 = vadd.f32 %v1872, %v2368
      %v2378 = vadd.f32 %v1873, %v2369
      %v2379 = vadd.f32 %v1874, %v2370
      %v2380 = vadd.f32 %v1875, %v2371
      %v2381 = vadd.f32 %v1876, %v2372
      %v2382 = vadd.f32 %v1877, %v2373
      %v2383 = vadd.f32 %v1878, %v2374
      %vm2384 = vcmp.ne.s32.totalorder %v1014, 7
      %vm2385 = vcmp.ne.s32.totalorder %v1015, 7
      %vm2386 = vcmp.ne.s32.totalorder %v1016, 7
      %vm2387 = vcmp.ne.s32.totalorder %v1017, 7
      %vm2388 = vcmp.ne.s32.totalorder %v1018, 7
      %vm2389 = vcmp.ne.s32.totalorder %v1019, 7
      %vm2390 = vcmp.ne.s32.totalorder %v1020, 7
      %vm2391 = vcmp.ne.s32.totalorder %v1021, 7
      %vm2392 = vcmp.ne.s32.totalorder %v1022, 7
      %v2393 = vsel %vm2384, 1, 0
      %v2394 = vsel %vm2385, 1, 0
      %v2395 = vsel %vm2386, 1, 0
      %v2396 = vsel %vm2387, 1, 0
      %v2397 = vsel %vm2388, 1, 0
      %v2398 = vsel %vm2389, 1, 0
      %v2399 = vsel %vm2390, 1, 0
      %v2400 = vsel %vm2391, 1, 0
      %v2401 = vsel %vm2392, 1, 0
      %vm2402 = vcmp.eq.s32.totalorder %v2393, 1
      %vm2403 = vcmp.eq.s32.totalorder %v2394, 1
      %vm2404 = vcmp.eq.s32.totalorder %v2395, 1
      %vm2405 = vcmp.eq.s32.totalorder %v2396, 1
      %vm2406 = vcmp.eq.s32.totalorder %v2397, 1
      %vm2407 = vcmp.eq.s32.totalorder %v2398, 1
      %vm2408 = vcmp.eq.s32.totalorder %v2399, 1
      %vm2409 = vcmp.eq.s32.totalorder %v2400, 1
      %vm2410 = vcmp.eq.s32.totalorder %v2401, 1
      %v2411 = vsel %vm2402, %v2330, 0.0
      %v2412 = vsel %vm2403, %v2331, 0.0
      %v2413 = vsel %vm2404, %v2332, 0.0
      %v2414 = vsel %vm2405, %v2333, 0.0
      %v2415 = vsel %vm2406, %v2334, 0.0
      %v2416 = vsel %vm2407, %v2335, 0.0
      %v2417 = vsel %vm2408, %v2336, 0.0
      %v2418 = vsel %vm2409, %v2337, 0.0
      %v2419 = vsel %vm2410, %v2338, 0.0
      %v2420 = vadd.f32 %v2375, %v2411
      %v2421 = vadd.f32 %v2376, %v2412
      %v2422 = vadd.f32 %v2377, %v2413
      %v2423 = vadd.f32 %v2378, %v2414
      %v2424 = vadd.f32 %v2379, %v2415
      %v2425 = vadd.f32 %v2380, %v2416
      %v2426 = vadd.f32 %v2381, %v2417
      %v2427 = vadd.f32 %v2382, %v2418
      %v2428 = vadd.f32 %v2383, %v2419
      %v2429 = vld [vmem:[%s4] sm:$0x1]
      %v2431 = vlaneseq
      %v2432 = vshrl.u32 %v2431, 7
      %v2433 = vsub.s32 0, %v2432
      %v2434 = vrot.slane %v2429, %v2433
      %v2436 = vadd.f32 %v2420, %v2434
      %v2437 = vadd.f32 %v2421, %v2434
      %v2438 = vadd.f32 %v2422, %v2434
      %v2439 = vadd.f32 %v2423, %v2434
      %v2440 = vadd.f32 %v2424, %v2434
      %v2441 = vadd.f32 %v2425, %v2434
      %v2442 = vadd.f32 %v2426, %v2434
      %v2443 = vadd.f32 %v2427, %v2434
      %v2444 = vadd.f32 %v2428, %v2434
      %v2445 = vmax.f32 %v2436, 0.0
      %v2446 = vmax.f32 %v2437, 0.0
      %v2447 = vmax.f32 %v2438, 0.0
      %v2448 = vmax.f32 %v2439, 0.0
      %v2449 = vmax.f32 %v2440, 0.0
      %v2450 = vmax.f32 %v2441, 0.0
      %v2451 = vmax.f32 %v2442, 0.0
      %v2452 = vmax.f32 %v2443, 0.0
      %v2453 = vmax.f32 %v2444, 0.0
      %v2454 = vmax.f32 %v2445, %v2446
      %v2455 = vmax.f32 %v2446, %v2447
      %v2456 = vmax.f32 %v2447, %v2448
      %v2457 = vmax.f32 %v2448, %v2449
      %v2458 = vmax.f32 %v2449, %v2450
      %v2459 = vmax.f32 %v2450, %v2451
      %v2460 = vmax.f32 %v2451, %v2452
      %v2461 = vmax.f32 %v2452, %v2453
      %vm2462 = vcmask 523264
      %2463 = vst.msk [vmem:[#allocation4] sm:$0xff] %vm2462, %v2454
      %2464 = vst.msk [vmem:[#allocation4 + $0x8] sm:$0xff] %vm2462, %v2455
      %2465 = vst.msk [vmem:[#allocation4 + $0x10] sm:$0xff] %vm2462, %v2456
      %2466 = vst.msk [vmem:[#allocation4 + $0x18] sm:$0xff] %vm2462, %v2457
      %2467 = vst.msk [vmem:[#allocation4 + $0x20] sm:$0xff] %vm2462, %v2458
      %2468 = vst.msk [vmem:[#allocation4 + $0x28] sm:$0xff] %vm2462, %v2459
      %2469 = vst.msk [vmem:[#allocation4 + $0x30] sm:$0xff] %vm2462, %v2460
      %2470 = vst.msk [vmem:[#allocation4 + $0x38] sm:$0xff] %vm2462, %v2461
      %v2471 = vld [vmem:[#allocation4] ss:$2 sm:$0xf]
      %s2472 = scalar_lea.vmem [#allocation4], 1
      %v2473 = vld [vmem:[%s2472] ss:$2 sm:$0xf]
      %v2474 = vmax.f32 %v2471, %v2473
      %v2475 = vpack.c.bf16 %v2474, %v2474
      %v2477 = vunpack.c.l.b16 %v2475
      %v2478 = vpack.c.b16 %v2477, %v2477
      %v2479 = vrot.slane %v2478, 6
      %vm2481 = vcmask 519170
      %2482 = vst.msk [vmem:[#allocation3 + $0x4] sm:$0xc] %vm2481, %v2479
      %s2483 = scalar_lea.vmem [#allocation4], 16
      %v2484 = vld [vmem:[%s2483] ss:$2 sm:$0xf]
      %s2485 = scalar_lea.vmem [#allocation4], 17
      %v2486 = vld [vmem:[%s2485] ss:$2 sm:$0xf]
      %v2487 = vmax.f32 %v2484, %v2486
      %v2488 = vpack.c.bf16 %v2487, %v2487
      %vm2489 = vcmask 517120
      %2490 = vst.msk [vmem:[#allocation3 + $0x8] sm:$0x3] %vm2489, %v2488
      %s2491 = scalar_lea.vmem [#allocation4], 32
      %v2492 = vld [vmem:[%s2491] ss:$2 sm:$0xf]
      %s2493 = scalar_lea.vmem [#allocation4], 33
      %v2494 = vld [vmem:[%s2493] ss:$2 sm:$0xf]
      %v2495 = vmax.f32 %v2492, %v2494
      %v2496 = vpack.c.bf16 %v2495, %v2495
      %v2498 = vunpack.c.l.b16 %v2496
      %v2499 = vpack.c.b16 %v2498, %v2498
      %v2500 = vrot.slane %v2499, 6
      %2502 = vst.msk [vmem:[#allocation3 + $0x8] sm:$0xc] %vm2481, %v2500
      %s2503 = scalar_lea.vmem [#allocation4], 48
      %v2504 = vld [vmem:[%s2503] ss:$2 sm:$0xf]
      %s2505 = scalar_lea.vmem [#allocation4], 49
      %v2506 = vld [vmem:[%s2505] ss:$2 sm:$0xf]
      %v2507 = vmax.f32 %v2504, %v2506
      %v2508 = vpack.c.bf16 %v2507, %v2507
      %2509 = vst.msk [vmem:[#allocation3 + $0xc] sm:$0x3] %vm2489, %v2508
      %vm2510 = vcmp.lt.s32.totalorder %v906, 0
      %v2511 = vsub.s32 0, %v906
      %v2512 = vsel %vm2510, %v2511, %v906
      %v2513 = vshrl.u32 %v2512, 2
      %v2514 = vand.u32 %v2512, 3
      %v2515 = vsub.s32 0, %v2514
      %v2516 = vsel %vm2510, %v2515, %v2514
      %vm2517 = vcmp.lt.s32.totalorder %v907, 0
      %v2518 = vsub.s32 0, %v907
      %v2519 = vsel %vm2517, %v2518, %v907
      %v2520 = vshrl.u32 %v2519, 2
      %v2521 = vand.u32 %v2519, 3
      %v2522 = vsub.s32 0, %v2521
      %v2523 = vsel %vm2517, %v2522, %v2521
      %vm2524 = vcmp.lt.s32.totalorder %v908, 0
      %v2525 = vsub.s32 0, %v908
      %v2526 = vsel %vm2524, %v2525, %v908
      %v2527 = vshrl.u32 %v2526, 2
      %v2528 = vand.u32 %v2526, 3
      %v2529 = vsub.s32 0, %v2528
      %v2530 = vsel %vm2524, %v2529, %v2528
      %vm2531 = vcmp.ne.s32.totalorder %v2516, 0
      %vm2532 = vcmp.ne.s32.totalorder %v2523, 0
      %vm2533 = vcmp.ne.s32.totalorder %v2530, 0
      %vm2534 = vcmp.lt.s32.totalorder %v2516, 0
      %vm2535 = vcmp.lt.s32.totalorder %v2523, 0
      %vm2536 = vcmp.lt.s32.totalorder %v2530, 0
      %vm2537 = vmand %vm2534, %vm2531
      %vm2538 = vmand %vm2535, %vm2532
      %vm2539 = vmand %vm2536, %vm2533
      %v2540 = vadd.s32 %v2516, 4
      %v2541 = vadd.s32 %v2523, 4
      %v2542 = vadd.s32 %v2530, 4
      %v2543 = vsel %vm2537, %v2540, %v2516
      %v2544 = vsel %vm2538, %v2541, %v2523
      %v2545 = vsel %vm2539, %v2542, %v2530
      %v2546 = vld [vmem:[#allocation3] sm:$0xe]
      %v2547 = vld [vmem:[#allocation3 + $0x4] sm:$0xf]
      %v2548 = vld [vmem:[#allocation3 + $0x8] sm:$0xf]
      %v2549 = vld [vmem:[#allocation3 + $0xc] sm:$0x3]
      %v2550 = vld [vmem:[%s5] sm:$0xf]
      %v2551 = vld [vmem:[%s5 + $0x4] sm:$0xf]
      %v2552 = vld [vmem:[%s5 + $0x8] sm:$0xf]
      %v2553 = vld [vmem:[%s5 + $0xc] sm:$0xf]
      %v2554 = vld [vmem:[%s5 + $0x10] sm:$0xf]
      %v2555 = vld [vmem:[%s5 + $0x14] sm:$0xf]
      %v2556 = vld [vmem:[%s5 + $0x18] sm:$0xf]
      %v2557 = vld [vmem:[%s5 + $0x1c] sm:$0xf]
      %v2558 = vld [vmem:[#allocation3] sm:$0x8]
      %v2559 = vld [vmem:[#allocation3 + $0xc] sm:$0xf]
      %s2560 = scalar_lea.vmem %s5, 96
      %v2561 = vld [vmem:[%s2560] sm:$0xf]
      %v2562 = vld [vmem:[%s2560 + $0x4] sm:$0xf]
      %v2563 = vld [vmem:[%s2560 + $0x8] sm:$0xf]
      %v2564 = vld [vmem:[%s2560 + $0xc] sm:$0xf]
      %v2565 = vld [vmem:[%s2560 + $0x10] sm:$0xf]
      %v2566 = vld [vmem:[%s2560 + $0x14] sm:$0xf]
      %v2567 = vld [vmem:[%s2560 + $0x18] sm:$0xf]
      %v2568 = vld [vmem:[%s2560 + $0x1c] sm:$0xf]
      %v2573 = vunpack.c.l.b16 %v2558
      %v2574 = vunpack.c.l.b16 %v2547
      %v2575 = vunpack.c.l.b16 %v2548
      %v2576 = vunpack.c.l.b16 %v2559
      %v2577 = vpack.c.b16 %v2574, %v2573
      %v2578 = vpack.c.b16 %v2576, %v2575
      %v2580 = vshrl.u32 %v2577, 16
      %v2582 = vrot.slane %v2580, 3
      %v2583 = vshll.u32 %v2577, 16
      %v2585 = vrot.slane %v2583, 4
      %v2586 = vor.u32 %v2582, %v2585
      %v2588 = vshrl.u32 %v2578, 16
      %v2590 = vrot.slane %v2588, 3
      %v2591 = vshll.u32 %v2578, 16
      %v2593 = vrot.slane %v2591, 4
      %v2594 = vor.u32 %v2590, %v2593
      %v2595 = vsel %vm1069, %v2586, %v2594
      %v2604 = vunpack.c.l.b16 %v2561
      %v2605 = vunpack.c.l.b16 %v2562
      %v2606 = vunpack.c.l.b16 %v2563
      %v2607 = vunpack.c.l.b16 %v2564
      %v2608 = vunpack.c.l.b16 %v2565
      %v2609 = vunpack.c.l.b16 %v2566
      %v2610 = vunpack.c.l.b16 %v2567
      %v2611 = vunpack.c.l.b16 %v2568
      %v2612 = vpack.c.b16 %v2605, %v2604
      %v2613 = vpack.c.b16 %v2607, %v2606
      %v2614 = vpack.c.b16 %v2609, %v2608
      %v2615 = vpack.c.b16 %v2611, %v2610
      %v2621 = vsel %vm2462, %v2595, 0
      %v2624 = vsel %vm2462, %v2594, 0
      %2626 = vmatprep.subr.bf16.mxu0 0
      %2627 = vmatpush1.bf16.msra.mxu0 0
      %2628 = vmatprep.subr.bf16.mxu0 0
      %2629 = vmatpush1.bf16.msra.mxu0 0
      %2630 = vmatprep.subr.bf16.mxu0 0
      %2631 = vmatpush1.bf16.msra.mxu0 0
      %2632 = vmatprep.subr.bf16.mxu0 0
      %2633 = vmatpush1.bf16.msra.mxu0 0
      %2634 = vmatprep.subr.bf16.mxu0 0
      %2635 = vmatpush1.bf16.msra.mxu0 %v2615
      %2636 = vmatprep.subr.bf16.mxu0 0
      %2637 = vmatpush1.bf16.msra.mxu0 %v2614
      %2638 = vmatprep.subr.bf16.mxu0 0
      %2639 = vmatpush1.bf16.msra.mxu0 %v2613
      %2640 = vmatprep.subr.bf16.mxu0 0
      %2641 = vmatpush1.bf16.msra.mxu0 %v2612
      %2642 = vmatprep.subr.bf16.mxu0 0
      %2643 = vmatpush2.bf16.msra.mxu0 0
      %2644 = vmatprep.subr.bf16.mxu0 0
      %2645 = vmatpush2.bf16.msra.mxu0 0
      %2646 = vmatprep.subr.bf16.mxu0 0
      %2647 = vmatpush2.bf16.msra.mxu0 0
      %2648 = vmatprep.subr.bf16.mxu0 0
      %2649 = vmatpush2.bf16.msra.mxu0 0
      %2650 = vmatprep.subr.bf16.mxu0 0
      %2651 = vmatpush2.bf16.msra.mxu0 0
      %2652 = vmatprep.subr.bf16.mxu0 0
      %2653 = vmatpush2.bf16.msra.mxu0 0
      %2654 = vmatprep.subr.bf16.mxu0 0
      %2655 = vmatpush2.bf16.msra.mxu0 0
      %2656 = vmatprep.subr.bf16.mxu0 0
      %2657 = vmatpush2.bf16.msra.mxu0 0
      %2658 = vmatprep.mubr.bf16.mxu0 0
      %2659 = vmatmul.mubr.bf16.gmra.mxu0 %v2621
      %v2660 = vpop.f32.mrf.mxu0
      %v2661 = vadd.f32 0.0, %v2660
      %v2662 = vpop.f32.mrf.mxu0
      %v2663 = vpop.f32.mrf.mxu0
      %v2664 = vadd.f32 0.0, %v2663
      %v2665 = vpop.f32.mrf.mxu0
      %2666 = vmatprep.mubr.bf16.mxu0 0
      %2667 = vmatmul.mubr.bf16.gmra.mxu0 %v2624
      %v2668 = vpop.f32.mrf.mxu0
      %v2669 = vadd.f32 0.0, %v2668
      %v2670 = vpop.f32.mrf.mxu0
      %v2671 = vpop.f32.mrf.mxu0
      %v2672 = vpop.f32.mrf.mxu0
      %2673 = vdwg.mxu0
      %v2676 = vunpack.c.l.b16 %v2546
      %v2677 = vunpack.c.l.b16 %v2549
      %v2678 = vpack.c.b16 %v2574, %v2676
      %v2679 = vpack.c.b16 %v2677, %v2575
      %vm2680 = vsmask.f32 6400
      %v2682 = vshrl.u32 %v2678, 16
      %v2684 = vrot.slane %v2682, 1
      %v2685 = vshll.u32 %v2678, 16
      %v2687 = vrot.slane %v2685, 2
      %v2688 = vor.u32 %v2684, %v2687
      %v2690 = vshrl.u32 %v2679, 16
      %v2692 = vrot.slane %v2690, 1
      %v2693 = vshll.u32 %v2679, 16
      %v2695 = vrot.slane %v2693, 2
      %v2696 = vor.u32 %v2692, %v2695
      %v2697 = vsel %vm2680, %v2688, %v2696
      %v2706 = vunpack.c.l.b16 %v2550
      %v2707 = vunpack.c.l.b16 %v2551
      %v2708 = vunpack.c.l.b16 %v2552
      %v2709 = vunpack.c.l.b16 %v2553
      %v2710 = vunpack.c.l.b16 %v2554
      %v2711 = vunpack.c.l.b16 %v2555
      %v2712 = vunpack.c.l.b16 %v2556
      %v2713 = vunpack.c.l.b16 %v2557
      %v2714 = vpack.c.b16 %v2707, %v2706
      %v2715 = vpack.c.b16 %v2709, %v2708
      %v2716 = vpack.c.b16 %v2711, %v2710
      %v2717 = vpack.c.b16 %v2713, %v2712
      %v2723 = vsel %vm2462, %v2697, 0
      %v2726 = vsel %vm2462, %v2696, 0
      %2728 = vmatprep.subr.bf16.mxu0 0
      %2729 = vmatpush1.bf16.msra.mxu0 0
      %2730 = vmatprep.subr.bf16.mxu0 0
      %2731 = vmatpush1.bf16.msra.mxu0 0
      %2732 = vmatprep.subr.bf16.mxu0 0
      %2733 = vmatpush1.bf16.msra.mxu0 0
      %2734 = vmatprep.subr.bf16.mxu0 0
      %2735 = vmatpush1.bf16.msra.mxu0 0
      %2736 = vmatprep.subr.bf16.mxu0 0
      %2737 = vmatpush1.bf16.msra.mxu0 %v2717
      %2738 = vmatprep.subr.bf16.mxu0 0
      %2739 = vmatpush1.bf16.msra.mxu0 %v2716
      %2740 = vmatprep.subr.bf16.mxu0 0
      %2741 = vmatpush1.bf16.msra.mxu0 %v2715
      %2742 = vmatprep.subr.bf16.mxu0 0
      %2743 = vmatpush1.bf16.msra.mxu0 %v2714
      %2744 = vmatprep.subr.bf16.mxu0 0
      %2745 = vmatpush2.bf16.msra.mxu0 0
      %2746 = vmatprep.subr.bf16.mxu0 0
      %2747 = vmatpush2.bf16.msra.mxu0 0
      %2748 = vmatprep.subr.bf16.mxu0 0
      %2749 = vmatpush2.bf16.msra.mxu0 0
      %2750 = vmatprep.subr.bf16.mxu0 0
      %2751 = vmatpush2.bf16.msra.mxu0 0
      %2752 = vmatprep.subr.bf16.mxu0 0
      %2753 = vmatpush2.bf16.msra.mxu0 0
      %2754 = vmatprep.subr.bf16.mxu0 0
      %2755 = vmatpush2.bf16.msra.mxu0 0
      %2756 = vmatprep.subr.bf16.mxu0 0
      %2757 = vmatpush2.bf16.msra.mxu0 0
      %2758 = vmatprep.subr.bf16.mxu0 0
      %2759 = vmatpush2.bf16.msra.mxu0 0
      %2760 = vmatprep.mubr.bf16.mxu0 0
      %2761 = vmatmul.mubr.bf16.gmra.mxu0 %v2723
      %v2762 = vpop.f32.mrf.mxu0
      %v2763 = vadd.f32 %v2661, %v2762
      %v2764 = vpop.f32.mrf.mxu0
      %v2765 = vpop.f32.mrf.mxu0
      %v2766 = vadd.f32 %v2664, %v2765
      %v2767 = vpop.f32.mrf.mxu0
      %2768 = vmatprep.mubr.bf16.mxu0 0
      %2769 = vmatmul.mubr.bf16.gmra.mxu0 %v2726
      %v2770 = vpop.f32.mrf.mxu0
      %v2771 = vadd.f32 %v2669, %v2770
      %v2772 = vpop.f32.mrf.mxu0
      %v2773 = vpop.f32.mrf.mxu0
      %v2774 = vpop.f32.mrf.mxu0
      %2775 = vdwg.mxu0
      %v2776 = vld [vmem:[#allocation3 + $0x4] sm:$0xe]
      %v2777 = vld [vmem:[#allocation3 + $0x8] sm:$0xf]
      %v2778 = vld [vmem:[#allocation3 + $0xc] sm:$0xf]
      %v2779 = vld [vmem:[#allocation3 + $0x10] sm:$0x3]
      %s2780 = scalar_lea.vmem %s5, 192
      %v2781 = vld [vmem:[%s2780] sm:$0xf]
      %v2782 = vld [vmem:[%s2780 + $0x4] sm:$0xf]
      %v2783 = vld [vmem:[%s2780 + $0x8] sm:$0xf]
      %v2784 = vld [vmem:[%s2780 + $0xc] sm:$0xf]
      %v2785 = vld [vmem:[%s2780 + $0x10] sm:$0xf]
      %v2786 = vld [vmem:[%s2780 + $0x14] sm:$0xf]
      %v2787 = vld [vmem:[%s2780 + $0x18] sm:$0xf]
      %v2788 = vld [vmem:[%s2780 + $0x1c] sm:$0xf]
      %v2793 = vunpack.c.l.b16 %v2776
      %v2794 = vunpack.c.l.b16 %v2777
      %v2795 = vunpack.c.l.b16 %v2778
      %v2796 = vunpack.c.l.b16 %v2779
      %v2797 = vpack.c.b16 %v2794, %v2793
      %v2798 = vpack.c.b16 %v2796, %v2795
      %v2800 = vshrl.u32 %v2797, 16
      %v2802 = vrot.slane %v2800, 1
      %v2803 = vshll.u32 %v2797, 16
      %v2805 = vrot.slane %v2803, 2
      %v2806 = vor.u32 %v2802, %v2805
      %v2808 = vshrl.u32 %v2798, 16
      %v2810 = vrot.slane %v2808, 1
      %v2811 = vshll.u32 %v2798, 16
      %v2813 = vrot.slane %v2811, 2
      %v2814 = vor.u32 %v2810, %v2813
      %v2815 = vsel %vm2680, %v2806, %v2814
      %v2824 = vunpack.c.l.b16 %v2781
      %v2825 = vunpack.c.l.b16 %v2782
      %v2826 = vunpack.c.l.b16 %v2783
      %v2827 = vunpack.c.l.b16 %v2784
      %v2828 = vunpack.c.l.b16 %v2785
      %v2829 = vunpack.c.l.b16 %v2786
      %v2830 = vunpack.c.l.b16 %v2787
      %v2831 = vunpack.c.l.b16 %v2788
      %v2832 = vpack.c.b16 %v2825, %v2824
      %v2833 = vpack.c.b16 %v2827, %v2826
      %v2834 = vpack.c.b16 %v2829, %v2828
      %v2835 = vpack.c.b16 %v2831, %v2830
      %v2841 = vsel %vm2462, %v2815, 0
      %v2844 = vsel %vm2462, %v2814, 0
      %2846 = vmatprep.subr.bf16.mxu0 0
      %2847 = vmatpush1.bf16.msra.mxu0 0
      %2848 = vmatprep.subr.bf16.mxu0 0
      %2849 = vmatpush1.bf16.msra.mxu0 0
      %2850 = vmatprep.subr.bf16.mxu0 0
      %2851 = vmatpush1.bf16.msra.mxu0 0
      %2852 = vmatprep.subr.bf16.mxu0 0
      %2853 = vmatpush1.bf16.msra.mxu0 0
      %2854 = vmatprep.subr.bf16.mxu0 0
      %2855 = vmatpush1.bf16.msra.mxu0 %v2835
      %2856 = vmatprep.subr.bf16.mxu0 0
      %2857 = vmatpush1.bf16.msra.mxu0 %v2834
      %2858 = vmatprep.subr.bf16.mxu0 0
      %2859 = vmatpush1.bf16.msra.mxu0 %v2833
      %2860 = vmatprep.subr.bf16.mxu0 0
      %2861 = vmatpush1.bf16.msra.mxu0 %v2832
      %2862 = vmatprep.subr.bf16.mxu0 0
      %2863 = vmatpush2.bf16.msra.mxu0 0
      %2864 = vmatprep.subr.bf16.mxu0 0
      %2865 = vmatpush2.bf16.msra.mxu0 0
      %2866 = vmatprep.subr.bf16.mxu0 0
      %2867 = vmatpush2.bf16.msra.mxu0 0
      %2868 = vmatprep.subr.bf16.mxu0 0
      %2869 = vmatpush2.bf16.msra.mxu0 0
      %2870 = vmatprep.subr.bf16.mxu0 0
      %2871 = vmatpush2.bf16.msra.mxu0 0
      %2872 = vmatprep.subr.bf16.mxu0 0
      %2873 = vmatpush2.bf16.msra.mxu0 0
      %2874 = vmatprep.subr.bf16.mxu0 0
      %2875 = vmatpush2.bf16.msra.mxu0 0
      %2876 = vmatprep.subr.bf16.mxu0 0
      %2877 = vmatpush2.bf16.msra.mxu0 0
      %2878 = vmatprep.mubr.bf16.mxu0 0
      %2879 = vmatmul.mubr.bf16.gmra.mxu0 %v2841
      %v2880 = vpop.f32.mrf.mxu0
      %v2881 = vadd.f32 0.0, %v2880
      %v2882 = vpop.f32.mrf.mxu0
      %v2883 = vpop.f32.mrf.mxu0
      %v2884 = vadd.f32 0.0, %v2883
      %v2885 = vpop.f32.mrf.mxu0
      %2886 = vmatprep.mubr.bf16.mxu0 0
      %2887 = vmatmul.mubr.bf16.gmra.mxu0 %v2844
      %v2888 = vpop.f32.mrf.mxu0
      %v2889 = vadd.f32 0.0, %v2888
      %v2890 = vpop.f32.mrf.mxu0
      %v2891 = vpop.f32.mrf.mxu0
      %v2892 = vpop.f32.mrf.mxu0
      %2893 = vdwg.mxu0
      %v2894 = vadd.f32 %v2763, %v2881
      %v2895 = vadd.f32 %v2766, %v2884
      %v2896 = vadd.f32 %v2771, %v2889
      %v2897 = vld [vmem:[#allocation3] sm:$0xc]
      %s2898 = scalar_lea.vmem %s5, 32
      %v2899 = vld [vmem:[%s2898] sm:$0xf]
      %v2900 = vld [vmem:[%s2898 + $0x4] sm:$0xf]
      %v2901 = vld [vmem:[%s2898 + $0x8] sm:$0xf]
      %v2902 = vld [vmem:[%s2898 + $0xc] sm:$0xf]
      %v2903 = vld [vmem:[%s2898 + $0x10] sm:$0xf]
      %v2904 = vld [vmem:[%s2898 + $0x14] sm:$0xf]
      %v2905 = vld [vmem:[%s2898 + $0x18] sm:$0xf]
      %v2906 = vld [vmem:[%s2898 + $0x1c] sm:$0xf]
      %s2907 = scalar_lea.vmem %s5, 128
      %v2908 = vld [vmem:[%s2907] sm:$0xf]
      %v2909 = vld [vmem:[%s2907 + $0x4] sm:$0xf]
      %v2910 = vld [vmem:[%s2907 + $0x8] sm:$0xf]
      %v2911 = vld [vmem:[%s2907 + $0xc] sm:$0xf]
      %v2912 = vld [vmem:[%s2907 + $0x10] sm:$0xf]
      %v2913 = vld [vmem:[%s2907 + $0x14] sm:$0xf]
      %v2914 = vld [vmem:[%s2907 + $0x18] sm:$0xf]
      %v2915 = vld [vmem:[%s2907 + $0x1c] sm:$0xf]
      %v2916 = vpack.c.b16 %v2575, %v2574
      %v2917 = vpack.c.b16 %v2576, %v2576
      %v2926 = vunpack.c.l.b16 %v2908
      %v2927 = vunpack.c.l.b16 %v2909
      %v2928 = vunpack.c.l.b16 %v2910
      %v2929 = vunpack.c.l.b16 %v2911
      %v2930 = vunpack.c.l.b16 %v2912
      %v2931 = vunpack.c.l.b16 %v2913
      %v2932 = vunpack.c.l.b16 %v2914
      %v2933 = vunpack.c.l.b16 %v2915
      %v2934 = vpack.c.b16 %v2927, %v2926
      %v2935 = vpack.c.b16 %v2929, %v2928
      %v2936 = vpack.c.b16 %v2931, %v2930
      %v2937 = vpack.c.b16 %v2933, %v2932
      %v2943 = vsel %vm2462, %v2916, 0
      %v2946 = vsel %vm2462, %v2917, 0
      %2948 = vmatprep.subr.bf16.mxu0 0
      %2949 = vmatpush1.bf16.msra.mxu0 0
      %2950 = vmatprep.subr.bf16.mxu0 0
      %2951 = vmatpush1.bf16.msra.mxu0 0
      %2952 = vmatprep.subr.bf16.mxu0 0
      %2953 = vmatpush1.bf16.msra.mxu0 0
      %2954 = vmatprep.subr.bf16.mxu0 0
      %2955 = vmatpush1.bf16.msra.mxu0 0
      %2956 = vmatprep.subr.bf16.mxu0 0
      %2957 = vmatpush1.bf16.msra.mxu0 %v2937
      %2958 = vmatprep.subr.bf16.mxu0 0
      %2959 = vmatpush1.bf16.msra.mxu0 %v2936
      %2960 = vmatprep.subr.bf16.mxu0 0
      %2961 = vmatpush1.bf16.msra.mxu0 %v2935
      %2962 = vmatprep.subr.bf16.mxu0 0
      %2963 = vmatpush1.bf16.msra.mxu0 %v2934
      %2964 = vmatprep.subr.bf16.mxu0 0
      %2965 = vmatpush2.bf16.msra.mxu0 0
      %2966 = vmatprep.subr.bf16.mxu0 0
      %2967 = vmatpush2.bf16.msra.mxu0 0
      %2968 = vmatprep.subr.bf16.mxu0 0
      %2969 = vmatpush2.bf16.msra.mxu0 0
      %2970 = vmatprep.subr.bf16.mxu0 0
      %2971 = vmatpush2.bf16.msra.mxu0 0
      %2972 = vmatprep.subr.bf16.mxu0 0
      %2973 = vmatpush2.bf16.msra.mxu0 0
      %2974 = vmatprep.subr.bf16.mxu0 0
      %2975 = vmatpush2.bf16.msra.mxu0 0
      %2976 = vmatprep.subr.bf16.mxu0 0
      %2977 = vmatpush2.bf16.msra.mxu0 0
      %2978 = vmatprep.subr.bf16.mxu0 0
      %2979 = vmatpush2.bf16.msra.mxu0 0
      %2980 = vmatprep.mubr.bf16.mxu0 0
      %2981 = vmatmul.mubr.bf16.gmra.mxu0 %v2943
      %v2982 = vpop.f32.mrf.mxu0
      %v2983 = vadd.f32 0.0, %v2982
      %v2984 = vpop.f32.mrf.mxu0
      %v2985 = vpop.f32.mrf.mxu0
      %v2986 = vadd.f32 0.0, %v2985
      %v2987 = vpop.f32.mrf.mxu0
      %2988 = vmatprep.mubr.bf16.mxu0 0
      %2989 = vmatmul.mubr.bf16.gmra.mxu0 %v2946
      %v2990 = vpop.f32.mrf.mxu0
      %v2991 = vadd.f32 0.0, %v2990
      %v2992 = vpop.f32.mrf.mxu0
      %v2993 = vpop.f32.mrf.mxu0
      %v2994 = vpop.f32.mrf.mxu0
      %2995 = vdwg.mxu0
      %v2997 = vunpack.c.l.b16 %v2897
      %v2998 = vpack.c.b16 %v2574, %v2997
      %vm2999 = vcmask 1045504
      %v3000 = vrot.slane %v2998, 2
      %v3001 = vrot.slane %v2679, 2
      %v3002 = vsel %vm2999, %v3000, %v3001
      %v3011 = vunpack.c.l.b16 %v2899
      %v3012 = vunpack.c.l.b16 %v2900
      %v3013 = vunpack.c.l.b16 %v2901
      %v3014 = vunpack.c.l.b16 %v2902
      %v3015 = vunpack.c.l.b16 %v2903
      %v3016 = vunpack.c.l.b16 %v2904
      %v3017 = vunpack.c.l.b16 %v2905
      %v3018 = vunpack.c.l.b16 %v2906
      %v3019 = vpack.c.b16 %v3012, %v3011
      %v3020 = vpack.c.b16 %v3014, %v3013
      %v3021 = vpack.c.b16 %v3016, %v3015
      %v3022 = vpack.c.b16 %v3018, %v3017
      %v3028 = vsel %vm2462, %v3002, 0
      %v3031 = vsel %vm2462, %v3001, 0
      %3033 = vmatprep.subr.bf16.mxu0 0
      %3034 = vmatpush1.bf16.msra.mxu0 0
      %3035 = vmatprep.subr.bf16.mxu0 0
      %3036 = vmatpush1.bf16.msra.mxu0 0
      %3037 = vmatprep.subr.bf16.mxu0 0
      %3038 = vmatpush1.bf16.msra.mxu0 0
      %3039 = vmatprep.subr.bf16.mxu0 0
      %3040 = vmatpush1.bf16.msra.mxu0 0
      %3041 = vmatprep.subr.bf16.mxu0 0
      %3042 = vmatpush1.bf16.msra.mxu0 %v3022
      %3043 = vmatprep.subr.bf16.mxu0 0
      %3044 = vmatpush1.bf16.msra.mxu0 %v3021
      %3045 = vmatprep.subr.bf16.mxu0 0
      %3046 = vmatpush1.bf16.msra.mxu0 %v3020
      %3047 = vmatprep.subr.bf16.mxu0 0
      %3048 = vmatpush1.bf16.msra.mxu0 %v3019
      %3049 = vmatprep.subr.bf16.mxu0 0
      %3050 = vmatpush2.bf16.msra.mxu0 0
      %3051 = vmatprep.subr.bf16.mxu0 0
      %3052 = vmatpush2.bf16.msra.mxu0 0
      %3053 = vmatprep.subr.bf16.mxu0 0
      %3054 = vmatpush2.bf16.msra.mxu0 0
      %3055 = vmatprep.subr.bf16.mxu0 0
      %3056 = vmatpush2.bf16.msra.mxu0 0
      %3057 = vmatprep.subr.bf16.mxu0 0
      %3058 = vmatpush2.bf16.msra.mxu0 0
      %3059 = vmatprep.subr.bf16.mxu0 0
      %3060 = vmatpush2.bf16.msra.mxu0 0
      %3061 = vmatprep.subr.bf16.mxu0 0
      %3062 = vmatpush2.bf16.msra.mxu0 0
      %3063 = vmatprep.subr.bf16.mxu0 0
      %3064 = vmatpush2.bf16.msra.mxu0 0
      %3065 = vmatprep.mubr.bf16.mxu0 0
      %3066 = vmatmul.mubr.bf16.gmra.mxu0 %v3028
      %v3067 = vpop.f32.mrf.mxu0
      %v3068 = vadd.f32 %v2983, %v3067
      %v3069 = vpop.f32.mrf.mxu0
      %v3070 = vpop.f32.mrf.mxu0
      %v3071 = vadd.f32 %v2986, %v3070
      %v3072 = vpop.f32.mrf.mxu0
      %3073 = vmatprep.mubr.bf16.mxu0 0
      %3074 = vmatmul.mubr.bf16.gmra.mxu0 %v3031
      %v3075 = vpop.f32.mrf.mxu0
      %v3076 = vadd.f32 %v2991, %v3075
      %v3077 = vpop.f32.mrf.mxu0
      %v3078 = vpop.f32.mrf.mxu0
      %v3079 = vpop.f32.mrf.mxu0
      %3080 = vdwg.mxu0
      %v3081 = vld [vmem:[#allocation3 + $0x4] sm:$0xc]
      %s3082 = scalar_lea.vmem %s5, 224
      %v3083 = vld [vmem:[%s3082] sm:$0xf]
      %v3084 = vld [vmem:[%s3082 + $0x4] sm:$0xf]
      %v3085 = vld [vmem:[%s3082 + $0x8] sm:$0xf]
      %v3086 = vld [vmem:[%s3082 + $0xc] sm:$0xf]
      %v3087 = vld [vmem:[%s3082 + $0x10] sm:$0xf]
      %v3088 = vld [vmem:[%s3082 + $0x14] sm:$0xf]
      %v3089 = vld [vmem:[%s3082 + $0x18] sm:$0xf]
      %v3090 = vld [vmem:[%s3082 + $0x1c] sm:$0xf]
      %v3092 = vunpack.c.l.b16 %v3081
      %v3093 = vpack.c.b16 %v2794, %v3092
      %v3094 = vrot.slane %v3093, 2
      %v3095 = vrot.slane %v2798, 2
      %v3096 = vsel %vm2999, %v3094, %v3095
      %v3105 = vunpack.c.l.b16 %v3083
      %v3106 = vunpack.c.l.b16 %v3084
      %v3107 = vunpack.c.l.b16 %v3085
      %v3108 = vunpack.c.l.b16 %v3086
      %v3109 = vunpack.c.l.b16 %v3087
      %v3110 = vunpack.c.l.b16 %v3088
      %v3111 = vunpack.c.l.b16 %v3089
      %v3112 = vunpack.c.l.b16 %v3090
      %v3113 = vpack.c.b16 %v3106, %v3105
      %v3114 = vpack.c.b16 %v3108, %v3107
      %v3115 = vpack.c.b16 %v3110, %v3109
      %v3116 = vpack.c.b16 %v3112, %v3111
      %v3122 = vsel %vm2462, %v3096, 0
      %v3125 = vsel %vm2462, %v3095, 0
      %3127 = vmatprep.subr.bf16.mxu0 0
      %3128 = vmatpush1.bf16.msra.mxu0 0
      %3129 = vmatprep.subr.bf16.mxu0 0
      %3130 = vmatpush1.bf16.msra.mxu0 0
      %3131 = vmatprep.subr.bf16.mxu0 0
      %3132 = vmatpush1.bf16.msra.mxu0 0
      %3133 = vmatprep.subr.bf16.mxu0 0
      %3134 = vmatpush1.bf16.msra.mxu0 0
      %3135 = vmatprep.subr.bf16.mxu0 0
      %3136 = vmatpush1.bf16.msra.mxu0 %v3116
      %3137 = vmatprep.subr.bf16.mxu0 0
      %3138 = vmatpush1.bf16.msra.mxu0 %v3115
      %3139 = vmatprep.subr.bf16.mxu0 0
      %3140 = vmatpush1.bf16.msra.mxu0 %v3114
      %3141 = vmatprep.subr.bf16.mxu0 0
      %3142 = vmatpush1.bf16.msra.mxu0 %v3113
      %3143 = vmatprep.subr.bf16.mxu0 0
      %3144 = vmatpush2.bf16.msra.mxu0 0
      %3145 = vmatprep.subr.bf16.mxu0 0
      %3146 = vmatpush2.bf16.msra.mxu0 0
      %3147 = vmatprep.subr.bf16.mxu0 0
      %3148 = vmatpush2.bf16.msra.mxu0 0
      %3149 = vmatprep.subr.bf16.mxu0 0
      %3150 = vmatpush2.bf16.msra.mxu0 0
      %3151 = vmatprep.subr.bf16.mxu0 0
      %3152 = vmatpush2.bf16.msra.mxu0 0
      %3153 = vmatprep.subr.bf16.mxu0 0
      %3154 = vmatpush2.bf16.msra.mxu0 0
      %3155 = vmatprep.subr.bf16.mxu0 0
      %3156 = vmatpush2.bf16.msra.mxu0 0
      %3157 = vmatprep.subr.bf16.mxu0 0
      %3158 = vmatpush2.bf16.msra.mxu0 0
      %3159 = vmatprep.mubr.bf16.mxu0 0
      %3160 = vmatmul.mubr.bf16.gmra.mxu0 %v3122
      %v3161 = vpop.f32.mrf.mxu0
      %v3162 = vadd.f32 0.0, %v3161
      %v3163 = vpop.f32.mrf.mxu0
      %v3164 = vpop.f32.mrf.mxu0
      %v3165 = vadd.f32 0.0, %v3164
      %v3166 = vpop.f32.mrf.mxu0
      %3167 = vmatprep.mubr.bf16.mxu0 0
      %3168 = vmatmul.mubr.bf16.gmra.mxu0 %v3125
      %v3169 = vpop.f32.mrf.mxu0
      %v3170 = vadd.f32 0.0, %v3169
      %v3171 = vpop.f32.mrf.mxu0
      %v3172 = vpop.f32.mrf.mxu0
      %v3173 = vpop.f32.mrf.mxu0
      %3174 = vdwg.mxu0
      %v3175 = vadd.f32 %v3068, %v3162
      %v3176 = vadd.f32 %v3071, %v3165
      %v3177 = vadd.f32 %v3076, %v3170
      %v3178 = vld [vmem:[#allocation3 + $0xc] sm:$0x7]
      %s3179 = scalar_lea.vmem %s5, 64
      %v3180 = vld [vmem:[%s3179] sm:$0xf]
      %v3181 = vld [vmem:[%s3179 + $0x4] sm:$0xf]
      %v3182 = vld [vmem:[%s3179 + $0x8] sm:$0xf]
      %v3183 = vld [vmem:[%s3179 + $0xc] sm:$0xf]
      %v3184 = vld [vmem:[%s3179 + $0x10] sm:$0xf]
      %v3185 = vld [vmem:[%s3179 + $0x14] sm:$0xf]
      %v3186 = vld [vmem:[%s3179 + $0x18] sm:$0xf]
      %v3187 = vld [vmem:[%s3179 + $0x1c] sm:$0xf]
      %v3188 = vld [vmem:[#allocation3 + $0x4] sm:$0xf]
      %v3189 = vld [vmem:[#allocation3 + $0x10] sm:$0x1]
      %s3190 = scalar_lea.vmem %s5, 160
      %v3191 = vld [vmem:[%s3190] sm:$0xf]
      %v3192 = vld [vmem:[%s3190 + $0x4] sm:$0xf]
      %v3193 = vld [vmem:[%s3190 + $0x8] sm:$0xf]
      %v3194 = vld [vmem:[%s3190 + $0xc] sm:$0xf]
      %v3195 = vld [vmem:[%s3190 + $0x10] sm:$0xf]
      %v3196 = vld [vmem:[%s3190 + $0x14] sm:$0xf]
      %v3197 = vld [vmem:[%s3190 + $0x18] sm:$0xf]
      %v3198 = vld [vmem:[%s3190 + $0x1c] sm:$0xf]
      %v3201 = vunpack.c.l.b16 %v3188
      %v3202 = vunpack.c.l.b16 %v3189
      %v3203 = vpack.c.b16 %v2794, %v3201
      %v3204 = vpack.c.b16 %v3202, %v2795
      %v3206 = vshrl.u32 %v3203, 16
      %v3208 = vshll.u32 %v3203, 16
      %v3210 = vrot.slane %v3208, 1
      %v3211 = vor.u32 %v3206, %v3210
      %v3213 = vshll.u32 %v3204, 16
      %v3215 = vrot.slane %v3213, 1
      %v3216 = vsel %vm1899, %v3211, %v3215
      %v3217 = vshrl.u32 %v3204, 16
      %v3219 = vor.u32 %v3217, %v3215
      %v3228 = vunpack.c.l.b16 %v3191
      %v3229 = vunpack.c.l.b16 %v3192
      %v3230 = vunpack.c.l.b16 %v3193
      %v3231 = vunpack.c.l.b16 %v3194
      %v3232 = vunpack.c.l.b16 %v3195
      %v3233 = vunpack.c.l.b16 %v3196
      %v3234 = vunpack.c.l.b16 %v3197
      %v3235 = vunpack.c.l.b16 %v3198
      %v3236 = vpack.c.b16 %v3229, %v3228
      %v3237 = vpack.c.b16 %v3231, %v3230
      %v3238 = vpack.c.b16 %v3233, %v3232
      %v3239 = vpack.c.b16 %v3235, %v3234
      %v3245 = vsel %vm2462, %v3216, 0
      %v3248 = vsel %vm2462, %v3219, 0
      %3250 = vmatprep.subr.bf16.mxu0 0
      %3251 = vmatpush1.bf16.msra.mxu0 0
      %3252 = vmatprep.subr.bf16.mxu0 0
      %3253 = vmatpush1.bf16.msra.mxu0 0
      %3254 = vmatprep.subr.bf16.mxu0 0
      %3255 = vmatpush1.bf16.msra.mxu0 0
      %3256 = vmatprep.subr.bf16.mxu0 0
      %3257 = vmatpush1.bf16.msra.mxu0 0
      %3258 = vmatprep.subr.bf16.mxu0 0
      %3259 = vmatpush1.bf16.msra.mxu0 %v3239
      %3260 = vmatprep.subr.bf16.mxu0 0
      %3261 = vmatpush1.bf16.msra.mxu0 %v3238
      %3262 = vmatprep.subr.bf16.mxu0 0
      %3263 = vmatpush1.bf16.msra.mxu0 %v3237
      %3264 = vmatprep.subr.bf16.mxu0 0
      %3265 = vmatpush1.bf16.msra.mxu0 %v3236
      %3266 = vmatprep.subr.bf16.mxu0 0
      %3267 = vmatpush2.bf16.msra.mxu0 0
      %3268 = vmatprep.subr.bf16.mxu0 0
      %3269 = vmatpush2.bf16.msra.mxu0 0
      %3270 = vmatprep.subr.bf16.mxu0 0
      %3271 = vmatpush2.bf16.msra.mxu0 0
      %3272 = vmatprep.subr.bf16.mxu0 0
      %3273 = vmatpush2.bf16.msra.mxu0 0
      %3274 = vmatprep.subr.bf16.mxu0 0
      %3275 = vmatpush2.bf16.msra.mxu0 0
      %3276 = vmatprep.subr.bf16.mxu0 0
      %3277 = vmatpush2.bf16.msra.mxu0 0
      %3278 = vmatprep.subr.bf16.mxu0 0
      %3279 = vmatpush2.bf16.msra.mxu0 0
      %3280 = vmatprep.subr.bf16.mxu0 0
      %3281 = vmatpush2.bf16.msra.mxu0 0
      %3282 = vmatprep.mubr.bf16.mxu0 0
      %3283 = vmatmul.mubr.bf16.gmra.mxu0 %v3245
      %v3284 = vpop.f32.mrf.mxu0
      %v3285 = vadd.f32 0.0, %v3284
      %v3286 = vpop.f32.mrf.mxu0
      %v3287 = vpop.f32.mrf.mxu0
      %v3288 = vadd.f32 0.0, %v3287
      %v3289 = vpop.f32.mrf.mxu0
      %3290 = vmatprep.mubr.bf16.mxu0 0
      %3291 = vmatmul.mubr.bf16.gmra.mxu0 %v3248
      %v3292 = vpop.f32.mrf.mxu0
      %v3293 = vadd.f32 0.0, %v3292
      %v3294 = vpop.f32.mrf.mxu0
      %v3295 = vpop.f32.mrf.mxu0
      %v3296 = vpop.f32.mrf.mxu0
      %3297 = vdwg.mxu0
      %v3299 = vunpack.c.l.b16 %v3178
      %v3300 = vpack.c.b16 %v3299, %v2575
      %vm3301 = vsmask.f32 5376
      %v3303 = vshrl.u32 %v2998, 16
      %v3305 = vrot.slane %v3303, 2
      %v3306 = vshll.u32 %v2998, 16
      %v3308 = vrot.slane %v3306, 3
      %v3309 = vor.u32 %v3305, %v3308
      %v3311 = vshrl.u32 %v3300, 16
      %v3313 = vrot.slane %v3311, 2
      %v3314 = vshll.u32 %v3300, 16
      %v3316 = vrot.slane %v3314, 3
      %v3317 = vor.u32 %v3313, %v3316
      %v3318 = vsel %vm3301, %v3309, %v3317
      %v3327 = vunpack.c.l.b16 %v3180
      %v3328 = vunpack.c.l.b16 %v3181
      %v3329 = vunpack.c.l.b16 %v3182
      %v3330 = vunpack.c.l.b16 %v3183
      %v3331 = vunpack.c.l.b16 %v3184
      %v3332 = vunpack.c.l.b16 %v3185
      %v3333 = vunpack.c.l.b16 %v3186
      %v3334 = vunpack.c.l.b16 %v3187
      %v3335 = vpack.c.b16 %v3328, %v3327
      %v3336 = vpack.c.b16 %v3330, %v3329
      %v3337 = vpack.c.b16 %v3332, %v3331
      %v3338 = vpack.c.b16 %v3334, %v3333
      %v3344 = vsel %vm2462, %v3318, 0
      %v3347 = vsel %vm2462, %v3317, 0
      %3349 = vmatprep.subr.bf16.mxu0 0
      %3350 = vmatpush1.bf16.msra.mxu0 0
      %3351 = vmatprep.subr.bf16.mxu0 0
      %3352 = vmatpush1.bf16.msra.mxu0 0
      %3353 = vmatprep.subr.bf16.mxu0 0
      %3354 = vmatpush1.bf16.msra.mxu0 0
      %3355 = vmatprep.subr.bf16.mxu0 0
      %3356 = vmatpush1.bf16.msra.mxu0 0
      %3357 = vmatprep.subr.bf16.mxu0 0
      %3358 = vmatpush1.bf16.msra.mxu0 %v3338
      %3359 = vmatprep.subr.bf16.mxu0 0
      %3360 = vmatpush1.bf16.msra.mxu0 %v3337
      %3361 = vmatprep.subr.bf16.mxu0 0
      %3362 = vmatpush1.bf16.msra.mxu0 %v3336
      %3363 = vmatprep.subr.bf16.mxu0 0
      %3364 = vmatpush1.bf16.msra.mxu0 %v3335
      %3365 = vmatprep.subr.bf16.mxu0 0
      %3366 = vmatpush2.bf16.msra.mxu0 0
      %3367 = vmatprep.subr.bf16.mxu0 0
      %3368 = vmatpush2.bf16.msra.mxu0 0
      %3369 = vmatprep.subr.bf16.mxu0 0
      %3370 = vmatpush2.bf16.msra.mxu0 0
      %3371 = vmatprep.subr.bf16.mxu0 0
      %3372 = vmatpush2.bf16.msra.mxu0 0
      %3373 = vmatprep.subr.bf16.mxu0 0
      %3374 = vmatpush2.bf16.msra.mxu0 0
      %3375 = vmatprep.subr.bf16.mxu0 0
      %3376 = vmatpush2.bf16.msra.mxu0 0
      %3377 = vmatprep.subr.bf16.mxu0 0
      %3378 = vmatpush2.bf16.msra.mxu0 0
      %3379 = vmatprep.subr.bf16.mxu0 0
      %3380 = vmatpush2.bf16.msra.mxu0 0
      %3381 = vmatprep.mubr.bf16.mxu0 0
      %3382 = vmatmul.mubr.bf16.gmra.mxu0 %v3344
      %v3383 = vpop.f32.mrf.mxu0
      %v3384 = vadd.f32 %v3285, %v3383
      %v3385 = vpop.f32.mrf.mxu0
      %v3386 = vpop.f32.mrf.mxu0
      %v3387 = vadd.f32 %v3288, %v3386
      %v3388 = vpop.f32.mrf.mxu0
      %3389 = vmatprep.mubr.bf16.mxu0 0
      %3390 = vmatmul.mubr.bf16.gmra.mxu0 %v3347
      %v3391 = vpop.f32.mrf.mxu0
      %v3392 = vadd.f32 %v3293, %v3391
      %v3393 = vpop.f32.mrf.mxu0
      %v3394 = vpop.f32.mrf.mxu0
      %v3395 = vpop.f32.mrf.mxu0
      %3396 = vdwg.mxu0
      %v3397 = vld [vmem:[#allocation3 + $0x10] sm:$0x7]
      %s3398 = scalar_lea.vmem %s5, 256
      %v3399 = vld [vmem:[%s3398] sm:$0xf]
      %v3400 = vld [vmem:[%s3398 + $0x4] sm:$0xf]
      %v3401 = vld [vmem:[%s3398 + $0x8] sm:$0xf]
      %v3402 = vld [vmem:[%s3398 + $0xc] sm:$0xf]
      %v3403 = vld [vmem:[%s3398 + $0x10] sm:$0xf]
      %v3404 = vld [vmem:[%s3398 + $0x14] sm:$0xf]
      %v3405 = vld [vmem:[%s3398 + $0x18] sm:$0xf]
      %v3406 = vld [vmem:[%s3398 + $0x1c] sm:$0xf]
      %v3408 = vunpack.c.l.b16 %v3397
      %v3409 = vpack.c.b16 %v3408, %v2795
      %v3411 = vshrl.u32 %v3093, 16
      %v3413 = vrot.slane %v3411, 2
      %v3414 = vshll.u32 %v3093, 16
      %v3416 = vrot.slane %v3414, 3
      %v3417 = vor.u32 %v3413, %v3416
      %v3419 = vshrl.u32 %v3409, 16
      %v3421 = vrot.slane %v3419, 2
      %v3422 = vshll.u32 %v3409, 16
      %v3424 = vrot.slane %v3422, 3
      %v3425 = vor.u32 %v3421, %v3424
      %v3426 = vsel %vm3301, %v3417, %v3425
      %v3435 = vunpack.c.l.b16 %v3399
      %v3436 = vunpack.c.l.b16 %v3400
      %v3437 = vunpack.c.l.b16 %v3401
      %v3438 = vunpack.c.l.b16 %v3402
      %v3439 = vunpack.c.l.b16 %v3403
      %v3440 = vunpack.c.l.b16 %v3404
      %v3441 = vunpack.c.l.b16 %v3405
      %v3442 = vunpack.c.l.b16 %v3406
      %v3443 = vpack.c.b16 %v3436, %v3435
      %v3444 = vpack.c.b16 %v3438, %v3437
      %v3445 = vpack.c.b16 %v3440, %v3439
      %v3446 = vpack.c.b16 %v3442, %v3441
      %v3452 = vsel %vm2462, %v3426, 0
      %v3455 = vsel %vm2462, %v3425, 0
      %3457 = vmatprep.subr.bf16.mxu0 0
      %3458 = vmatpush1.bf16.msra.mxu0 0
      %3459 = vmatprep.subr.bf16.mxu0 0
      %3460 = vmatpush1.bf16.msra.mxu0 0
      %3461 = vmatprep.subr.bf16.mxu0 0
      %3462 = vmatpush1.bf16.msra.mxu0 0
      %3463 = vmatprep.subr.bf16.mxu0 0
      %3464 = vmatpush1.bf16.msra.mxu0 0
      %3465 = vmatprep.subr.bf16.mxu0 0
      %3466 = vmatpush1.bf16.msra.mxu0 %v3446
      %3467 = vmatprep.subr.bf16.mxu0 0
      %3468 = vmatpush1.bf16.msra.mxu0 %v3445
      %3469 = vmatprep.subr.bf16.mxu0 0
      %3470 = vmatpush1.bf16.msra.mxu0 %v3444
      %3471 = vmatprep.subr.bf16.mxu0 0
      %3472 = vmatpush1.bf16.msra.mxu0 %v3443
      %3473 = vmatprep.subr.bf16.mxu0 0
      %3474 = vmatpush2.bf16.msra.mxu0 0
      %3475 = vmatprep.subr.bf16.mxu0 0
      %3476 = vmatpush2.bf16.msra.mxu0 0
      %3477 = vmatprep.subr.bf16.mxu0 0
      %3478 = vmatpush2.bf16.msra.mxu0 0
      %3479 = vmatprep.subr.bf16.mxu0 0
      %3480 = vmatpush2.bf16.msra.mxu0 0
      %3481 = vmatprep.subr.bf16.mxu0 0
      %3482 = vmatpush2.bf16.msra.mxu0 0
      %3483 = vmatprep.subr.bf16.mxu0 0
      %3484 = vmatpush2.bf16.msra.mxu0 0
      %3485 = vmatprep.subr.bf16.mxu0 0
      %3486 = vmatpush2.bf16.msra.mxu0 0
      %3487 = vmatprep.subr.bf16.mxu0 0
      %3488 = vmatpush2.bf16.msra.mxu0 0
      %3489 = vmatprep.mubr.bf16.mxu0 0
      %3490 = vmatmul.mubr.bf16.gmra.mxu0 %v3452
      %v3491 = vpop.f32.mrf.mxu0
      %v3492 = vadd.f32 0.0, %v3491
      %v3493 = vpop.f32.mrf.mxu0
      %v3494 = vpop.f32.mrf.mxu0
      %v3495 = vadd.f32 0.0, %v3494
      %v3496 = vpop.f32.mrf.mxu0
      %3497 = vmatprep.mubr.bf16.mxu0 0
      %3498 = vmatmul.mubr.bf16.gmra.mxu0 %v3455
      %v3499 = vpop.f32.mrf.mxu0
      %v3500 = vadd.f32 0.0, %v3499
      %v3501 = vpop.f32.mrf.mxu0
      %v3502 = vpop.f32.mrf.mxu0
      %v3503 = vpop.f32.mrf.mxu0
      %3504 = vdwg.mxu0
      %v3505 = vadd.f32 %v3384, %v3492
      %v3506 = vadd.f32 %v3387, %v3495
      %v3507 = vadd.f32 %v3392, %v3500
      %vm3508 = vcmp.ne.s32.totalorder %v2543, 0
      %vm3509 = vcmp.ne.s32.totalorder %v2544, 0
      %vm3510 = vcmp.ne.s32.totalorder %v2545, 0
      %v3511 = vsel %vm3508, 1, 0
      %v3512 = vsel %vm3509, 1, 0
      %v3513 = vsel %vm3510, 1, 0
      %vm3514 = vcmp.eq.s32.totalorder %v3511, 1
      %vm3515 = vcmp.eq.s32.totalorder %v3512, 1
      %vm3516 = vcmp.eq.s32.totalorder %v3513, 1
      %v3517 = vsel %vm3514, %v2894, 0.0
      %v3518 = vsel %vm3515, %v2895, 0.0
      %v3519 = vsel %vm3516, %v2896, 0.0
      %v3520 = vadd.f32 %v3175, %v3517
      %v3521 = vadd.f32 %v3176, %v3518
      %v3522 = vadd.f32 %v3177, %v3519
      %vm3523 = vcmp.ne.s32.totalorder %v2543, 3
      %vm3524 = vcmp.ne.s32.totalorder %v2544, 3
      %vm3525 = vcmp.ne.s32.totalorder %v2545, 3
      %v3526 = vsel %vm3523, 1, 0
      %v3527 = vsel %vm3524, 1, 0
      %v3528 = vsel %vm3525, 1, 0
      %vm3529 = vcmp.eq.s32.totalorder %v3526, 1
      %vm3530 = vcmp.eq.s32.totalorder %v3527, 1
      %vm3531 = vcmp.eq.s32.totalorder %v3528, 1
      %v3532 = vsel %vm3529, %v3505, 0.0
      %v3533 = vsel %vm3530, %v3506, 0.0
      %v3534 = vsel %vm3531, %v3507, 0.0
      %v3535 = vadd.f32 %v3520, %v3532
      %v3536 = vadd.f32 %v3521, %v3533
      %v3537 = vadd.f32 %v3522, %v3534
      %v3538 = vld [vmem:[%s6] sm:$0x1]
      %v3540 = vlaneseq
      %v3541 = vshrl.u32 %v3540, 7
      %v3542 = vsub.s32 0, %v3541
      %v3543 = vrot.slane %v3538, %v3542
      %v3545 = vadd.f32 %v3535, %v3543
      %v3546 = vadd.f32 %v3536, %v3543
      %v3547 = vadd.f32 %v3537, %v3543
      %v3548 = vmax.f32 %v3545, 0.0
      %v3549 = vmax.f32 %v3546, 0.0
      %v3550 = vmax.f32 %v3547, 0.0
      %v3551 = vpack.c.bf16 %v3549, %v3548
      %v3552 = vpack.c.bf16 %v3550, %v3550
      %v3553 = vld [vmem:[%s7] sm:$0xff]
      %v3554 = vld [vmem:[%s7 + $0x8] sm:$0xff]
      %v3555 = vld [vmem:[%s7 + $0x10] sm:$0xff]
      %v3556 = vld [vmem:[%s7 + $0x18] sm:$0xff]
      %v3557 = vld [vmem:[%s7 + $0x20] sm:$0xff]
      %v3558 = vld [vmem:[%s7 + $0x28] sm:$0xff]
      %v3559 = vld [vmem:[%s7 + $0x30] sm:$0xff]
      %v3560 = vld [vmem:[%s7 + $0x38] sm:$0xff]
      %v3561 = vld [vmem:[%s7 + $0x40] sm:$0xff]
      %v3562 = vld [vmem:[%s7 + $0x48] sm:$0xff]
      %v3563 = vld [vmem:[%s7 + $0x50] sm:$0xff]
      %v3564 = vld [vmem:[%s7 + $0x58] sm:$0xff]
      %v3565 = vld [vmem:[%s7 + $0x60] sm:$0xff]
      %v3566 = vld [vmem:[%s7 + $0x68] sm:$0xff]
      %v3567 = vld [vmem:[%s7 + $0x70] sm:$0xff]
      %v3568 = vld [vmem:[%s7 + $0x78] sm:$0xff]
      %v3569 = vld [vmem:[%s8] sm:$0x3]
      %v3571 = vlaneseq
      %v3572 = vshrl.u32 %v3571, 7
      %v3573 = vsub.s32 0, %v3572
      %v3574 = vrot.slane %v3569, %v3573
      %v3575 = vlaneseq
      %v3576 = vshrl.u32 %v3575, 7
      %v3577 = vsub.s32 1, %v3576
      %v3578 = vrot.slane %v3569, %v3577
      %v3597 = vunpack.c.l.b16 %v3553
      %v3598 = vunpack.c.h.b16 %v3553
      %v3599 = vunpack.c.l.b16 %v3554
      %v3600 = vunpack.c.h.b16 %v3554
      %v3601 = vunpack.c.l.b16 %v3555
      %v3602 = vunpack.c.h.b16 %v3555
      %v3603 = vunpack.c.l.b16 %v3556
      %v3604 = vunpack.c.h.b16 %v3556
      %v3605 = vunpack.c.l.b16 %v3557
      %v3606 = vunpack.c.h.b16 %v3557
      %v3607 = vunpack.c.l.b16 %v3558
      %v3608 = vunpack.c.h.b16 %v3558
      %v3609 = vunpack.c.l.b16 %v3559
      %v3610 = vunpack.c.h.b16 %v3559
      %v3611 = vunpack.c.l.b16 %v3560
      %v3612 = vunpack.c.h.b16 %v3560
      %v3613 = vunpack.c.l.b16 %v3561
      %v3614 = vunpack.c.h.b16 %v3561
      %v3615 = vunpack.c.l.b16 %v3562
      %v3616 = vunpack.c.h.b16 %v3562
      %v3617 = vunpack.c.l.b16 %v3563
      %v3618 = vunpack.c.h.b16 %v3563
      %v3619 = vunpack.c.l.b16 %v3564
      %v3620 = vunpack.c.h.b16 %v3564
      %v3621 = vunpack.c.l.b16 %v3565
      %v3622 = vunpack.c.h.b16 %v3565
      %v3623 = vunpack.c.l.b16 %v3566
      %v3624 = vunpack.c.h.b16 %v3566
      %v3625 = vunpack.c.l.b16 %v3567
      %v3626 = vunpack.c.h.b16 %v3567
      %v3627 = vunpack.c.l.b16 %v3568
      %v3628 = vunpack.c.h.b16 %v3568
      %v3629 = vpack.c.b16 %v3599, %v3597
      %v3630 = vpack.c.b16 %v3600, %v3598
      %v3631 = vpack.c.b16 %v3603, %v3601
      %v3632 = vpack.c.b16 %v3604, %v3602
      %v3633 = vpack.c.b16 %v3607, %v3605
      %v3634 = vpack.c.b16 %v3608, %v3606
      %v3635 = vpack.c.b16 %v3611, %v3609
      %v3636 = vpack.c.b16 %v3612, %v3610
      %v3637 = vpack.c.b16 %v3615, %v3613
      %v3638 = vpack.c.b16 %v3616, %v3614
      %v3639 = vpack.c.b16 %v3619, %v3617
      %v3640 = vpack.c.b16 %v3620, %v3618
      %v3641 = vpack.c.b16 %v3623, %v3621
      %v3642 = vpack.c.b16 %v3624, %v3622
      %v3643 = vpack.c.b16 %v3627, %v3625
      %v3644 = vpack.c.b16 %v3628, %v3626
      %3661 = vmatprep.subr.bf16.mxu0 %v3644
      %3662 = vmatpush1.bf16.msra.mxu0 %v3643
      %3663 = vmatprep.subr.bf16.mxu0 %v3642
      %3664 = vmatpush1.bf16.msra.mxu0 %v3641
      %3665 = vmatprep.subr.bf16.mxu0 %v3640
      %3666 = vmatpush1.bf16.msra.mxu0 %v3639
      %3667 = vmatprep.subr.bf16.mxu0 %v3638
      %3668 = vmatpush1.bf16.msra.mxu0 %v3637
      %3669 = vmatprep.subr.bf16.mxu0 %v3636
      %3670 = vmatpush1.bf16.msra.mxu0 %v3635
      %3671 = vmatprep.subr.bf16.mxu0 %v3634
      %3672 = vmatpush1.bf16.msra.mxu0 %v3633
      %3673 = vmatprep.subr.bf16.mxu0 %v3632
      %3674 = vmatpush1.bf16.msra.mxu0 %v3631
      %3675 = vmatprep.subr.bf16.mxu0 %v3630
      %3676 = vmatpush1.bf16.msra.mxu0 %v3629
      %3677 = vmatprep.subr.bf16.mxu0 0
      %3678 = vmatpush2.bf16.msra.mxu0 0
      %3679 = vmatprep.subr.bf16.mxu0 0
      %3680 = vmatpush2.bf16.msra.mxu0 0
      %3681 = vmatprep.subr.bf16.mxu0 0
      %3682 = vmatpush2.bf16.msra.mxu0 0
      %3683 = vmatprep.subr.bf16.mxu0 0
      %3684 = vmatpush2.bf16.msra.mxu0 0
      %3685 = vmatprep.subr.bf16.mxu0 0
      %3686 = vmatpush2.bf16.msra.mxu0 0
      %3687 = vmatprep.subr.bf16.mxu0 0
      %3688 = vmatpush2.bf16.msra.mxu0 0
      %3689 = vmatprep.subr.bf16.mxu0 0
      %3690 = vmatpush2.bf16.msra.mxu0 0
      %3691 = vmatprep.subr.bf16.mxu0 0
      %3692 = vmatpush2.bf16.msra.mxu0 0
      %3693 = vmatprep.mubr.bf16.mxu0 0
      %3694 = vmatmul.mubr.bf16.gmra.mxu0 %v3551
      %v3695 = vpop.f32.mrf.mxu0
      %v3696 = vadd.f32 %v3574, %v3695
      %v3697 = vpop.f32.mrf.mxu0
      %v3698 = vadd.f32 %v3578, %v3697
      %v3699 = vpop.f32.mrf.mxu0
      %v3700 = vadd.f32 %v3574, %v3699
      %v3701 = vpop.f32.mrf.mxu0
      %v3702 = vadd.f32 %v3578, %v3701
      %3703 = vmatprep.mubr.bf16.mxu0 0
      %3704 = vmatmul.mubr.bf16.gmra.mxu0 %v3552
      %v3705 = vpop.f32.mrf.mxu0
      %v3706 = vadd.f32 %v3574, %v3705
      %v3707 = vpop.f32.mrf.mxu0
      %v3708 = vadd.f32 %v3578, %v3707
      %v3709 = vpop.f32.mrf.mxu0
      %v3710 = vpop.f32.mrf.mxu0
      %3711 = vdwg.mxu0
      %v3712 = vmax.f32 %v3696, 0.0
      %v3713 = vmax.f32 %v3698, 0.0
      %v3714 = vmax.f32 %v3700, 0.0
      %v3715 = vmax.f32 %v3702, 0.0
      %v3716 = vmax.f32 %v3706, 0.0
      %v3717 = vmax.f32 %v3708, 0.0
      %v3718 = vpack.c.bf16 %v3714, %v3712
      %v3719 = vpack.c.bf16 %v3715, %v3713
      %v3720 = vpack.c.bf16 %v3716, %v3716
      %v3721 = vpack.c.bf16 %v3717, %v3717
      %v3722 = vld [vmem:[%s9] sm:$0xff]
      %v3723 = vld [vmem:[%s9 + $0x8] sm:$0xff]
      %v3724 = vld [vmem:[%s9 + $0x10] sm:$0xff]
      %v3725 = vld [vmem:[%s9 + $0x18] sm:$0xff]
      %v3726 = vld [vmem:[%s9 + $0x20] sm:$0xff]
      %v3727 = vld [vmem:[%s9 + $0x28] sm:$0xff]
      %v3728 = vld [vmem:[%s9 + $0x30] sm:$0xff]
      %v3729 = vld [vmem:[%s9 + $0x38] sm:$0xff]
      %v3730 = vld [vmem:[%s9 + $0x40] sm:$0xff]
      %v3731 = vld [vmem:[%s9 + $0x48] sm:$0xff]
      %v3732 = vld [vmem:[%s9 + $0x50] sm:$0xff]
      %v3733 = vld [vmem:[%s9 + $0x58] sm:$0xff]
      %v3734 = vld [vmem:[%s9 + $0x60] sm:$0xff]
      %v3735 = vld [vmem:[%s9 + $0x68] sm:$0xff]
      %v3736 = vld [vmem:[%s9 + $0x70] sm:$0xff]
      %v3737 = vld [vmem:[%s9 + $0x78] sm:$0xff]
      %v3738 = vld [vmem:[%s9 + $0x80] sm:$0xff]
      %v3739 = vld [vmem:[%s9 + $0x88] sm:$0xff]
      %v3740 = vld [vmem:[%s9 + $0x90] sm:$0xff]
      %v3741 = vld [vmem:[%s9 + $0x98] sm:$0xff]
      %v3742 = vld [vmem:[%s9 + $0xa0] sm:$0xff]
      %v3743 = vld [vmem:[%s9 + $0xa8] sm:$0xff]
      %v3744 = vld [vmem:[%s9 + $0xb0] sm:$0xff]
      %v3745 = vld [vmem:[%s9 + $0xb8] sm:$0xff]
      %v3746 = vld [vmem:[%s9 + $0xc0] sm:$0xff]
      %v3747 = vld [vmem:[%s9 + $0xc8] sm:$0xff]
      %v3748 = vld [vmem:[%s9 + $0xd0] sm:$0xff]
      %v3749 = vld [vmem:[%s9 + $0xd8] sm:$0xff]
      %v3750 = vld [vmem:[%s9 + $0xe0] sm:$0xff]
      %v3751 = vld [vmem:[%s9 + $0xe8] sm:$0xff]
      %v3752 = vld [vmem:[%s9 + $0xf0] sm:$0xff]
      %v3753 = vld [vmem:[%s9 + $0xf8] sm:$0xff]
      %v3754 = vld [vmem:[%s9 + $0x100] sm:$0xff]
      %v3755 = vld [vmem:[%s9 + $0x108] sm:$0xff]
      %v3756 = vld [vmem:[%s9 + $0x110] sm:$0xff]
      %v3757 = vld [vmem:[%s9 + $0x118] sm:$0xff]
      %v3758 = vld [vmem:[%s9 + $0x120] sm:$0xff]
      %v3759 = vld [vmem:[%s9 + $0x128] sm:$0xff]
      %v3760 = vld [vmem:[%s9 + $0x130] sm:$0xff]
      %v3761 = vld [vmem:[%s9 + $0x138] sm:$0xff]
      %v3762 = vld [vmem:[%s9 + $0x140] sm:$0xff]
      %v3763 = vld [vmem:[%s9 + $0x148] sm:$0xff]
      %v3764 = vld [vmem:[%s9 + $0x150] sm:$0xff]
      %v3765 = vld [vmem:[%s9 + $0x158] sm:$0xff]
      %v3766 = vld [vmem:[%s9 + $0x160] sm:$0xff]
      %v3767 = vld [vmem:[%s9 + $0x168] sm:$0xff]
      %v3768 = vld [vmem:[%s9 + $0x170] sm:$0xff]
      %v3769 = vld [vmem:[%s9 + $0x178] sm:$0xff]
      %v3770 = vld [vmem:[%s9 + $0x180] sm:$0xff]
      %v3771 = vld [vmem:[%s9 + $0x188] sm:$0xff]
      %v3772 = vld [vmem:[%s9 + $0x190] sm:$0xff]
      %v3773 = vld [vmem:[%s9 + $0x198] sm:$0xff]
      %v3774 = vld [vmem:[%s9 + $0x1a0] sm:$0xff]
      %v3775 = vld [vmem:[%s9 + $0x1a8] sm:$0xff]
      %v3776 = vld [vmem:[%s9 + $0x1b0] sm:$0xff]
      %v3777 = vld [vmem:[%s9 + $0x1b8] sm:$0xff]
      %v3778 = vld [vmem:[%s9 + $0x1c0] sm:$0xff]
      %v3779 = vld [vmem:[%s9 + $0x1c8] sm:$0xff]
      %v3780 = vld [vmem:[%s9 + $0x1d0] sm:$0xff]
      %v3781 = vld [vmem:[%s9 + $0x1d8] sm:$0xff]
      %v3782 = vld [vmem:[%s9 + $0x1e0] sm:$0xff]
      %v3783 = vld [vmem:[%s9 + $0x1e8] sm:$0xff]
      %v3784 = vld [vmem:[%s9 + $0x1f0] sm:$0xff]
      %v3785 = vld [vmem:[%s9 + $0x1f8] sm:$0xff]
      %v3786 = vld [vmem:[%s10] sm:$0xf]
      %v3788 = vlaneseq
      %v3789 = vshrl.u32 %v3788, 7
      %v3790 = vsub.s32 0, %v3789
      %v3791 = vrot.slane %v3786, %v3790
      %v3792 = vlaneseq
      %v3793 = vshrl.u32 %v3792, 7
      %v3794 = vsub.s32 1, %v3793
      %v3795 = vrot.slane %v3786, %v3794
      %v3796 = vlaneseq
      %v3797 = vshrl.u32 %v3796, 7
      %v3798 = vsub.s32 2, %v3797
      %v3799 = vrot.slane %v3786, %v3798
      %v3800 = vlaneseq
      %v3801 = vshrl.u32 %v3800, 7
      %v3802 = vsub.s32 3, %v3801
      %v3803 = vrot.slane %v3786, %v3802
      %v3872 = vunpack.c.l.b16 %v3722
      %v3873 = vunpack.c.h.b16 %v3722
      %v3874 = vunpack.c.l.b16 %v3723
      %v3875 = vunpack.c.h.b16 %v3723
      %v3876 = vunpack.c.l.b16 %v3724
      %v3877 = vunpack.c.h.b16 %v3724
      %v3878 = vunpack.c.l.b16 %v3725
      %v3879 = vunpack.c.h.b16 %v3725
      %v3880 = vunpack.c.l.b16 %v3726
      %v3881 = vunpack.c.h.b16 %v3726
      %v3882 = vunpack.c.l.b16 %v3727
      %v3883 = vunpack.c.h.b16 %v3727
      %v3884 = vunpack.c.l.b16 %v3728
      %v3885 = vunpack.c.h.b16 %v3728
      %v3886 = vunpack.c.l.b16 %v3729
      %v3887 = vunpack.c.h.b16 %v3729
      %v3888 = vunpack.c.l.b16 %v3730
      %v3889 = vunpack.c.h.b16 %v3730
      %v3890 = vunpack.c.l.b16 %v3731
      %v3891 = vunpack.c.h.b16 %v3731
      %v3892 = vunpack.c.l.b16 %v3732
      %v3893 = vunpack.c.h.b16 %v3732
      %v3894 = vunpack.c.l.b16 %v3733
      %v3895 = vunpack.c.h.b16 %v3733
      %v3896 = vunpack.c.l.b16 %v3734
      %v3897 = vunpack.c.h.b16 %v3734
      %v3898 = vunpack.c.l.b16 %v3735
      %v3899 = vunpack.c.h.b16 %v3735
      %v3900 = vunpack.c.l.b16 %v3736
      %v3901 = vunpack.c.h.b16 %v3736
      %v3902 = vunpack.c.l.b16 %v3737
      %v3903 = vunpack.c.h.b16 %v3737
      %v3904 = vunpack.c.l.b16 %v3738
      %v3905 = vunpack.c.h.b16 %v3738
      %v3906 = vunpack.c.l.b16 %v3739
      %v3907 = vunpack.c.h.b16 %v3739
      %v3908 = vunpack.c.l.b16 %v3740
      %v3909 = vunpack.c.h.b16 %v3740
      %v3910 = vunpack.c.l.b16 %v3741
      %v3911 = vunpack.c.h.b16 %v3741
      %v3912 = vunpack.c.l.b16 %v3742
      %v3913 = vunpack.c.h.b16 %v3742
      %v3914 = vunpack.c.l.b16 %v3743
      %v3915 = vunpack.c.h.b16 %v3743
      %v3916 = vunpack.c.l.b16 %v3744
      %v3917 = vunpack.c.h.b16 %v3744
      %v3918 = vunpack.c.l.b16 %v3745
      %v3919 = vunpack.c.h.b16 %v3745
      %v3920 = vunpack.c.l.b16 %v3746
      %v3921 = vunpack.c.h.b16 %v3746
      %v3922 = vunpack.c.l.b16 %v3747
      %v3923 = vunpack.c.h.b16 %v3747
      %v3924 = vunpack.c.l.b16 %v3748
      %v3925 = vunpack.c.h.b16 %v3748
      %v3926 = vunpack.c.l.b16 %v3749
      %v3927 = vunpack.c.h.b16 %v3749
      %v3928 = vunpack.c.l.b16 %v3750
      %v3929 = vunpack.c.h.b16 %v3750
      %v3930 = vunpack.c.l.b16 %v3751
      %v3931 = vunpack.c.h.b16 %v3751
      %v3932 = vunpack.c.l.b16 %v3752
      %v3933 = vunpack.c.h.b16 %v3752
      %v3934 = vunpack.c.l.b16 %v3753
      %v3935 = vunpack.c.h.b16 %v3753
      %v3936 = vunpack.c.l.b16 %v3754
      %v3937 = vunpack.c.h.b16 %v3754
      %v3938 = vunpack.c.l.b16 %v3755
      %v3939 = vunpack.c.h.b16 %v3755
      %v3940 = vunpack.c.l.b16 %v3756
      %v3941 = vunpack.c.h.b16 %v3756
      %v3942 = vunpack.c.l.b16 %v3757
      %v3943 = vunpack.c.h.b16 %v3757
      %v3944 = vunpack.c.l.b16 %v3758
      %v3945 = vunpack.c.h.b16 %v3758
      %v3946 = vunpack.c.l.b16 %v3759
      %v3947 = vunpack.c.h.b16 %v3759
      %v3948 = vunpack.c.l.b16 %v3760
      %v3949 = vunpack.c.h.b16 %v3760
      %v3950 = vunpack.c.l.b16 %v3761
      %v3951 = vunpack.c.h.b16 %v3761
      %v3952 = vunpack.c.l.b16 %v3762
      %v3953 = vunpack.c.h.b16 %v3762
      %v3954 = vunpack.c.l.b16 %v3763
      %v3955 = vunpack.c.h.b16 %v3763
      %v3956 = vunpack.c.l.b16 %v3764
      %v3957 = vunpack.c.h.b16 %v3764
      %v3958 = vunpack.c.l.b16 %v3765
      %v3959 = vunpack.c.h.b16 %v3765
      %v3960 = vunpack.c.l.b16 %v3766
      %v3961 = vunpack.c.h.b16 %v3766
      %v3962 = vunpack.c.l.b16 %v3767
      %v3963 = vunpack.c.h.b16 %v3767
      %v3964 = vunpack.c.l.b16 %v3768
      %v3965 = vunpack.c.h.b16 %v3768
      %v3966 = vunpack.c.l.b16 %v3769
      %v3967 = vunpack.c.h.b16 %v3769
      %v3968 = vunpack.c.l.b16 %v3770
      %v3969 = vunpack.c.h.b16 %v3770
      %v3970 = vunpack.c.l.b16 %v3771
      %v3971 = vunpack.c.h.b16 %v3771
      %v3972 = vunpack.c.l.b16 %v3772
      %v3973 = vunpack.c.h.b16 %v3772
      %v3974 = vunpack.c.l.b16 %v3773
      %v3975 = vunpack.c.h.b16 %v3773
      %v3976 = vunpack.c.l.b16 %v3774
      %v3977 = vunpack.c.h.b16 %v3774
      %v3978 = vunpack.c.l.b16 %v3775
      %v3979 = vunpack.c.h.b16 %v3775
      %v3980 = vunpack.c.l.b16 %v3776
      %v3981 = vunpack.c.h.b16 %v3776
      %v3982 = vunpack.c.l.b16 %v3777
      %v3983 = vunpack.c.h.b16 %v3777
      %v3984 = vunpack.c.l.b16 %v3778
      %v3985 = vunpack.c.h.b16 %v3778
      %v3986 = vunpack.c.l.b16 %v3779
      %v3987 = vunpack.c.h.b16 %v3779
      %v3988 = vunpack.c.l.b16 %v3780
      %v3989 = vunpack.c.h.b16 %v3780
      %v3990 = vunpack.c.l.b16 %v3781
      %v3991 = vunpack.c.h.b16 %v3781
      %v3992 = vunpack.c.l.b16 %v3782
      %v3993 = vunpack.c.h.b16 %v3782
      %v3994 = vunpack.c.l.b16 %v3783
      %v3995 = vunpack.c.h.b16 %v3783
      %v3996 = vunpack.c.l.b16 %v3784
      %v3997 = vunpack.c.h.b16 %v3784
      %v3998 = vunpack.c.l.b16 %v3785
      %v3999 = vunpack.c.h.b16 %v3785
      %v4000 = vpack.c.b16 %v3876, %v3872
      %v4001 = vpack.c.b16 %v3877, %v3873
      %v4002 = vpack.c.b16 %v3878, %v3874
      %v4003 = vpack.c.b16 %v3879, %v3875
      %v4004 = vpack.c.b16 %v3884, %v3880
      %v4005 = vpack.c.b16 %v3885, %v3881
      %v4006 = vpack.c.b16 %v3886, %v3882
      %v4007 = vpack.c.b16 %v3887, %v3883
      %v4008 = vpack.c.b16 %v3892, %v3888
      %v4009 = vpack.c.b16 %v3893, %v3889
      %v4010 = vpack.c.b16 %v3894, %v3890
      %v4011 = vpack.c.b16 %v3895, %v3891
      %v4012 = vpack.c.b16 %v3900, %v3896
      %v4013 = vpack.c.b16 %v3901, %v3897
      %v4014 = vpack.c.b16 %v3902, %v3898
      %v4015 = vpack.c.b16 %v3903, %v3899
      %v4016 = vpack.c.b16 %v3908, %v3904
      %v4017 = vpack.c.b16 %v3909, %v3905
      %v4018 = vpack.c.b16 %v3910, %v3906
      %v4019 = vpack.c.b16 %v3911, %v3907
      %v4020 = vpack.c.b16 %v3916, %v3912
      %v4021 = vpack.c.b16 %v3917, %v3913
      %v4022 = vpack.c.b16 %v3918, %v3914
      %v4023 = vpack.c.b16 %v3919, %v3915
      %v4024 = vpack.c.b16 %v3924, %v3920
      %v4025 = vpack.c.b16 %v3925, %v3921
      %v4026 = vpack.c.b16 %v3926, %v3922
      %v4027 = vpack.c.b16 %v3927, %v3923
      %v4028 = vpack.c.b16 %v3932, %v3928
      %v4029 = vpack.c.b16 %v3933, %v3929
      %v4030 = vpack.c.b16 %v3934, %v3930
      %v4031 = vpack.c.b16 %v3935, %v3931
      %v4032 = vpack.c.b16 %v3940, %v3936
      %v4033 = vpack.c.b16 %v3941, %v3937
      %v4034 = vpack.c.b16 %v3942, %v3938
      %v4035 = vpack.c.b16 %v3943, %v3939
      %v4036 = vpack.c.b16 %v3948, %v3944
      %v4037 = vpack.c.b16 %v3949, %v3945
      %v4038 = vpack.c.b16 %v3950, %v3946
      %v4039 = vpack.c.b16 %v3951, %v3947
      %v4040 = vpack.c.b16 %v3956, %v3952
      %v4041 = vpack.c.b16 %v3957, %v3953
      %v4042 = vpack.c.b16 %v3958, %v3954
      %v4043 = vpack.c.b16 %v3959, %v3955
      %v4044 = vpack.c.b16 %v3964, %v3960
      %v4045 = vpack.c.b16 %v3965, %v3961
      %v4046 = vpack.c.b16 %v3966, %v3962
      %v4047 = vpack.c.b16 %v3967, %v3963
      %v4048 = vpack.c.b16 %v3972, %v3968
      %v4049 = vpack.c.b16 %v3973, %v3969
      %v4050 = vpack.c.b16 %v3974, %v3970
      %v4051 = vpack.c.b16 %v3975, %v3971
      %v4052 = vpack.c.b16 %v3980, %v3976
      %v4053 = vpack.c.b16 %v3981, %v3977
      %v4054 = vpack.c.b16 %v3982, %v3978
      %v4055 = vpack.c.b16 %v3983, %v3979
      %v4056 = vpack.c.b16 %v3988, %v3984
      %v4057 = vpack.c.b16 %v3989, %v3985
      %v4058 = vpack.c.b16 %v3990, %v3986
      %v4059 = vpack.c.b16 %v3991, %v3987
      %v4060 = vpack.c.b16 %v3996, %v3992
      %v4061 = vpack.c.b16 %v3997, %v3993
      %v4062 = vpack.c.b16 %v3998, %v3994
      %v4063 = vpack.c.b16 %v3999, %v3995
      %4128 = vmatprep.subr.bf16.mxu0 %v4029
      %4129 = vmatpush1.bf16.msra.mxu0 %v4028
      %4130 = vmatprep.subr.bf16.mxu0 %v4025
      %4131 = vmatpush1.bf16.msra.mxu0 %v4024
      %4132 = vmatprep.subr.bf16.mxu0 %v4021
      %4133 = vmatpush1.bf16.msra.mxu0 %v4020
      %4134 = vmatprep.subr.bf16.mxu0 %v4017
      %4135 = vmatpush1.bf16.msra.mxu0 %v4016
      %4136 = vmatprep.subr.bf16.mxu0 %v4013
      %4137 = vmatpush1.bf16.msra.mxu0 %v4012
      %4138 = vmatprep.subr.bf16.mxu0 %v4009
      %4139 = vmatpush1.bf16.msra.mxu0 %v4008
      %4140 = vmatprep.subr.bf16.mxu0 %v4005
      %4141 = vmatpush1.bf16.msra.mxu0 %v4004
      %4142 = vmatprep.subr.bf16.mxu0 %v4001
      %4143 = vmatpush1.bf16.msra.mxu0 %v4000
      %4144 = vmatprep.subr.bf16.mxu0 %v4061
      %4145 = vmatpush2.bf16.msra.mxu0 %v4060
      %4146 = vmatprep.subr.bf16.mxu0 %v4057
      %4147 = vmatpush2.bf16.msra.mxu0 %v4056
      %4148 = vmatprep.subr.bf16.mxu0 %v4053
      %4149 = vmatpush2.bf16.msra.mxu0 %v4052
      %4150 = vmatprep.subr.bf16.mxu0 %v4049
      %4151 = vmatpush2.bf16.msra.mxu0 %v4048
      %4152 = vmatprep.subr.bf16.mxu0 %v4045
      %4153 = vmatpush2.bf16.msra.mxu0 %v4044
      %4154 = vmatprep.subr.bf16.mxu0 %v4041
      %4155 = vmatpush2.bf16.msra.mxu0 %v4040
      %4156 = vmatprep.subr.bf16.mxu0 %v4037
      %4157 = vmatpush2.bf16.msra.mxu0 %v4036
      %4158 = vmatprep.subr.bf16.mxu0 %v4033
      %4159 = vmatpush2.bf16.msra.mxu0 %v4032
      %4160 = vmatprep.mubr.bf16.mxu0 %v3719
      %4161 = vmatmul.mubr.bf16.gmra.mxu0 %v3718
      %v4162 = vpop.f32.mrf.mxu0
      %v4163 = vadd.f32 %v3791, %v4162
      %v4164 = vpop.f32.mrf.mxu0
      %v4165 = vadd.f32 %v3795, %v4164
      %v4166 = vpop.f32.mrf.mxu0
      %v4167 = vadd.f32 %v3791, %v4166
      %v4168 = vpop.f32.mrf.mxu0
      %v4169 = vadd.f32 %v3795, %v4168
      %4170 = vmatprep.mubr.bf16.mxu0 %v3721
      %4171 = vmatmul.mubr.bf16.gmra.mxu0 %v3720
      %v4172 = vpop.f32.mrf.mxu0
      %v4173 = vadd.f32 %v3791, %v4172
      %v4174 = vpop.f32.mrf.mxu0
      %v4175 = vadd.f32 %v3795, %v4174
      %v4176 = vpop.f32.mrf.mxu0
      %v4177 = vpop.f32.mrf.mxu0
      %4178 = vdwg.mxu0
      %4179 = vmatprep.subr.bf16.mxu0 %v4031
      %4180 = vmatpush1.bf16.msra.mxu0 %v4030
      %4181 = vmatprep.subr.bf16.mxu0 %v4027
      %4182 = vmatpush1.bf16.msra.mxu0 %v4026
      %4183 = vmatprep.subr.bf16.mxu0 %v4023
      %4184 = vmatpush1.bf16.msra.mxu0 %v4022
      %4185 = vmatprep.subr.bf16.mxu0 %v4019
      %4186 = vmatpush1.bf16.msra.mxu0 %v4018
      %4187 = vmatprep.subr.bf16.mxu0 %v4015
      %4188 = vmatpush1.bf16.msra.mxu0 %v4014
      %4189 = vmatprep.subr.bf16.mxu0 %v4011
      %4190 = vmatpush1.bf16.msra.mxu0 %v4010
      %4191 = vmatprep.subr.bf16.mxu0 %v4007
      %4192 = vmatpush1.bf16.msra.mxu0 %v4006
      %4193 = vmatprep.subr.bf16.mxu0 %v4003
      %4194 = vmatpush1.bf16.msra.mxu0 %v4002
      %4195 = vmatprep.subr.bf16.mxu0 %v4063
      %4196 = vmatpush2.bf16.msra.mxu0 %v4062
      %4197 = vmatprep.subr.bf16.mxu0 %v4059
      %4198 = vmatpush2.bf16.msra.mxu0 %v4058
      %4199 = vmatprep.subr.bf16.mxu0 %v4055
      %4200 = vmatpush2.bf16.msra.mxu0 %v4054
      %4201 = vmatprep.subr.bf16.mxu0 %v4051
      %4202 = vmatpush2.bf16.msra.mxu0 %v4050
      %4203 = vmatprep.subr.bf16.mxu0 %v4047
      %4204 = vmatpush2.bf16.msra.mxu0 %v4046
      %4205 = vmatprep.subr.bf16.mxu0 %v4043
      %4206 = vmatpush2.bf16.msra.mxu0 %v4042
      %4207 = vmatprep.subr.bf16.mxu0 %v4039
      %4208 = vmatpush2.bf16.msra.mxu0 %v4038
      %4209 = vmatprep.subr.bf16.mxu0 %v4035
      %4210 = vmatpush2.bf16.msra.mxu0 %v4034
      %4211 = vmatprep.mubr.bf16.mxu0 %v3719
      %4212 = vmatmul.mubr.bf16.gmra.mxu0 %v3718
      %v4213 = vpop.f32.mrf.mxu0
      %v4214 = vadd.f32 %v3799, %v4213
      %v4215 = vpop.f32.mrf.mxu0
      %v4216 = vadd.f32 %v3803, %v4215
      %v4217 = vpop.f32.mrf.mxu0
      %v4218 = vadd.f32 %v3799, %v4217
      %v4219 = vpop.f32.mrf.mxu0
      %v4220 = vadd.f32 %v3803, %v4219
      %4221 = vmatprep.mubr.bf16.mxu0 %v3721
      %4222 = vmatmul.mubr.bf16.gmra.mxu0 %v3720
      %v4223 = vpop.f32.mrf.mxu0
      %v4224 = vadd.f32 %v3799, %v4223
      %v4225 = vpop.f32.mrf.mxu0
      %v4226 = vadd.f32 %v3803, %v4225
      %v4227 = vpop.f32.mrf.mxu0
      %v4228 = vpop.f32.mrf.mxu0
      %4229 = vdwg.mxu0
      %v4230 = vmax.f32 %v4163, 0.0
      %v4231 = vmax.f32 %v4165, 0.0
      %v4232 = vmax.f32 %v4214, 0.0
      %v4233 = vmax.f32 %v4216, 0.0
      %v4234 = vmax.f32 %v4167, 0.0
      %v4235 = vmax.f32 %v4169, 0.0
      %v4236 = vmax.f32 %v4218, 0.0
      %v4237 = vmax.f32 %v4220, 0.0
      %v4238 = vmax.f32 %v4173, 0.0
      %v4239 = vmax.f32 %v4175, 0.0
      %v4240 = vmax.f32 %v4224, 0.0
      %v4241 = vmax.f32 %v4226, 0.0
      %v4242 = vpack.c.bf16 %v4234, %v4230
      %v4243 = vpack.c.bf16 %v4235, %v4231
      %v4244 = vpack.c.bf16 %v4236, %v4232
      %v4245 = vpack.c.bf16 %v4237, %v4233
      %v4246 = vpack.c.bf16 %v4238, %v4238
      %v4247 = vpack.c.bf16 %v4239, %v4239
      %v4248 = vpack.c.bf16 %v4240, %v4240
      %v4249 = vpack.c.bf16 %v4241, %v4241
      %v4250 = vld [vmem:[%s11] sm:$0xf]
      %v4251 = vld [vmem:[%s11 + $0x4] sm:$0xf]
      %v4252 = vld [vmem:[%s11 + $0x8] sm:$0xf]
      %v4253 = vld [vmem:[%s11 + $0xc] sm:$0xf]
      %v4254 = vld [vmem:[%s11 + $0x10] sm:$0xf]
      %v4255 = vld [vmem:[%s11 + $0x14] sm:$0xf]
      %v4256 = vld [vmem:[%s11 + $0x18] sm:$0xf]
      %v4257 = vld [vmem:[%s11 + $0x1c] sm:$0xf]
      %v4258 = vld [vmem:[%s11 + $0x20] sm:$0xf]
      %v4259 = vld [vmem:[%s11 + $0x24] sm:$0xf]
      %v4260 = vld [vmem:[%s11 + $0x28] sm:$0xf]
      %v4261 = vld [vmem:[%s11 + $0x2c] sm:$0xf]
      %v4262 = vld [vmem:[%s11 + $0x30] sm:$0xf]
      %v4263 = vld [vmem:[%s11 + $0x34] sm:$0xf]
      %v4264 = vld [vmem:[%s11 + $0x38] sm:$0xf]
      %v4265 = vld [vmem:[%s11 + $0x3c] sm:$0xf]
      %v4266 = vld [vmem:[%s11 + $0x40] sm:$0xf]
      %v4267 = vld [vmem:[%s11 + $0x44] sm:$0xf]
      %v4268 = vld [vmem:[%s11 + $0x48] sm:$0xf]
      %v4269 = vld [vmem:[%s11 + $0x4c] sm:$0xf]
      %v4270 = vld [vmem:[%s11 + $0x50] sm:$0xf]
      %v4271 = vld [vmem:[%s11 + $0x54] sm:$0xf]
      %v4272 = vld [vmem:[%s11 + $0x58] sm:$0xf]
      %v4273 = vld [vmem:[%s11 + $0x5c] sm:$0xf]
      %v4274 = vld [vmem:[%s11 + $0x60] sm:$0xf]
      %v4275 = vld [vmem:[%s11 + $0x64] sm:$0xf]
      %v4276 = vld [vmem:[%s11 + $0x68] sm:$0xf]
      %v4277 = vld [vmem:[%s11 + $0x6c] sm:$0xf]
      %v4278 = vld [vmem:[%s11 + $0x70] sm:$0xf]
      %v4279 = vld [vmem:[%s11 + $0x74] sm:$0xf]
      %v4280 = vld [vmem:[%s11 + $0x78] sm:$0xf]
      %v4281 = vld [vmem:[%s11 + $0x7c] sm:$0xf]
      %v4282 = vld [vmem:[%s11 + $0x80] sm:$0xf]
      %v4283 = vld [vmem:[%s11 + $0x84] sm:$0xf]
      %v4284 = vld [vmem:[%s11 + $0x88] sm:$0xf]
      %v4285 = vld [vmem:[%s11 + $0x8c] sm:$0xf]
      %v4286 = vld [vmem:[%s11 + $0x90] sm:$0xf]
      %v4287 = vld [vmem:[%s11 + $0x94] sm:$0xf]
      %v4288 = vld [vmem:[%s11 + $0x98] sm:$0xf]
      %v4289 = vld [vmem:[%s11 + $0x9c] sm:$0xf]
      %v4290 = vld [vmem:[%s11 + $0xa0] sm:$0xf]
      %v4291 = vld [vmem:[%s11 + $0xa4] sm:$0xf]
      %v4292 = vld [vmem:[%s11 + $0xa8] sm:$0xf]
      %v4293 = vld [vmem:[%s11 + $0xac] sm:$0xf]
      %v4294 = vld [vmem:[%s11 + $0xb0] sm:$0xf]
      %v4295 = vld [vmem:[%s11 + $0xb4] sm:$0xf]
      %v4296 = vld [vmem:[%s11 + $0xb8] sm:$0xf]
      %v4297 = vld [vmem:[%s11 + $0xbc] sm:$0xf]
      %v4298 = vld [vmem:[%s11 + $0xc0] sm:$0xf]
      %v4299 = vld [vmem:[%s11 + $0xc4] sm:$0xf]
      %v4300 = vld [vmem:[%s11 + $0xc8] sm:$0xf]
      %v4301 = vld [vmem:[%s11 + $0xcc] sm:$0xf]
      %v4302 = vld [vmem:[%s11 + $0xd0] sm:$0xf]
      %v4303 = vld [vmem:[%s11 + $0xd4] sm:$0xf]
      %v4304 = vld [vmem:[%s11 + $0xd8] sm:$0xf]
      %v4305 = vld [vmem:[%s11 + $0xdc] sm:$0xf]
      %v4306 = vld [vmem:[%s11 + $0xe0] sm:$0xf]
      %v4307 = vld [vmem:[%s11 + $0xe4] sm:$0xf]
      %v4308 = vld [vmem:[%s11 + $0xe8] sm:$0xf]
      %v4309 = vld [vmem:[%s11 + $0xec] sm:$0xf]
      %v4310 = vld [vmem:[%s11 + $0xf0] sm:$0xf]
      %v4311 = vld [vmem:[%s11 + $0xf4] sm:$0xf]
      %v4312 = vld [vmem:[%s11 + $0xf8] sm:$0xf]
      %v4313 = vld [vmem:[%s11 + $0xfc] sm:$0xf]
      %v4314 = vld [vmem:[#allocation5] sm:$0x1]
      %v4316 = vlaneseq
      %v4317 = vshrl.u32 %v4316, 7
      %v4318 = vsub.s32 0, %v4317
      %v4319 = vrot.slane %v4314, %v4318
      %4320 = vset.pattern.permute.xlu0 0
      %4321 = vperm.xlu0 %4320, %v4319
      %v4322 = vpop.permute.xlu0 %4321
      %v4388 = vunpack.c.l.b16 %v4250
      %v4389 = vunpack.c.l.b16 %v4251
      %v4390 = vunpack.c.l.b16 %v4252
      %v4391 = vunpack.c.l.b16 %v4253
      %v4392 = vunpack.c.l.b16 %v4254
      %v4393 = vunpack.c.l.b16 %v4255
      %v4394 = vunpack.c.l.b16 %v4256
      %v4395 = vunpack.c.l.b16 %v4257
      %v4396 = vunpack.c.l.b16 %v4258
      %v4397 = vunpack.c.l.b16 %v4259
      %v4398 = vunpack.c.l.b16 %v4260
      %v4399 = vunpack.c.l.b16 %v4261
      %v4400 = vunpack.c.l.b16 %v4262
      %v4401 = vunpack.c.l.b16 %v4263
      %v4402 = vunpack.c.l.b16 %v4264
      %v4403 = vunpack.c.l.b16 %v4265
      %v4404 = vunpack.c.l.b16 %v4266
      %v4405 = vunpack.c.l.b16 %v4267
      %v4406 = vunpack.c.l.b16 %v4268
      %v4407 = vunpack.c.l.b16 %v4269
      %v4408 = vunpack.c.l.b16 %v4270
      %v4409 = vunpack.c.l.b16 %v4271
      %v4410 = vunpack.c.l.b16 %v4272
      %v4411 = vunpack.c.l.b16 %v4273
      %v4412 = vunpack.c.l.b16 %v4274
      %v4413 = vunpack.c.l.b16 %v4275
      %v4414 = vunpack.c.l.b16 %v4276
      %v4415 = vunpack.c.l.b16 %v4277
      %v4416 = vunpack.c.l.b16 %v4278
      %v4417 = vunpack.c.l.b16 %v4279
      %v4418 = vunpack.c.l.b16 %v4280
      %v4419 = vunpack.c.l.b16 %v4281
      %v4420 = vunpack.c.l.b16 %v4282
      %v4421 = vunpack.c.l.b16 %v4283
      %v4422 = vunpack.c.l.b16 %v4284
      %v4423 = vunpack.c.l.b16 %v4285
      %v4424 = vunpack.c.l.b16 %v4286
      %v4425 = vunpack.c.l.b16 %v4287
      %v4426 = vunpack.c.l.b16 %v4288
      %v4427 = vunpack.c.l.b16 %v4289
      %v4428 = vunpack.c.l.b16 %v4290
      %v4429 = vunpack.c.l.b16 %v4291
      %v4430 = vunpack.c.l.b16 %v4292
      %v4431 = vunpack.c.l.b16 %v4293
      %v4432 = vunpack.c.l.b16 %v4294
      %v4433 = vunpack.c.l.b16 %v4295
      %v4434 = vunpack.c.l.b16 %v4296
      %v4435 = vunpack.c.l.b16 %v4297
      %v4436 = vunpack.c.l.b16 %v4298
      %v4437 = vunpack.c.l.b16 %v4299
      %v4438 = vunpack.c.l.b16 %v4300
      %v4439 = vunpack.c.l.b16 %v4301
      %v4440 = vunpack.c.l.b16 %v4302
      %v4441 = vunpack.c.l.b16 %v4303
      %v4442 = vunpack.c.l.b16 %v4304
      %v4443 = vunpack.c.l.b16 %v4305
      %v4444 = vunpack.c.l.b16 %v4306
      %v4445 = vunpack.c.l.b16 %v4307
      %v4446 = vunpack.c.l.b16 %v4308
      %v4447 = vunpack.c.l.b16 %v4309
      %v4448 = vunpack.c.l.b16 %v4310
      %v4449 = vunpack.c.l.b16 %v4311
      %v4450 = vunpack.c.l.b16 %v4312
      %v4451 = vunpack.c.l.b16 %v4313
      %v4452 = vpack.c.b16 %v4389, %v4388
      %v4453 = vpack.c.b16 %v4391, %v4390
      %v4454 = vpack.c.b16 %v4393, %v4392
      %v4455 = vpack.c.b16 %v4395, %v4394
      %v4456 = vpack.c.b16 %v4397, %v4396
      %v4457 = vpack.c.b16 %v4399, %v4398
      %v4458 = vpack.c.b16 %v4401, %v4400
      %v4459 = vpack.c.b16 %v4403, %v4402
      %v4460 = vpack.c.b16 %v4405, %v4404
      %v4461 = vpack.c.b16 %v4407, %v4406
      %v4462 = vpack.c.b16 %v4409, %v4408
      %v4463 = vpack.c.b16 %v4411, %v4410
      %v4464 = vpack.c.b16 %v4413, %v4412
      %v4465 = vpack.c.b16 %v4415, %v4414
      %v4466 = vpack.c.b16 %v4417, %v4416
      %v4467 = vpack.c.b16 %v4419, %v4418
      %v4468 = vpack.c.b16 %v4421, %v4420
      %v4469 = vpack.c.b16 %v4423, %v4422
      %v4470 = vpack.c.b16 %v4425, %v4424
      %v4471 = vpack.c.b16 %v4427, %v4426
      %v4472 = vpack.c.b16 %v4429, %v4428
      %v4473 = vpack.c.b16 %v4431, %v4430
      %v4474 = vpack.c.b16 %v4433, %v4432
      %v4475 = vpack.c.b16 %v4435, %v4434
      %v4476 = vpack.c.b16 %v4437, %v4436
      %v4477 = vpack.c.b16 %v4439, %v4438
      %v4478 = vpack.c.b16 %v4441, %v4440
      %v4479 = vpack.c.b16 %v4443, %v4442
      %v4480 = vpack.c.b16 %v4445, %v4444
      %v4481 = vpack.c.b16 %v4447, %v4446
      %v4482 = vpack.c.b16 %v4449, %v4448
      %v4483 = vpack.c.b16 %v4451, %v4450
      %4516 = vmatprep.subr.bf16.mxu0 0
      %4517 = vmatpush1.bf16.msra.mxu0 %v4459
      %4518 = vmatprep.subr.bf16.mxu0 0
      %4519 = vmatpush1.bf16.msra.mxu0 %v4458
      %4520 = vmatprep.subr.bf16.mxu0 0
      %4521 = vmatpush1.bf16.msra.mxu0 %v4457
      %4522 = vmatprep.subr.bf16.mxu0 0
      %4523 = vmatpush1.bf16.msra.mxu0 %v4456
      %4524 = vmatprep.subr.bf16.mxu0 0
      %4525 = vmatpush1.bf16.msra.mxu0 %v4455
      %4526 = vmatprep.subr.bf16.mxu0 0
      %4527 = vmatpush1.bf16.msra.mxu0 %v4454
      %4528 = vmatprep.subr.bf16.mxu0 0
      %4529 = vmatpush1.bf16.msra.mxu0 %v4453
      %4530 = vmatprep.subr.bf16.mxu0 0
      %4531 = vmatpush1.bf16.msra.mxu0 %v4452
      %4532 = vmatprep.subr.bf16.mxu0 0
      %4533 = vmatpush2.bf16.msra.mxu0 %v4467
      %4534 = vmatprep.subr.bf16.mxu0 0
      %4535 = vmatpush2.bf16.msra.mxu0 %v4466
      %4536 = vmatprep.subr.bf16.mxu0 0
      %4537 = vmatpush2.bf16.msra.mxu0 %v4465
      %4538 = vmatprep.subr.bf16.mxu0 0
      %4539 = vmatpush2.bf16.msra.mxu0 %v4464
      %4540 = vmatprep.subr.bf16.mxu0 0
      %4541 = vmatpush2.bf16.msra.mxu0 %v4463
      %4542 = vmatprep.subr.bf16.mxu0 0
      %4543 = vmatpush2.bf16.msra.mxu0 %v4462
      %4544 = vmatprep.subr.bf16.mxu0 0
      %4545 = vmatpush2.bf16.msra.mxu0 %v4461
      %4546 = vmatprep.subr.bf16.mxu0 0
      %4547 = vmatpush2.bf16.msra.mxu0 %v4460
      %4548 = vmatprep.mubr.bf16.mxu0 %v4243
      %4549 = vmatmul.mubr.bf16.gmra.mxu0 %v4242
      %v4550 = vpop.f32.mrf.mxu0
      %v4551 = vadd.f32 %v4322, %v4550
      %v4552 = vpop.f32.mrf.mxu0
      %v4553 = vpop.f32.mrf.mxu0
      %v4554 = vadd.f32 %v4322, %v4553
      %v4555 = vpop.f32.mrf.mxu0
      %4556 = vmatprep.mubr.bf16.mxu0 %v4247
      %4557 = vmatmul.mubr.bf16.gmra.mxu0 %v4246
      %v4558 = vpop.f32.mrf.mxu0
      %v4559 = vadd.f32 %v4322, %v4558
      %v4560 = vpop.f32.mrf.mxu0
      %v4561 = vpop.f32.mrf.mxu0
      %v4562 = vpop.f32.mrf.mxu0
      %4563 = vdwg.mxu0
      %4564 = vmatprep.subr.bf16.mxu0 0
      %4565 = vmatpush1.bf16.msra.mxu0 %v4475
      %4566 = vmatprep.subr.bf16.mxu0 0
      %4567 = vmatpush1.bf16.msra.mxu0 %v4474
      %4568 = vmatprep.subr.bf16.mxu0 0
      %4569 = vmatpush1.bf16.msra.mxu0 %v4473
      %4570 = vmatprep.subr.bf16.mxu0 0
      %4571 = vmatpush1.bf16.msra.mxu0 %v4472
      %4572 = vmatprep.subr.bf16.mxu0 0
      %4573 = vmatpush1.bf16.msra.mxu0 %v4471
      %4574 = vmatprep.subr.bf16.mxu0 0
      %4575 = vmatpush1.bf16.msra.mxu0 %v4470
      %4576 = vmatprep.subr.bf16.mxu0 0
      %4577 = vmatpush1.bf16.msra.mxu0 %v4469
      %4578 = vmatprep.subr.bf16.mxu0 0
      %4579 = vmatpush1.bf16.msra.mxu0 %v4468
      %4580 = vmatprep.subr.bf16.mxu0 0
      %4581 = vmatpush2.bf16.msra.mxu0 %v4483
      %4582 = vmatprep.subr.bf16.mxu0 0
      %4583 = vmatpush2.bf16.msra.mxu0 %v4482
      %4584 = vmatprep.subr.bf16.mxu0 0
      %4585 = vmatpush2.bf16.msra.mxu0 %v4481
      %4586 = vmatprep.subr.bf16.mxu0 0
      %4587 = vmatpush2.bf16.msra.mxu0 %v4480
      %4588 = vmatprep.subr.bf16.mxu0 0
      %4589 = vmatpush2.bf16.msra.mxu0 %v4479
      %4590 = vmatprep.subr.bf16.mxu0 0
      %4591 = vmatpush2.bf16.msra.mxu0 %v4478
      %4592 = vmatprep.subr.bf16.mxu0 0
      %4593 = vmatpush2.bf16.msra.mxu0 %v4477
      %4594 = vmatprep.subr.bf16.mxu0 0
      %4595 = vmatpush2.bf16.msra.mxu0 %v4476
      %4596 = vmatprep.mubr.bf16.mxu0 %v4245
      %4597 = vmatmul.mubr.bf16.gmra.mxu0 %v4244
      %v4598 = vpop.f32.mrf.mxu0
      %v4599 = vadd.f32 %v4551, %v4598
      %v4600 = vpop.f32.mrf.mxu0
      %v4601 = vpop.f32.mrf.mxu0
      %v4602 = vadd.f32 %v4554, %v4601
      %v4603 = vpop.f32.mrf.mxu0
      %4604 = vmatprep.mubr.bf16.mxu0 %v4249
      %4605 = vmatmul.mubr.bf16.gmra.mxu0 %v4248
      %v4606 = vpop.f32.mrf.mxu0
      %v4607 = vadd.f32 %v4559, %v4606
      %v4608 = vpop.f32.mrf.mxu0
      %v4609 = vpop.f32.mrf.mxu0
      %v4610 = vpop.f32.mrf.mxu0
      %4611 = vdwg.mxu0
      %vm4612 = vcmask 130048
      %4613 = vst.msk [vmem:[%s442] sm:$0xff] %vm4612, %v4599
      %4614 = vst.msk [vmem:[%s442 + $0x8] sm:$0xff] %vm4612, %v4602
      %4615 = vst.msk [vmem:[%s442 + $0x10] sm:$0xff] %vm4612, %v4607
      %p4616 = scmp.lt.s32.totalorder %s26, 1
      %s4617 = scalar_select %p4616, %s26, 1
      %s4618 = smul.addr %s4617, 3
      %s4619 = smul.addr %s4618, 8
      %s4620 = scalar_lea.vmem %s13, %s4619
      // Predicated region
      $region73: #{simple_cnn_forward.1} parent=71 // pred_check
        %p4621 = pneg %p322
      $region74: #{simple_cnn_forward.1} parent=71 // pred_check_branch
        %4623 = sbr.rel (%p4621) target = $region76
      $region75: #{simple_cnn_forward.1} parent=71 // pred_region
        _
      $region76: #{simple_cnn_forward.1} parent=71 // pred_fallthru
        _
    $region72: #{simple_cnn_forward.1} parent=5 // pred_fallthru
      _
    %p4624 = scmp.le.s32.totalorder 2, %s21
    // Predicated region
    $region77: #{simple_cnn_forward.1} parent=5 // pred_check
      %p4625 = pneg %p4624
    $region78: #{simple_cnn_forward.1} parent=5 // pred_check_branch
      %4627 = sbr.rel (%p4625) target = $region80
    $region79: #{simple_cnn_forward.1} parent=5 // pred_region
      %s4628 = ssub.s32 %s21, 2
      // Predicated region
      $region81: #{simple_cnn_forward.1} parent=79 // pred_check
        %p4629 = pneg %p328
      $region82: #{simple_cnn_forward.1} parent=79 // pred_check_branch
        %4631 = sbr.rel (%p4629) target = $region84
      $region83: #{simple_cnn_forward.1} parent=79 // pred_region
        %p4632 = scmp.lt.s32.totalorder %s27, 1
        %s4633 = scalar_select %p4632, %s27, 1
        %s4634 = smul.addr %s4633, 3
        %s4635 = smul.addr %s4634, 8
        %s4636 = scalar_lea.vmem %s13, %s4635
      $region84: #{simple_cnn_forward.1} parent=79 // pred_fallthru
        _
    $region80: #{simple_cnn_forward.1} parent=5 // pred_fallthru
      _
  $region6: #{simple_cnn_forward.1} parent=0 // loop_footer
    %s25 = sadd.s32 1, %s21
  $region7: #{simple_cnn_forward.1} parent=0 // loop_footer_branch
    %20 = sbr.rel target = $region3
  $region8: #{simple_cnn_forward.1} parent=0 // loop_exit
    _

</llo_original>
